<compile_context>
chip_gen: v7x
topology: tpu7x:2x2x1
jax: 0.10.0
libtpu: 0.0.40
codegen_flags: <defaults>
</compile_context>

<pallas_src>
import functools

import jax
import jax.numpy as jnp
from jax import lax
from jax.experimental import pallas as pl
from jax.experimental.pallas import tpu as pltpu


def _round_up(x, m):
    return (x + m - 1) // m * m


def _ib_kernel(x_ref, w1_ref, wdw_ref, bdw_ref, w2_ref, b2_ref, o_ref,
               h1_ref, acc_ref, *, stride, residual, th, wo, wk):
    """One (batch, row-strip) tile per grid step.  BN pre-folded.

    x_ref   : (1, hin, wp, cip)   compute dtype; spatially padded strip with a
                                  1-row/col halo and an extra "ones" channel.
    w1_ref  : (cip, cmp)          pw1 weights (bias folded into the ones row).
    wdw_ref : (9, cmp, cmp)       3x3 conv taps (ky*3+kx, cin, cout), BN2 scale folded.
    bdw_ref : (1, cmp) f32        conv bias + BN2 shift.
    w2_ref  : (cmp, cop)          pw2 weights, BN3 scale folded.
    b2_ref  : (1, cop) f32        pw2 bias + BN3 shift.
    o_ref   : (1, th, wo, cop) f32
    h1_ref  : VMEM (hin, wp, cmp) compute dtype — expanded activation scratch.
    acc_ref : VMEM (th*wk, cmp) f32 — 3x3-conv accumulator.
    """
    hin, wp, cip = x_ref.shape[1], x_ref.shape[2], x_ref.shape[3]
    cmp_ = w1_ref.shape[1]
    cop = w2_ref.shape[1]
    cdt = h1_ref.dtype

    # ---- pw1 (1x1 conv) + folded BN1; bias via the ones-channel; NO act ----
    xs = x_ref[0]                                                  # (hin, wp, cip)
    h1 = jnp.dot(xs.reshape(hin * wp, cip), w1_ref[...],
                 preferred_element_type=jnp.float32)               # f32 accumulate
    h1_ref[...] = h1.reshape(hin, wp, cmp_).astype(cdt)            # written once

    # ---- 3x3 full conv (groups=1), stride `stride`, 9 shifted matmuls ----
    for ky in range(3):
        for kx in range(3):
            if stride == 1:
                win = h1_ref[ky:ky + th, kx:kx + wk, :]            # aligned width
            else:
                win = h1_ref[pl.ds(ky, th, stride=stride),
                             pl.ds(kx, wk, stride=stride), :]      # strided reads
            contrib = jnp.dot(win.reshape(th * wk, cmp_),
                              wdw_ref[ky * 3 + kx],
                              preferred_element_type=jnp.float32)
            if ky == 0 and kx == 0:
                acc_ref[...] = contrib            # first tap assigns: no zero-init
            else:
                acc_ref[...] += contrib

    # ---- folded BN2 + bias + ReLU (f32 elementwise) ----
    h2 = jnp.maximum(acc_ref[...] + bdw_ref[...], 0.0).astype(cdt)  # (th*wk, cmp)

    # ---- pw2 (1x1 conv) + folded BN3 + bias + ReLU ----
    h3 = jnp.dot(h2, w2_ref[...],
                 preferred_element_type=jnp.float32) + b2_ref[...]
    out = jnp.maximum(h3, 0.0).reshape(th, wk, cop)[:, :wo, :]      # (th, wo, cop)

    if residual:  # static: in_planes == out_planes and stride == 1
        # Residual source lives inside the halo'd strip (row/col offset 1).
        # Its extra "ones" lane only pollutes lane Cin, which the wrapper
        # slices away (Cout <= Cin < cop).
        out = out + x_ref[0, 1:th + 1, 1:wo + 1, :].astype(jnp.float32)

    o_ref[0] = out.astype(o_ref.dtype)


@functools.partial(jax.jit,
                   static_argnames=("stride", "eps", "compute_dtype", "block_rows"))
def inverted_bottleneck_forward(x_nchw, params, *, stride, eps=1e-5,
                                compute_dtype=jnp.bfloat16, block_rows=8):
    """Fold eval-mode BN into conv params and launch the fused strip kernel."""
    f32 = jnp.float32
    N, Cin, H, W = x_nchw.shape
    Cmid = params["w1"].shape[0]
    Cout = params["w2"].shape[0]
    residual = (Cin == Cout) and (stride == 1)

    Ho = (H + 2 - 3) // stride + 1
    Wo = (W + 2 - 3) // stride + 1

    # ---- lane-dense / MXU-friendly padded channel counts ----
    Cip = _round_up(Cin + 1, 128)          # +1: ones-channel carrying pw1 bias
    Cmp = _round_up(Cmid, 128)
    Cop = Cip if residual else _round_up(Cout, 128)

    # ---- row-strip tiling ----
    TH = max(1, min(block_rows, Ho))       # output rows per grid step
    S = -(-Ho // TH)                       # strips per image
    Ho_pad = S * TH
    Hin = (TH - 1) * stride + 3            # input rows per strip (incl. halo)
    Wp = _round_up(W, 8) + 8               # padded width (8-aligned + slack)
    Wk = _round_up(Wo, 8) if stride == 1 else Wo   # conv/accumulator width

    # ---- fold eval-mode BN into per-output-channel scale/shift (in f32) ----
    s1 = params["g1"] / jnp.sqrt(params["v1"] + eps)
    w1f = params["w1"][:, :, 0, 0].T * s1[None, :]                      # (Cin, Cmid)
    b1f = (params["b1"] - params["m1"]) * s1 + params["be1"]            # (Cmid,)
    w1k = (jnp.zeros((Cip, Cmp), f32)
           .at[:Cin, :Cmid].set(w1f)
           .at[Cin, :Cmid].set(b1f)                                     # bias row
           .astype(compute_dtype))

    s2 = params["g2"] / jnp.sqrt(params["v2"] + eps)
    wdwf = jnp.transpose(params["wdw"], (2, 3, 1, 0)) * s2[None, None, None, :]
    wdwf = wdwf.reshape(9, Cmid, Cmid)                                  # (tap,cin,cout)
    wdwk = (jnp.zeros((9, Cmp, Cmp), f32)
            .at[:, :Cmid, :Cmid].set(wdwf).astype(compute_dtype))
    bdwk = (jnp.zeros((1, Cmp), f32)
            .at[0, :Cmid].set((params["bdw"] - params["m2"]) * s2 + params["be2"]))

    s3 = params["g3"] / jnp.sqrt(params["v3"] + eps)
    w2f = params["w2"][:, :, 0, 0].T * s3[None, :]                      # (Cmid, Cout)
    w2k = (jnp.zeros((Cmp, Cop), f32)
           .at[:Cmid, :Cout].set(w2f).astype(compute_dtype))
    b2k = (jnp.zeros((1, Cop), f32)
           .at[0, :Cout].set((params["b2"] - params["m3"]) * s3 + params["be3"]))

    # ---- input: NCHW -> NHWC, +ones channel, channel pad, spatial pad, strips ----
    x = jnp.transpose(x_nchw.astype(f32), (0, 2, 3, 1))                 # (N,H,W,Cin)
    x = jnp.concatenate(
        [x, jnp.ones((N, H, W, 1), f32),
         jnp.zeros((N, H, W, Cip - Cin - 1), f32)], axis=-1).astype(compute_dtype)
    pad_bot = 1 + (Ho_pad - Ho) * stride
    x_sp = jnp.pad(x, ((0, 0), (1, pad_bot), (1, Wp - W - 1), (0, 0)))
    starts = jnp.arange(S, dtype=jnp.int32) * (TH * stride)
    row_idx = starts[:, None] + jnp.arange(Hin, dtype=jnp.int32)[None, :]
    # Overlapping halo'd strips materialised once in HBM (2 duplicated rows/strip).
    x_strips = x_sp[:, row_idx].reshape(N * S, Hin, Wp, Cip)

    kernel = functools.partial(_ib_kernel, stride=stride, residual=residual,
                               th=TH, wo=Wo, wk=Wk)

    # ---- VMEM budget + cost estimate for the scheduler ----
    cd_b = jnp.dtype(compute_dtype).itemsize
    block_bytes = (Hin * Wp * Cip * cd_b                       # x strip
                   + TH * Wo * Cop * 4                         # out strip
                   + (Cip * Cmp + 9 * Cmp * Cmp + Cmp * Cop) * cd_b
                   + (Cmp + Cop) * 4)
    scratch_bytes = Hin * Wp * Cmp * cd_b + TH * Wk * Cmp * 4
    vmem_limit = int(min(max(2 * block_bytes + scratch_bytes + (16 << 20),
                             32 << 20), 64 << 20))
    flops = 2 * N * S * (Hin * Wp * Cip * Cmp
                         + 9 * TH * Wk * Cmp * Cmp
                         + TH * Wk * Cmp * Cop)
    bytes_accessed = (N * S * Hin * Wp * Cip * cd_b
                      + (Cip * Cmp + 9 * Cmp * Cmp + Cmp * Cop) * cd_b
                      + (Cmp + Cop) * 4
                      + N * Ho_pad * Wo * Cop * 4)

    out = pl.pallas_call(
        kernel,
        out_shape=jax.ShapeDtypeStruct((N * S, TH, Wo, Cop), jnp.float32),
        grid_spec=pltpu.PrefetchScalarGridSpec(
            num_scalar_prefetch=0,
            grid=(N * S,),                                    # batch x strips
            in_specs=[
                pl.BlockSpec((1, Hin, Wp, Cip), lambda i: (i, 0, 0, 0)),
                pl.BlockSpec((Cip, Cmp), lambda i: (0, 0)),        # grid-invariant
                pl.BlockSpec((9, Cmp, Cmp), lambda i: (0, 0, 0)),  # (fetched once)
                pl.BlockSpec((1, Cmp), lambda i: (0, 0)),
                pl.BlockSpec((Cmp, Cop), lambda i: (0, 0)),
                pl.BlockSpec((1, Cop), lambda i: (0, 0)),
            ],
            out_specs=pl.BlockSpec((1, TH, Wo, Cop), lambda i: (i, 0, 0, 0)),
            scratch_shapes=[
                pltpu.VMEM((Hin, Wp, Cmp), compute_dtype),   # h1 (expanded act.)
                pltpu.VMEM((TH * Wk, Cmp), jnp.float32),     # 3x3-conv accumulator
            ],
        ),
        compiler_params=pltpu.CompilerParams(
            dimension_semantics=("parallel",),
            vmem_limit_bytes=vmem_limit),
        cost_estimate=pl.CostEstimate(flops=int(flops), transcendentals=0,
                                      bytes_accessed=int(bytes_accessed)),
    )(x_strips, w1k, wdwk, bdwk, w2k, b2k)

    out = out.reshape(N, Ho_pad, Wo, Cop)[:, :Ho, :, :Cout]   # drop strip/channel pad
    return jnp.transpose(out, (0, 3, 1, 2))                   # back to NCHW (f32)


# ---------------------------- reference (pure JAX) ----------------------------
def ref_forward(x, p, *, stride, residual, eps=1e-5):
    def conv(x, w, s, pad):
        return lax.conv_general_dilated(
            x, w, (s, s), pad, dimension_numbers=("NCHW", "OIHW", "NCHW"))

    def bn(x, g, b, m, v):
        sc = (g / jnp.sqrt(v + eps))[None, :, None, None]
        return (x - m[None, :, None, None]) * sc + b[None, :, None, None]

    h = conv(x, p["w1"], 1, "VALID") + p["b1"][None, :, None, None]
    h = bn(h, p["g1"], p["be1"], p["m1"], p["v1"])                 # no activation
    h = conv(h, p["wdw"], stride, ((1, 1), (1, 1))) + p["bdw"][None, :, None, None]
    h = jax.nn.relu(bn(h, p["g2"], p["be2"], p["m2"], p["v2"]))
    h = conv(h, p["w2"], 1, "VALID") + p["b2"][None, :, None, None]
    h = jax.nn.relu(bn(h, p["g3"], p["be3"], p["m3"], p["v3"]))
    if residual:
        h = h + x
    return h


# ------------------------------- param init -----------------------------------
def init_params(key, in_planes, out_planes, expansion=6):
    mid = in_planes * expansion
    ks = jax.random.split(key, 18)

    def u(k, shape, scale=0.2):
        return jax.random.uniform(k, shape, jnp.float32, -scale, scale)

    return dict(
        # pw1 + bn1
        w1=u(ks[0], (mid, in_planes, 1, 1)), b1=u(ks[1], (mid,)),
        g1=1.0 + u(ks[2], (mid,)), be1=u(ks[3], (mid,)),
        m1=u(ks[4], (mid,)), v1=1.0 + jnp.abs(u(ks[5], (mid,))),
        # "dw" (actually a full 3x3 conv, groups=1) + bn2
        wdw=u(ks[6], (mid, mid, 3, 3)), bdw=u(ks[7], (mid,)),
        g2=1.0 + u(ks[8], (mid,)), be2=u(ks[9], (mid,)),
        m2=u(ks[10], (mid,)), v2=1.0 + jnp.abs(u(ks[11], (mid,))),
        # pw2 + bn3
        w2=u(ks[12], (out_planes, mid, 1, 1)), b2=u(ks[13], (out_planes,)),
        g3=1.0 + u(ks[14], (out_planes,)), be3=u(ks[15], (out_planes,)),
        m3=u(ks[16], (out_planes,)), v3=1.0 + jnp.abs(u(ks[17], (out_planes,))),
    )


if __name__ == "__main__":
    key = jax.random.PRNGKey(0)
    kp, kx = jax.random.split(key)

    # --- Case 1: residual block (in==out, stride 1) ---
    in_planes, out_planes, stride = 4, 4, 1
    N, H, W = 2, 16, 16
    params = init_params(kp, in_planes, out_planes, expansion=6)
    x = jax.random.normal(kx, (N, in_planes, H, W), jnp.float32)
    residual = (in_planes == out_planes) and (stride == 1)
    ref = ref_forward(x, params, stride=stride, residual=residual)

    # exact-math path (f32 compute)
    out_f32 = jax.block_until_ready(
        inverted_bottleneck_forward(x, params, stride=stride,
                                    compute_dtype=jnp.float32))
    assert out_f32.shape == ref.shape, (out_f32.shape, ref.shape)
    err_f32 = float(jnp.max(jnp.abs(out_f32 - ref)))
    assert err_f32 < 1e-3, f"f32 path max abs err {err_f32}"

    # default perf path (bf16 weights/activations, f32 accumulation)
    out_bf16 = jax.block_until_ready(
        inverted_bottleneck_forward(x, params, stride=stride))
    err_bf16 = float(jnp.max(jnp.abs(out_bf16 - ref)))
    tol_bf16 = 2e-2 * float(jnp.max(jnp.abs(ref))) + 2e-2
    assert err_bf16 < tol_bf16, f"bf16 path max abs err {err_bf16} (tol {tol_bf16})"

    # --- Case 2: strided, non-residual block (exercises the stride-2 path) ---
    params2 = init_params(kp, 4, 8, expansion=6)
    ref2 = ref_forward(x, params2, stride=2, residual=False)
    out2 = jax.block_until_ready(
        inverted_bottleneck_forward(x, params2, stride=2,
                                    compute_dtype=jnp.float32))
    assert out2.shape == ref2.shape, (out2.shape, ref2.shape)
    err2 = float(jnp.max(jnp.abs(out2 - ref2)))
    assert err2 < 1e-3, f"stride-2 path max abs err {err2}"

    print("KERNEL_OK")
</pallas_src>

<mosaic_0001>
module attributes {stable_mosaic.version = 11 : i64} {
  func.func @_ib_kernel(%arg0: i32, %arg1: memref<1x10x24x128xf32, #tpu.memory_space<vmem>>, %arg2: memref<128x128xf32, #tpu.memory_space<vmem>>, %arg3: memref<9x128x128xf32, #tpu.memory_space<vmem>>, %arg4: memref<1x128xf32, #tpu.memory_space<vmem>>, %arg5: memref<128x128xf32, #tpu.memory_space<vmem>>, %arg6: memref<1x128xf32, #tpu.memory_space<vmem>>, %arg7: memref<1x8x16x128xf32, #tpu.memory_space<vmem>>, %arg8: memref<10x24x128xf32, #tpu.memory_space<vmem>>, %arg9: memref<128x128xf32, #tpu.memory_space<vmem>>) attributes {dimension_semantics = [#tpu.dimension_semantics<parallel>], iteration_bounds = array<i64: 4>, scalar_prefetch = 0 : i64, scratch_operands = 2 : i64, tpu.core_type = #tpu.core_type<tc>, window_params = [{transform_indices = @transform_0, window_bounds = array<i64: 1, 10, 24, 128>}, {pipeline_mode = #tpu.pipeline_mode<synchronous>, transform_indices = @transform_1, window_bounds = array<i64: 128, 128>}, {pipeline_mode = #tpu.pipeline_mode<synchronous>, transform_indices = @transform_2, window_bounds = array<i64: 9, 128, 128>}, {pipeline_mode = #tpu.pipeline_mode<synchronous>, transform_indices = @transform_3, window_bounds = array<i64: 1, 128>}, {pipeline_mode = #tpu.pipeline_mode<synchronous>, transform_indices = @transform_4, window_bounds = array<i64: 128, 128>}, {pipeline_mode = #tpu.pipeline_mode<synchronous>, transform_indices = @transform_5, window_bounds = array<i64: 1, 128>}, {transform_indices = @transform_6, window_bounds = array<i64: 1, 8, 16, 128>}]} {
    %c0 = arith.constant 0 : index
    %c0_0 = arith.constant 0 : index
    %c0_1 = arith.constant 0 : index
    %c0_2 = arith.constant 0 : index
    %0 = vector.load %arg1[%c0, %c0_0, %c0_1, %c0_2] : memref<1x10x24x128xf32, #tpu.memory_space<vmem>>, vector<1x10x24x128xf32>
    %1 = vector.shape_cast %0 : vector<1x10x24x128xf32> to vector<10x24x128xf32>
    %2 = vector.shape_cast %1 : vector<10x24x128xf32> to vector<240x128xf32>
    %c0_3 = arith.constant 0 : index
    %c0_4 = arith.constant 0 : index
    %3 = vector.load %arg2[%c0_3, %c0_4] : memref<128x128xf32, #tpu.memory_space<vmem>>, vector<128x128xf32>
    %cst = arith.constant dense<0.000000e+00> : vector<240x128xf32>
    %4 = tpu.matmul %2, %3, %cst {dimension_numbers = #tpu.dot_dimension_numbers<[1], [0], [0], [1], [0, 0, 1, 1], [], []>} : vector<240x128xf32>, vector<128x128xf32>, vector<240x128xf32> -> vector<240x128xf32>
    %5 = vector.shape_cast %4 : vector<240x128xf32> to vector<10x24x128xf32>
    %c0_5 = arith.constant 0 : index
    %c0_6 = arith.constant 0 : index
    %c0_7 = arith.constant 0 : index
    %6 = vector.load %arg8[%c0_5, %c0_6, %c0_7] : memref<10x24x128xf32, #tpu.memory_space<vmem>>, vector<10x24x128xf32>
    tpu.vector_store %arg8[%c0_5, %c0_6, %c0_7], %5 {strides = array<i32>} : memref<10x24x128xf32, #tpu.memory_space<vmem>>, vector<10x24x128xf32>,
    %c0_8 = arith.constant 0 : index
    %c0_9 = arith.constant 0 : index
    %c0_10 = arith.constant 0 : index
    %7 = vector.load %arg8[%c0_8, %c0_9, %c0_10] : memref<10x24x128xf32, #tpu.memory_space<vmem>>, vector<8x16x128xf32>
    %8 = vector.shape_cast %7 : vector<8x16x128xf32> to vector<128x128xf32>
    %c0_11 = arith.constant 0 : index
    %c0_12 = arith.constant 0 : index
    %c0_13 = arith.constant 0 : index
    %9 = vector.load %arg3[%c0_11, %c0_12, %c0_13] : memref<9x128x128xf32, #tpu.memory_space<vmem>>, vector<1x128x128xf32>
    %10 = vector.shape_cast %9 : vector<1x128x128xf32> to vector<128x128xf32>
    %cst_14 = arith.constant dense<0.000000e+00> : vector<128x128xf32>
    %11 = tpu.matmul %8, %10, %cst_14 {dimension_numbers = #tpu.dot_dimension_numbers<[1], [0], [0], [1], [0, 0, 1, 1], [], []>} : vector<128x128xf32>, vector<128x128xf32>, vector<128x128xf32> -> vector<128x128xf32>
    %c0_15 = arith.constant 0 : index
    %c0_16 = arith.constant 0 : index
    %12 = vector.load %arg9[%c0_15, %c0_16] : memref<128x128xf32, #tpu.memory_space<vmem>>, vector<128x128xf32>
    tpu.vector_store %arg9[%c0_15, %c0_16], %11 {strides = array<i32>} : memref<128x128xf32, #tpu.memory_space<vmem>>, vector<128x128xf32>,
    %c0_17 = arith.constant 0 : index
    %c1 = arith.constant 1 : index
    %c0_18 = arith.constant 0 : index
    %13 = vector.load %arg8[%c0_17, %c1, %c0_18] : memref<10x24x128xf32, #tpu.memory_space<vmem>>, vector<8x16x128xf32>
    %14 = vector.shape_cast %13 : vector<8x16x128xf32> to vector<128x128xf32>
    %c1_19 = arith.constant 1 : index
    %c0_20 = arith.constant 0 : index
    %c0_21 = arith.constant 0 : index
    %15 = vector.load %arg3[%c1_19, %c0_20, %c0_21] : memref<9x128x128xf32, #tpu.memory_space<vmem>>, vector<1x128x128xf32>
    %16 = vector.shape_cast %15 : vector<1x128x128xf32> to vector<128x128xf32>
    %cst_22 = arith.constant dense<0.000000e+00> : vector<128x128xf32>
    %17 = tpu.matmul %14, %16, %cst_22 {dimension_numbers = #tpu.dot_dimension_numbers<[1], [0], [0], [1], [0, 0, 1, 1], [], []>} : vector<128x128xf32>, vector<128x128xf32>, vector<128x128xf32> -> vector<128x128xf32>
    %c0_23 = arith.constant 0 : index
    %c0_24 = arith.constant 0 : index
    %18 = vector.load %arg9[%c0_23, %c0_24] : memref<128x128xf32, #tpu.memory_space<vmem>>, vector<128x128xf32>
    %19 = arith.addf %18, %17 : vector<128x128xf32>
    %c0_25 = arith.constant 0 : index
    %c0_26 = arith.constant 0 : index
    %20 = vector.load %arg9[%c0_25, %c0_26] : memref<128x128xf32, #tpu.memory_space<vmem>>, vector<128x128xf32>
    tpu.vector_store %arg9[%c0_25, %c0_26], %19 {strides = array<i32>} : memref<128x128xf32, #tpu.memory_space<vmem>>, vector<128x128xf32>,
    %c0_27 = arith.constant 0 : index
    %c2 = arith.constant 2 : index
    %c0_28 = arith.constant 0 : index
    %21 = vector.load %arg8[%c0_27, %c2, %c0_28] : memref<10x24x128xf32, #tpu.memory_space<vmem>>, vector<8x16x128xf32>
    %22 = vector.shape_cast %21 : vector<8x16x128xf32> to vector<128x128xf32>
    %c2_29 = arith.constant 2 : index
    %c0_30 = arith.constant 0 : index
    %c0_31 = arith.constant 0 : index
    %23 = vector.load %arg3[%c2_29, %c0_30, %c0_31] : memref<9x128x128xf32, #tpu.memory_space<vmem>>, vector<1x128x128xf32>
    %24 = vector.shape_cast %23 : vector<1x128x128xf32> to vector<128x128xf32>
    %cst_32 = arith.constant dense<0.000000e+00> : vector<128x128xf32>
    %25 = tpu.matmul %22, %24, %cst_32 {dimension_numbers = #tpu.dot_dimension_numbers<[1], [0], [0], [1], [0, 0, 1, 1], [], []>} : vector<128x128xf32>, vector<128x128xf32>, vector<128x128xf32> -> vector<128x128xf32>
    %c0_33 = arith.constant 0 : index
    %c0_34 = arith.constant 0 : index
    %26 = vector.load %arg9[%c0_33, %c0_34] : memref<128x128xf32, #tpu.memory_space<vmem>>, vector<128x128xf32>
    %27 = arith.addf %26, %25 : vector<128x128xf32>
    %c0_35 = arith.constant 0 : index
    %c0_36 = arith.constant 0 : index
    %28 = vector.load %arg9[%c0_35, %c0_36] : memref<128x128xf32, #tpu.memory_space<vmem>>, vector<128x128xf32>
    tpu.vector_store %arg9[%c0_35, %c0_36], %27 {strides = array<i32>} : memref<128x128xf32, #tpu.memory_space<vmem>>, vector<128x128xf32>,
    %c1_37 = arith.constant 1 : index
    %c0_38 = arith.constant 0 : index
    %c0_39 = arith.constant 0 : index
    %29 = vector.load %arg8[%c1_37, %c0_38, %c0_39] : memref<10x24x128xf32, #tpu.memory_space<vmem>>, vector<8x16x128xf32>
    %30 = vector.shape_cast %29 : vector<8x16x128xf32> to vector<128x128xf32>
    %c3 = arith.constant 3 : index
    %c0_40 = arith.constant 0 : index
    %c0_41 = arith.constant 0 : index
    %31 = vector.load %arg3[%c3, %c0_40, %c0_41] : memref<9x128x128xf32, #tpu.memory_space<vmem>>, vector<1x128x128xf32>
    %32 = vector.shape_cast %31 : vector<1x128x128xf32> to vector<128x128xf32>
    %cst_42 = arith.constant dense<0.000000e+00> : vector<128x128xf32>
    %33 = tpu.matmul %30, %32, %cst_42 {dimension_numbers = #tpu.dot_dimension_numbers<[1], [0], [0], [1], [0, 0, 1, 1], [], []>} : vector<128x128xf32>, vector<128x128xf32>, vector<128x128xf32> -> vector<128x128xf32>
    %c0_43 = arith.constant 0 : index
    %c0_44 = arith.constant 0 : index
    %34 = vector.load %arg9[%c0_43, %c0_44] : memref<128x128xf32, #tpu.memory_space<vmem>>, vector<128x128xf32>
    %35 = arith.addf %34, %33 : vector<128x128xf32>
    %c0_45 = arith.constant 0 : index
    %c0_46 = arith.constant 0 : index
    %36 = vector.load %arg9[%c0_45, %c0_46] : memref<128x128xf32, #tpu.memory_space<vmem>>, vector<128x128xf32>
    tpu.vector_store %arg9[%c0_45, %c0_46], %35 {strides = array<i32>} : memref<128x128xf32, #tpu.memory_space<vmem>>, vector<128x128xf32>,
    %c1_47 = arith.constant 1 : index
    %c1_48 = arith.constant 1 : index
    %c0_49 = arith.constant 0 : index
    %37 = vector.load %arg8[%c1_47, %c1_48, %c0_49] : memref<10x24x128xf32, #tpu.memory_space<vmem>>, vector<8x16x128xf32>
    %38 = vector.shape_cast %37 : vector<8x16x128xf32> to vector<128x128xf32>
    %c4 = arith.constant 4 : index
    %c0_50 = arith.constant 0 : index
    %c0_51 = arith.constant 0 : index
    %39 = vector.load %arg3[%c4, %c0_50, %c0_51] : memref<9x128x128xf32, #tpu.memory_space<vmem>>, vector<1x128x128xf32>
    %40 = vector.shape_cast %39 : vector<1x128x128xf32> to vector<128x128xf32>
    %cst_52 = arith.constant dense<0.000000e+00> : vector<128x128xf32>
    %41 = tpu.matmul %38, %40, %cst_52 {dimension_numbers = #tpu.dot_dimension_numbers<[1], [0], [0], [1], [0, 0, 1, 1], [], []>} : vector<128x128xf32>, vector<128x128xf32>, vector<128x128xf32> -> vector<128x128xf32>
    %c0_53 = arith.constant 0 : index
    %c0_54 = arith.constant 0 : index
    %42 = vector.load %arg9[%c0_53, %c0_54] : memref<128x128xf32, #tpu.memory_space<vmem>>, vector<128x128xf32>
    %43 = arith.addf %42, %41 : vector<128x128xf32>
    %c0_55 = arith.constant 0 : index
    %c0_56 = arith.constant 0 : index
    %44 = vector.load %arg9[%c0_55, %c0_56] : memref<128x128xf32, #tpu.memory_space<vmem>>, vector<128x128xf32>
    tpu.vector_store %arg9[%c0_55, %c0_56], %43 {strides = array<i32>} : memref<128x128xf32, #tpu.memory_space<vmem>>, vector<128x128xf32>,
    %c1_57 = arith.constant 1 : index
    %c2_58 = arith.constant 2 : index
    %c0_59 = arith.constant 0 : index
    %45 = vector.load %arg8[%c1_57, %c2_58, %c0_59] : memref<10x24x128xf32, #tpu.memory_space<vmem>>, vector<8x16x128xf32>
    %46 = vector.shape_cast %45 : vector<8x16x128xf32> to vector<128x128xf32>
    %c5 = arith.constant 5 : index
    %c0_60 = arith.constant 0 : index
    %c0_61 = arith.constant 0 : index
    %47 = vector.load %arg3[%c5, %c0_60, %c0_61] : memref<9x128x128xf32, #tpu.memory_space<vmem>>, vector<1x128x128xf32>
    %48 = vector.shape_cast %47 : vector<1x128x128xf32> to vector<128x128xf32>
    %cst_62 = arith.constant dense<0.000000e+00> : vector<128x128xf32>
    %49 = tpu.matmul %46, %48, %cst_62 {dimension_numbers = #tpu.dot_dimension_numbers<[1], [0], [0], [1], [0, 0, 1, 1], [], []>} : vector<128x128xf32>, vector<128x128xf32>, vector<128x128xf32> -> vector<128x128xf32>
    %c0_63 = arith.constant 0 : index
    %c0_64 = arith.constant 0 : index
    %50 = vector.load %arg9[%c0_63, %c0_64] : memref<128x128xf32, #tpu.memory_space<vmem>>, vector<128x128xf32>
    %51 = arith.addf %50, %49 : vector<128x128xf32>
    %c0_65 = arith.constant 0 : index
    %c0_66 = arith.constant 0 : index
    %52 = vector.load %arg9[%c0_65, %c0_66] : memref<128x128xf32, #tpu.memory_space<vmem>>, vector<128x128xf32>
    tpu.vector_store %arg9[%c0_65, %c0_66], %51 {strides = array<i32>} : memref<128x128xf32, #tpu.memory_space<vmem>>, vector<128x128xf32>,
    %c2_67 = arith.constant 2 : index
    %c0_68 = arith.constant 0 : index
    %c0_69 = arith.constant 0 : index
    %53 = vector.load %arg8[%c2_67, %c0_68, %c0_69] : memref<10x24x128xf32, #tpu.memory_space<vmem>>, vector<8x16x128xf32>
    %54 = vector.shape_cast %53 : vector<8x16x128xf32> to vector<128x128xf32>
    %c6 = arith.constant 6 : index
    %c0_70 = arith.constant 0 : index
    %c0_71 = arith.constant 0 : index
    %55 = vector.load %arg3[%c6, %c0_70, %c0_71] : memref<9x128x128xf32, #tpu.memory_space<vmem>>, vector<1x128x128xf32>
    %56 = vector.shape_cast %55 : vector<1x128x128xf32> to vector<128x128xf32>
    %cst_72 = arith.constant dense<0.000000e+00> : vector<128x128xf32>
    %57 = tpu.matmul %54, %56, %cst_72 {dimension_numbers = #tpu.dot_dimension_numbers<[1], [0], [0], [1], [0, 0, 1, 1], [], []>} : vector<128x128xf32>, vector<128x128xf32>, vector<128x128xf32> -> vector<128x128xf32>
    %c0_73 = arith.constant 0 : index
    %c0_74 = arith.constant 0 : index
    %58 = vector.load %arg9[%c0_73, %c0_74] : memref<128x128xf32, #tpu.memory_space<vmem>>, vector<128x128xf32>
    %59 = arith.addf %58, %57 : vector<128x128xf32>
    %c0_75 = arith.constant 0 : index
    %c0_76 = arith.constant 0 : index
    %60 = vector.load %arg9[%c0_75, %c0_76] : memref<128x128xf32, #tpu.memory_space<vmem>>, vector<128x128xf32>
    tpu.vector_store %arg9[%c0_75, %c0_76], %59 {strides = array<i32>} : memref<128x128xf32, #tpu.memory_space<vmem>>, vector<128x128xf32>,
    %c2_77 = arith.constant 2 : index
    %c1_78 = arith.constant 1 : index
    %c0_79 = arith.constant 0 : index
    %61 = vector.load %arg8[%c2_77, %c1_78, %c0_79] : memref<10x24x128xf32, #tpu.memory_space<vmem>>, vector<8x16x128xf32>
    %62 = vector.shape_cast %61 : vector<8x16x128xf32> to vector<128x128xf32>
    %c7 = arith.constant 7 : index
    %c0_80 = arith.constant 0 : index
    %c0_81 = arith.constant 0 : index
    %63 = vector.load %arg3[%c7, %c0_80, %c0_81] : memref<9x128x128xf32, #tpu.memory_space<vmem>>, vector<1x128x128xf32>
    %64 = vector.shape_cast %63 : vector<1x128x128xf32> to vector<128x128xf32>
    %cst_82 = arith.constant dense<0.000000e+00> : vector<128x128xf32>
    %65 = tpu.matmul %62, %64, %cst_82 {dimension_numbers = #tpu.dot_dimension_numbers<[1], [0], [0], [1], [0, 0, 1, 1], [], []>} : vector<128x128xf32>, vector<128x128xf32>, vector<128x128xf32> -> vector<128x128xf32>
    %c0_83 = arith.constant 0 : index
    %c0_84 = arith.constant 0 : index
    %66 = vector.load %arg9[%c0_83, %c0_84] : memref<128x128xf32, #tpu.memory_space<vmem>>, vector<128x128xf32>
    %67 = arith.addf %66, %65 : vector<128x128xf32>
    %c0_85 = arith.constant 0 : index
    %c0_86 = arith.constant 0 : index
    %68 = vector.load %arg9[%c0_85, %c0_86] : memref<128x128xf32, #tpu.memory_space<vmem>>, vector<128x128xf32>
    tpu.vector_store %arg9[%c0_85, %c0_86], %67 {strides = array<i32>} : memref<128x128xf32, #tpu.memory_space<vmem>>, vector<128x128xf32>,
    %c2_87 = arith.constant 2 : index
    %c2_88 = arith.constant 2 : index
    %c0_89 = arith.constant 0 : index
    %69 = vector.load %arg8[%c2_87, %c2_88, %c0_89] : memref<10x24x128xf32, #tpu.memory_space<vmem>>, vector<8x16x128xf32>
    %70 = vector.shape_cast %69 : vector<8x16x128xf32> to vector<128x128xf32>
    %c8 = arith.constant 8 : index
    %c0_90 = arith.constant 0 : index
    %c0_91 = arith.constant 0 : index
    %71 = vector.load %arg3[%c8, %c0_90, %c0_91] : memref<9x128x128xf32, #tpu.memory_space<vmem>>, vector<1x128x128xf32>
    %72 = vector.shape_cast %71 : vector<1x128x128xf32> to vector<128x128xf32>
    %cst_92 = arith.constant dense<0.000000e+00> : vector<128x128xf32>
    %73 = tpu.matmul %70, %72, %cst_92 {dimension_numbers = #tpu.dot_dimension_numbers<[1], [0], [0], [1], [0, 0, 1, 1], [], []>} : vector<128x128xf32>, vector<128x128xf32>, vector<128x128xf32> -> vector<128x128xf32>
    %c0_93 = arith.constant 0 : index
    %c0_94 = arith.constant 0 : index
    %74 = vector.load %arg9[%c0_93, %c0_94] : memref<128x128xf32, #tpu.memory_space<vmem>>, vector<128x128xf32>
    %75 = arith.addf %74, %73 : vector<128x128xf32>
    %c0_95 = arith.constant 0 : index
    %c0_96 = arith.constant 0 : index
    %76 = vector.load %arg9[%c0_95, %c0_96] : memref<128x128xf32, #tpu.memory_space<vmem>>, vector<128x128xf32>
    tpu.vector_store %arg9[%c0_95, %c0_96], %75 {strides = array<i32>} : memref<128x128xf32, #tpu.memory_space<vmem>>, vector<128x128xf32>,
    %c0_97 = arith.constant 0 : index
    %c0_98 = arith.constant 0 : index
    %77 = vector.load %arg9[%c0_97, %c0_98] : memref<128x128xf32, #tpu.memory_space<vmem>>, vector<128x128xf32>
    %c0_99 = arith.constant 0 : index
    %c0_100 = arith.constant 0 : index
    %78 = vector.load %arg4[%c0_99, %c0_100] : memref<1x128xf32, #tpu.memory_space<vmem>>, vector<1x128xf32>
    %79 = vector.broadcast %78 : vector<1x128xf32> to vector<128x128xf32>
    %80 = arith.addf %77, %79 : vector<128x128xf32>
    %cst_101 = arith.constant 0.000000e+00 : f32
    %81 = vector.broadcast %cst_101 : f32 to vector<128x128xf32>
    %82 = arith.maximumf %80, %81 : vector<128x128xf32>
    %c0_102 = arith.constant 0 : index
    %c0_103 = arith.constant 0 : index
    %83 = vector.load %arg5[%c0_102, %c0_103] : memref<128x128xf32, #tpu.memory_space<vmem>>, vector<128x128xf32>
    %cst_104 = arith.constant dense<0.000000e+00> : vector<128x128xf32>
    %84 = tpu.matmul %82, %83, %cst_104 {dimension_numbers = #tpu.dot_dimension_numbers<[1], [0], [0], [1], [0, 0, 1, 1], [], []>} : vector<128x128xf32>, vector<128x128xf32>, vector<128x128xf32> -> vector<128x128xf32>
    %c0_105 = arith.constant 0 : index
    %c0_106 = arith.constant 0 : index
    %85 = vector.load %arg6[%c0_105, %c0_106] : memref<1x128xf32, #tpu.memory_space<vmem>>, vector<1x128xf32>
    %86 = vector.broadcast %85 : vector<1x128xf32> to vector<128x128xf32>
    %87 = arith.addf %84, %86 : vector<128x128xf32>
    %cst_107 = arith.constant 0.000000e+00 : f32
    %88 = vector.broadcast %cst_107 : f32 to vector<128x128xf32>
    %89 = arith.maximumf %87, %88 : vector<128x128xf32>
    %90 = vector.shape_cast %89 : vector<128x128xf32> to vector<8x16x128xf32>
    %c0_108 = arith.constant 0 : index
    %c1_109 = arith.constant 1 : index
    %c1_110 = arith.constant 1 : index
    %c0_111 = arith.constant 0 : index
    %91 = vector.load %arg1[%c0_108, %c1_109, %c1_110, %c0_111] : memref<1x10x24x128xf32, #tpu.memory_space<vmem>>, vector<1x8x16x128xf32>
    %92 = vector.shape_cast %91 : vector<1x8x16x128xf32> to vector<8x16x128xf32>
    %93 = arith.addf %90, %92 : vector<8x16x128xf32>
    %c0_112 = arith.constant 0 : index
    %c0_113 = arith.constant 0 : index
    %c0_114 = arith.constant 0 : index
    %c0_115 = arith.constant 0 : index
    %94 = vector.load %arg7[%c0_112, %c0_113, %c0_114, %c0_115] : memref<1x8x16x128xf32, #tpu.memory_space<vmem>>, vector<1x8x16x128xf32>
    %95 = vector.shape_cast %94 : vector<1x8x16x128xf32> to vector<8x16x128xf32>
    %96 = vector.shape_cast %93 : vector<8x16x128xf32> to vector<1x8x16x128xf32>
    tpu.vector_store %arg7[%c0_112, %c0_113, %c0_114, %c0_115], %96 {strides = array<i32>} : memref<1x8x16x128xf32, #tpu.memory_space<vmem>>, vector<1x8x16x128xf32>,
    return
  }
  func.func @transform_0(%arg0: i32) -> (i32, i32, i32, i32) {
    %c0_i32 = arith.constant 0 : i32
    %c0_i32_0 = arith.constant 0 : i32
    %c0_i32_1 = arith.constant 0 : i32
    %c0_i32_2 = arith.constant 0 : i32
    return %arg0, %c0_i32, %c0_i32_0, %c0_i32_1 : i32, i32, i32, i32
  }
  func.func @transform_1(%arg0: i32) -> (i32, i32) {
    %c0_i32 = arith.constant 0 : i32
    %c0_i32_0 = arith.constant 0 : i32
    %c0_i32_1 = arith.constant 0 : i32
    return %c0_i32, %c0_i32_0 : i32, i32
  }
  func.func @transform_2(%arg0: i32) -> (i32, i32, i32) {
    %c0_i32 = arith.constant 0 : i32
    %c0_i32_0 = arith.constant 0 : i32
    %c0_i32_1 = arith.constant 0 : i32
    %c0_i32_2 = arith.constant 0 : i32
    return %c0_i32, %c0_i32_0, %c0_i32_1 : i32, i32, i32
  }
  func.func @transform_3(%arg0: i32) -> (i32, i32) {
    %c0_i32 = arith.constant 0 : i32
    %c0_i32_0 = arith.constant 0 : i32
    %c0_i32_1 = arith.constant 0 : i32
    return %c0_i32, %c0_i32_0 : i32, i32
  }
  func.func @transform_4(%arg0: i32) -> (i32, i32) {
    %c0_i32 = arith.constant 0 : i32
    %c0_i32_0 = arith.constant 0 : i32
    %c0_i32_1 = arith.constant 0 : i32
    return %c0_i32, %c0_i32_0 : i32, i32
  }
  func.func @transform_5(%arg0: i32) -> (i32, i32) {
    %c0_i32 = arith.constant 0 : i32
    %c0_i32_0 = arith.constant 0 : i32
    %c0_i32_1 = arith.constant 0 : i32
    return %c0_i32, %c0_i32_0 : i32, i32
  }
  func.func @transform_6(%arg0: i32) -> (i32, i32, i32, i32) {
    %c0_i32 = arith.constant 0 : i32
    %c0_i32_0 = arith.constant 0 : i32
    %c0_i32_1 = arith.constant 0 : i32
    %c0_i32_2 = arith.constant 0 : i32
    return %arg0, %c0_i32, %c0_i32_0, %c0_i32_1 : i32, i32, i32, i32
  }
}

</mosaic_0001>

<llo_original>
// kernel: inverted_bottleneck_forward.1
$region0: #{inverted_bottleneck_forward.1}
  #allocation0 [shape = 'u32[]', space=smem, size = 0x4, offset = 0x4, fixed_abs, tag = 'smem constant byte address 0x4 - core index']
  #allocation1 [shape = 'u32[144,128]{1,0:T(1,128)}', space=vmem, size = 0x12000, scoped, tag = 'internal scratch']
  #allocation2 [shape = 'f32[10,24,128]{2,1,0:T(8,128)}', space=vmem, size = 0x1e000, scoped, tag = 'scratch operand']
  #allocation3 [shape = 'f32[128,128]{1,0:T(8,128)}', space=vmem, size = 0x10000, scoped, tag = 'scratch operand']
  %s0 = inlined_call_operand.vmem [shape: f32[4,10,24,128], index: 0, kind: input, shape index: {}]
  %s1 = inlined_call_operand.vmem [shape: f32[128,128], index: 1, kind: input, shape index: {}]
  %s2 = inlined_call_operand.vmem [shape: f32[9,128,128], index: 2, kind: input, shape index: {}]
  %s3 = inlined_call_operand.vmem [shape: f32[1,128], index: 3, kind: input, shape index: {}]
  %s4 = inlined_call_operand.vmem [shape: f32[128,128], index: 4, kind: input, shape index: {}]
  %s5 = inlined_call_operand.vmem [shape: f32[1,128], index: 5, kind: input, shape index: {}]
  %s6 = inlined_call_operand.vmem [shape: f32[4,8,16,128], index: 6, kind: output, shape index: {}]
  %s7 = sld [smem:[#allocation0]]
  $region57: #{inverted_bottleneck_forward.1} parent=0
    _
  %s9 = ssub.s32 1, %s7
  %s10 = scalar_select 0, %s9, %s7
  loop: start=0, step=1, limit=6
  $region2: #{inverted_bottleneck_forward.1} parent=0 // loop_pre_header
    _
  $region3: #{inverted_bottleneck_forward.1} parent=0 // loop_header
    %s12 = sphi 0, %s16
    %p13 = scmp.ge.s32.totalorder %s12, 6
    %s22 = sphi 0, %s24
    %s25 = sphi 0, %s22
    %s26 = sphi 0, %s25
    %s42 = sphi 0, %s26
    %s46 = sphi 0, %s46
    %s48 = sphi 0, %s46
    %s49 = sphi 0, %s48
    %s63 = sphi 0, %s49
    %s67 = sphi 0, %s67
    %s69 = sphi 0, %s67
    %s70 = sphi 0, %s69
    %s84 = sphi 0, %s70
    %s88 = sphi 0, %s88
    %s90 = sphi 0, %s88
    %s91 = sphi 0, %s90
    %s105 = sphi 0, %s91
    %s109 = sphi 0, %s109
    %s111 = sphi 0, %s109
    %s112 = sphi 0, %s111
    %s126 = sphi 0, %s112
    %s130 = sphi 0, %s130
    %s132 = sphi 0, %s130
    %s133 = sphi 0, %s132
    %s147 = sphi 0, %s133
    %s153 = sphi 0, %s155
    %s156 = sphi 0, %s153
    %s157 = sphi 0, %s156
    %s173 = sphi 0, %s157
  $region4: #{inverted_bottleneck_forward.1} parent=0 // loop_header_branch
    %15 = sbr.rel (%p13) target = $region8
  $region5: #{inverted_bottleneck_forward.1} parent=0 // loop_body
    %s17 = ssub.s32 %s12, 1
    %s18 = ssub.s32 %s12, 2
    %s19 = sadd.s32 %s12, 1
    %s20 = ssub.s32 %s12, %s19
    %p21 = scmp.eq.s32.totalorder %s20, 0
    %s23 = sadd.s32 %s22, 1
    %s24 = scalar_select %p21, %s22, %s23
    %p27 = pneg %p21
    %p28 = scmp.eq.s32.totalorder %s12, 3
    %p29 = por %p27, %p28
    %p30 = scmp.ne.s32.totalorder %s22, %s25
    %p31 = scmp.eq.s32.totalorder %s12, 0
    %p32 = por %p30, %p31
    %p33 = scmp.ne.s32.totalorder %s22, %s25
    %p34 = scmp.eq.s32.totalorder %s17, 3
    %p35 = por %p33, %p34
    %p36 = scmp.ne.s32.totalorder %s25, %s26
    %p37 = scmp.eq.s32.totalorder %s17, 0
    %p38 = por %p36, %p37
    %p39 = scmp.ne.s32.totalorder %s25, %s26
    %p40 = scmp.eq.s32.totalorder %s18, 3
    %p41 = por %p39, %p40
    %p43 = scmp.ne.s32.totalorder %s26, %s42
    %p44 = scmp.eq.s32.totalorder %s18, 0
    %p45 = por %p43, %p44
    %s47 = sadd.s32 %s46, 1
    %p50 = scmp.eq.s32.totalorder %s12, 3
    %p51 = scmp.ne.s32.totalorder %s46, %s48
    %p52 = scmp.eq.s32.totalorder %s12, 0
    %p53 = por %p51, %p52
    %p54 = scmp.ne.s32.totalorder %s46, %s48
    %p55 = scmp.eq.s32.totalorder %s17, 3
    %p56 = por %p54, %p55
    %p57 = scmp.ne.s32.totalorder %s48, %s49
    %p58 = scmp.eq.s32.totalorder %s17, 0
    %p59 = por %p57, %p58
    %p60 = scmp.ne.s32.totalorder %s48, %s49
    %p61 = scmp.eq.s32.totalorder %s18, 3
    %p62 = por %p60, %p61
    %p64 = scmp.ne.s32.totalorder %s49, %s63
    %p65 = scmp.eq.s32.totalorder %s18, 0
    %p66 = por %p64, %p65
    %s68 = sadd.s32 %s67, 1
    %p71 = scmp.eq.s32.totalorder %s12, 3
    %p72 = scmp.ne.s32.totalorder %s67, %s69
    %p73 = scmp.eq.s32.totalorder %s12, 0
    %p74 = por %p72, %p73
    %p75 = scmp.ne.s32.totalorder %s67, %s69
    %p76 = scmp.eq.s32.totalorder %s17, 3
    %p77 = por %p75, %p76
    %p78 = scmp.ne.s32.totalorder %s69, %s70
    %p79 = scmp.eq.s32.totalorder %s17, 0
    %p80 = por %p78, %p79
    %p81 = scmp.ne.s32.totalorder %s69, %s70
    %p82 = scmp.eq.s32.totalorder %s18, 3
    %p83 = por %p81, %p82
    %p85 = scmp.ne.s32.totalorder %s70, %s84
    %p86 = scmp.eq.s32.totalorder %s18, 0
    %p87 = por %p85, %p86
    %s89 = sadd.s32 %s88, 1
    %p92 = scmp.eq.s32.totalorder %s12, 3
    %p93 = scmp.ne.s32.totalorder %s88, %s90
    %p94 = scmp.eq.s32.totalorder %s12, 0
    %p95 = por %p93, %p94
    %p96 = scmp.ne.s32.totalorder %s88, %s90
    %p97 = scmp.eq.s32.totalorder %s17, 3
    %p98 = por %p96, %p97
    %p99 = scmp.ne.s32.totalorder %s90, %s91
    %p100 = scmp.eq.s32.totalorder %s17, 0
    %p101 = por %p99, %p100
    %p102 = scmp.ne.s32.totalorder %s90, %s91
    %p103 = scmp.eq.s32.totalorder %s18, 3
    %p104 = por %p102, %p103
    %p106 = scmp.ne.s32.totalorder %s91, %s105
    %p107 = scmp.eq.s32.totalorder %s18, 0
    %p108 = por %p106, %p107
    %s110 = sadd.s32 %s109, 1
    %p113 = scmp.eq.s32.totalorder %s12, 3
    %p114 = scmp.ne.s32.totalorder %s109, %s111
    %p115 = scmp.eq.s32.totalorder %s12, 0
    %p116 = por %p114, %p115
    %p117 = scmp.ne.s32.totalorder %s109, %s111
    %p118 = scmp.eq.s32.totalorder %s17, 3
    %p119 = por %p117, %p118
    %p120 = scmp.ne.s32.totalorder %s111, %s112
    %p121 = scmp.eq.s32.totalorder %s17, 0
    %p122 = por %p120, %p121
    %p123 = scmp.ne.s32.totalorder %s111, %s112
    %p124 = scmp.eq.s32.totalorder %s18, 3
    %p125 = por %p123, %p124
    %p127 = scmp.ne.s32.totalorder %s112, %s126
    %p128 = scmp.eq.s32.totalorder %s18, 0
    %p129 = por %p127, %p128
    %s131 = sadd.s32 %s130, 1
    %p134 = scmp.eq.s32.totalorder %s12, 3
    %p135 = scmp.ne.s32.totalorder %s130, %s132
    %p136 = scmp.eq.s32.totalorder %s12, 0
    %p137 = por %p135, %p136
    %p138 = scmp.ne.s32.totalorder %s130, %s132
    %p139 = scmp.eq.s32.totalorder %s17, 3
    %p140 = por %p138, %p139
    %p141 = scmp.ne.s32.totalorder %s132, %s133
    %p142 = scmp.eq.s32.totalorder %s17, 0
    %p143 = por %p141, %p142
    %p144 = scmp.ne.s32.totalorder %s132, %s133
    %p145 = scmp.eq.s32.totalorder %s18, 3
    %p146 = por %p144, %p145
    %p148 = scmp.ne.s32.totalorder %s133, %s147
    %p149 = scmp.eq.s32.totalorder %s18, 0
    %p150 = por %p148, %p149
    %s151 = ssub.s32 %s12, %s19
    %p152 = scmp.eq.s32.totalorder %s151, 0
    %s154 = sadd.s32 %s153, 1
    %s155 = scalar_select %p152, %s153, %s154
    %p158 = pneg %p152
    %p159 = scmp.eq.s32.totalorder %s12, 3
    %p160 = por %p158, %p159
    %p161 = scmp.ne.s32.totalorder %s153, %s156
    %p162 = scmp.eq.s32.totalorder %s12, 0
    %p163 = por %p161, %p162
    %p164 = scmp.ne.s32.totalorder %s153, %s156
    %p165 = scmp.eq.s32.totalorder %s17, 3
    %p166 = por %p164, %p165
    %p167 = scmp.ne.s32.totalorder %s156, %s157
    %p168 = scmp.eq.s32.totalorder %s17, 0
    %p169 = por %p167, %p168
    %p170 = scmp.ne.s32.totalorder %s156, %s157
    %p171 = scmp.eq.s32.totalorder %s18, 3
    %p172 = por %p170, %p171
    %p174 = scmp.ne.s32.totalorder %s157, %s173
    %p175 = scmp.eq.s32.totalorder %s18, 0
    %p176 = por %p174, %p175
    %p177 = scmp.le.s32.totalorder 1, %s12
    %p178 = scmp.lt.s32.totalorder %s12, 5
    %p179 = pnand %p177, %p178
    %p180 = pneg %p179
    // Predicated region
    $region9: #{inverted_bottleneck_forward.1} parent=5 // pred_check
      _
    $region10: #{inverted_bottleneck_forward.1} parent=5 // pred_check_branch
      %182 = sbr.rel (%p179) target = $region12
    $region11: #{inverted_bottleneck_forward.1} parent=5 // pred_region
      %s183 = ssub.s32 %s12, 1
      // Predicated region
      $region13: #{inverted_bottleneck_forward.1} parent=11 // pred_check
        %p184 = pneg %p59
      $region14: #{inverted_bottleneck_forward.1} parent=11 // pred_check_branch
        %186 = sbr.rel (%p184) target = $region16
      $region15: #{inverted_bottleneck_forward.1} parent=11 // pred_region
        _
      $region16: #{inverted_bottleneck_forward.1} parent=11 // pred_fallthru
        _
      // Predicated region
      $region17: #{inverted_bottleneck_forward.1} parent=11 // pred_check
        %p187 = pneg %p80
      $region18: #{inverted_bottleneck_forward.1} parent=11 // pred_check_branch
        %189 = sbr.rel (%p187) target = $region20
      $region19: #{inverted_bottleneck_forward.1} parent=11 // pred_region
        _
      $region20: #{inverted_bottleneck_forward.1} parent=11 // pred_fallthru
        _
      // Predicated region
      $region21: #{inverted_bottleneck_forward.1} parent=11 // pred_check
        %p190 = pneg %p101
      $region22: #{inverted_bottleneck_forward.1} parent=11 // pred_check_branch
        %192 = sbr.rel (%p190) target = $region24
      $region23: #{inverted_bottleneck_forward.1} parent=11 // pred_region
        _
      $region24: #{inverted_bottleneck_forward.1} parent=11 // pred_fallthru
        _
      // Predicated region
      $region25: #{inverted_bottleneck_forward.1} parent=11 // pred_check
        %p193 = pneg %p122
      $region26: #{inverted_bottleneck_forward.1} parent=11 // pred_check_branch
        %195 = sbr.rel (%p193) target = $region28
      $region27: #{inverted_bottleneck_forward.1} parent=11 // pred_region
        _
      $region28: #{inverted_bottleneck_forward.1} parent=11 // pred_fallthru
        _
      // Predicated region
      $region29: #{inverted_bottleneck_forward.1} parent=11 // pred_check
        %p196 = pneg %p143
      $region30: #{inverted_bottleneck_forward.1} parent=11 // pred_check_branch
        %198 = sbr.rel (%p196) target = $region32
      $region31: #{inverted_bottleneck_forward.1} parent=11 // pred_region
        _
      $region32: #{inverted_bottleneck_forward.1} parent=11 // pred_fallthru
        _
    $region12: #{inverted_bottleneck_forward.1} parent=5 // pred_fallthru
      _
    %p199 = scmp.lt.s32.totalorder %s12, 4
    // Predicated region
    $region33: #{inverted_bottleneck_forward.1} parent=5 // pred_check
      %p200 = pneg %p199
    $region34: #{inverted_bottleneck_forward.1} parent=5 // pred_check_branch
      %202 = sbr.rel (%p200) target = $region36
    $region35: #{inverted_bottleneck_forward.1} parent=5 // pred_region
      // Predicated region
      $region37: #{inverted_bottleneck_forward.1} parent=35 // pred_check
        %p203 = pneg %p32
      $region38: #{inverted_bottleneck_forward.1} parent=35 // pred_check_branch
        %205 = sbr.rel (%p203) target = $region40
      $region39: #{inverted_bottleneck_forward.1} parent=35 // pred_region
        %p206 = scmp.lt.s32.totalorder %s12, 3
        %s207 = scalar_select %p206, %s12, 3
        %s208 = smul.addr %s207, 30
        %s209 = smul.addr %s208, 8
        %s210 = scalar_lea.vmem %s0, %s209
      $region40: #{inverted_bottleneck_forward.1} parent=35 // pred_fallthru
        _
    $region36: #{inverted_bottleneck_forward.1} parent=5 // pred_fallthru
      _
    %p211 = scmp.le.s32.totalorder 1, %s12
    %p212 = scmp.lt.s32.totalorder %s12, 5
    %p213 = pnand %p211, %p212
    %p214 = pneg %p213
    // Predicated region
    $region41: #{inverted_bottleneck_forward.1} parent=5 // pred_check
      _
    $region42: #{inverted_bottleneck_forward.1} parent=5 // pred_check_branch
      %216 = sbr.rel (%p213) target = $region44
    $region43: #{inverted_bottleneck_forward.1} parent=5 // pred_region
      %s217 = ssub.s32 %s12, 1
      %p218 = scmp.lt.s32.totalorder %s17, 3
      %s219 = scalar_select %p218, %s17, 3
      %s220 = smul.addr %s219, 30
      %s221 = smul.addr %s220, 8
      %s222 = scalar_lea.vmem %s0, %s221
      %p223 = pneg %p38
      %p224 = pneg %p35
      %p225 = pneg %p59
      %p226 = pneg %p56
      %p227 = pneg %p80
      %p228 = pneg %p77
      %p229 = pneg %p101
      %p230 = pneg %p98
      %p231 = pneg %p122
      %p232 = pneg %p119
      %p233 = pneg %p143
      %p234 = pneg %p140
      %p235 = pneg %p169
      %p236 = pneg %p166
      %p237 = scmp.lt.s32.totalorder %s17, 3
      %s238 = scalar_select %p237, %s17, 3
      %s239 = smul.addr %s238, 16
      %s240 = smul.addr %s239, 8
      %s241 = scalar_lea.vmem %s6, %s240
      %p242 = scmp.lt.s32.totalorder %s17, 3
      %s243 = scalar_select %p242, %s17, 3
      %s244 = smul.addr %s243, 30
      %s245 = smul.addr %s244, 8
      %s246 = scalar_lea.vmem %s0, %s245
      %p247 = scmp.lt.s32.totalorder %s17, 3
      %s248 = scalar_select %p247, %s17, 3
      %s249 = smul.addr %s248, 16
      %s250 = smul.addr %s249, 8
      %s251 = scalar_lea.vmem %s6, %s250
      %v252 = vld [vmem:[%s246] sm:$0xff]
      %v253 = vld [vmem:[%s246 + $0x8] sm:$0xff]
      %v254 = vld [vmem:[%s246 + $0x10] sm:$0xff]
      %v255 = vld [vmem:[%s246 + $0x18] sm:$0xff]
      %v256 = vld [vmem:[%s246 + $0x20] sm:$0xff]
      %v257 = vld [vmem:[%s246 + $0x28] sm:$0xff]
      %v258 = vld [vmem:[%s246 + $0x30] sm:$0xff]
      %v259 = vld [vmem:[%s246 + $0x38] sm:$0xff]
      %v260 = vld [vmem:[%s246 + $0x40] sm:$0xff]
      %v261 = vld [vmem:[%s246 + $0x48] sm:$0xff]
      %v262 = vld [vmem:[%s246 + $0x50] sm:$0xff]
      %v263 = vld [vmem:[%s246 + $0x58] sm:$0xff]
      %v264 = vld [vmem:[%s246 + $0x60] sm:$0xff]
      %v265 = vld [vmem:[%s246 + $0x68] sm:$0xff]
      %v266 = vld [vmem:[%s246 + $0x70] sm:$0xff]
      %v267 = vld [vmem:[%s246 + $0x78] sm:$0xff]
      %v268 = vld [vmem:[%s246 + $0x80] sm:$0xff]
      %v269 = vld [vmem:[%s246 + $0x88] sm:$0xff]
      %v270 = vld [vmem:[%s246 + $0x90] sm:$0xff]
      %v271 = vld [vmem:[%s246 + $0x98] sm:$0xff]
      %v272 = vld [vmem:[%s246 + $0xa0] sm:$0xff]
      %v273 = vld [vmem:[%s246 + $0xa8] sm:$0xff]
      %v274 = vld [vmem:[%s246 + $0xb0] sm:$0xff]
      %v275 = vld [vmem:[%s246 + $0xb8] sm:$0xff]
      %v276 = vld [vmem:[%s246 + $0xc0] sm:$0xff]
      %v277 = vld [vmem:[%s246 + $0xc8] sm:$0xff]
      %v278 = vld [vmem:[%s246 + $0xd0] sm:$0xff]
      %v279 = vld [vmem:[%s246 + $0xd8] sm:$0xff]
      %v280 = vld [vmem:[%s246 + $0xe0] sm:$0xff]
      %v281 = vld [vmem:[%s246 + $0xe8] sm:$0xff]
      %v282 = vld [vmem:[%s1] sm:$0xff]
      %v283 = vld [vmem:[%s1 + $0x8] sm:$0xff]
      %v284 = vld [vmem:[%s1 + $0x10] sm:$0xff]
      %v285 = vld [vmem:[%s1 + $0x18] sm:$0xff]
      %v286 = vld [vmem:[%s1 + $0x20] sm:$0xff]
      %v287 = vld [vmem:[%s1 + $0x28] sm:$0xff]
      %v288 = vld [vmem:[%s1 + $0x30] sm:$0xff]
      %v289 = vld [vmem:[%s1 + $0x38] sm:$0xff]
      %v290 = vld [vmem:[%s1 + $0x40] sm:$0xff]
      %v291 = vld [vmem:[%s1 + $0x48] sm:$0xff]
      %v292 = vld [vmem:[%s1 + $0x50] sm:$0xff]
      %v293 = vld [vmem:[%s1 + $0x58] sm:$0xff]
      %v294 = vld [vmem:[%s1 + $0x60] sm:$0xff]
      %v295 = vld [vmem:[%s1 + $0x68] sm:$0xff]
      %v296 = vld [vmem:[%s1 + $0x70] sm:$0xff]
      %v297 = vld [vmem:[%s1 + $0x78] sm:$0xff]
      %298 = vmatprep.subr.mxu0 0.0
      %299 = vmatpush1.msra.mxu0 %v282
      %300 = vmatprep.subr.mxu0 0.0
      %301 = vmatpush1.msra.mxu0 %v283
      %302 = vmatprep.subr.mxu0 0.0
      %303 = vmatpush1.msra.mxu0 %v284
      %304 = vmatprep.subr.mxu0 0.0
      %305 = vmatpush1.msra.mxu0 %v285
      %306 = vmatprep.subr.mxu0 0.0
      %307 = vmatpush1.msra.mxu0 %v286
      %308 = vmatprep.subr.mxu0 0.0
      %309 = vmatpush1.msra.mxu0 %v287
      %310 = vmatprep.subr.mxu0 0.0
      %311 = vmatpush1.msra.mxu0 %v288
      %312 = vmatprep.subr.mxu0 0.0
      %313 = vmatpush1.msra.mxu0 %v289
      %314 = vmatprep.subr.mxu0 0.0
      %315 = vmatpush1.msra.mxu0 %v290
      %316 = vmatprep.subr.mxu0 0.0
      %317 = vmatpush1.msra.mxu0 %v291
      %318 = vmatprep.subr.mxu0 0.0
      %319 = vmatpush1.msra.mxu0 %v292
      %320 = vmatprep.subr.mxu0 0.0
      %321 = vmatpush1.msra.mxu0 %v293
      %322 = vmatprep.subr.mxu0 0.0
      %323 = vmatpush1.msra.mxu0 %v294
      %324 = vmatprep.subr.mxu0 0.0
      %325 = vmatpush1.msra.mxu0 %v295
      %326 = vmatprep.subr.mxu0 0.0
      %327 = vmatpush1.msra.mxu0 %v296
      %328 = vmatprep.subr.mxu0 0.0
      %329 = vmatpush1.msra.mxu0 %v297
      %330 = vmatprep.subr.mxu0 0.0
      %331 = vmatpush1.msra.mxu0 0.0
      %332 = vmatprep.subr.mxu0 0.0
      %333 = vmatpush1.msra.mxu0 0.0
      %334 = vmatprep.subr.mxu0 0.0
      %335 = vmatpush1.msra.mxu0 0.0
      %336 = vmatprep.subr.mxu0 0.0
      %337 = vmatpush1.msra.mxu0 0.0
      %338 = vmatprep.subr.mxu0 0.0
      %339 = vmatpush1.msra.mxu0 0.0
      %340 = vmatprep.subr.mxu0 0.0
      %341 = vmatpush1.msra.mxu0 0.0
      %342 = vmatprep.subr.mxu0 0.0
      %343 = vmatpush1.msra.mxu0 0.0
      %344 = vmatprep.subr.mxu0 0.0
      %345 = vmatpush1.msra.mxu0 0.0
      %346 = vmatprep.subr.mxu0 0.0
      %347 = vmatpush1.msra.mxu0 0.0
      %348 = vmatprep.subr.mxu0 0.0
      %349 = vmatpush1.msra.mxu0 0.0
      %350 = vmatprep.subr.mxu0 0.0
      %351 = vmatpush1.msra.mxu0 0.0
      %352 = vmatprep.subr.mxu0 0.0
      %353 = vmatpush1.msra.mxu0 0.0
      %354 = vmatprep.subr.mxu0 0.0
      %355 = vmatpush1.msra.mxu0 0.0
      %356 = vmatprep.subr.mxu0 0.0
      %357 = vmatpush1.msra.mxu0 0.0
      %358 = vmatprep.subr.mxu0 0.0
      %359 = vmatpush1.msra.mxu0 0.0
      %360 = vmatprep.subr.mxu0 0.0
      %361 = vmatpush1.msra.mxu0 0.0
      %362 = vmatprep.mubr.f32.mxu0 0.0
      %363 = vmatmul.mubr.f32.gmra.mrb[0].mxu0 %v252
      %v364 = vpop.f32.mrb[0].mxu0
      %v365 = vadd.f32 0.0, %v364
      %v366 = vpop.f32.mrb[0].mxu0
      %367 = vmatprep.mubr.f32.mxu0 0.0
      %368 = vmatmul.mubr.f32.gmra.mrb[0].mxu0 %v253
      %v369 = vpop.f32.mrb[0].mxu0
      %v370 = vadd.f32 0.0, %v369
      %v371 = vpop.f32.mrb[0].mxu0
      %372 = vmatprep.mubr.f32.mxu0 0.0
      %373 = vmatmul.mubr.f32.gmra.mrb[0].mxu0 %v254
      %v374 = vpop.f32.mrb[0].mxu0
      %v375 = vadd.f32 0.0, %v374
      %v376 = vpop.f32.mrb[0].mxu0
      %377 = vmatprep.mubr.f32.mxu0 0.0
      %378 = vmatmul.mubr.f32.gmra.mrb[0].mxu0 %v255
      %v379 = vpop.f32.mrb[0].mxu0
      %v380 = vadd.f32 0.0, %v379
      %v381 = vpop.f32.mrb[0].mxu0
      %382 = vmatprep.mubr.f32.mxu0 0.0
      %383 = vmatmul.mubr.f32.gmra.mrb[0].mxu0 %v256
      %v384 = vpop.f32.mrb[0].mxu0
      %v385 = vadd.f32 0.0, %v384
      %v386 = vpop.f32.mrb[0].mxu0
      %387 = vmatprep.mubr.f32.mxu0 0.0
      %388 = vmatmul.mubr.f32.gmra.mrb[0].mxu0 %v257
      %v389 = vpop.f32.mrb[0].mxu0
      %v390 = vadd.f32 0.0, %v389
      %v391 = vpop.f32.mrb[0].mxu0
      %392 = vmatprep.mubr.f32.mxu0 0.0
      %393 = vmatmul.mubr.f32.gmra.mrb[0].mxu0 %v258
      %v394 = vpop.f32.mrb[0].mxu0
      %v395 = vadd.f32 0.0, %v394
      %v396 = vpop.f32.mrb[0].mxu0
      %397 = vmatprep.mubr.f32.mxu0 0.0
      %398 = vmatmul.mubr.f32.gmra.mrb[0].mxu0 %v259
      %v399 = vpop.f32.mrb[0].mxu0
      %v400 = vadd.f32 0.0, %v399
      %v401 = vpop.f32.mrb[0].mxu0
      %402 = vmatprep.mubr.f32.mxu0 0.0
      %403 = vmatmul.mubr.f32.gmra.mrb[0].mxu0 %v260
      %v404 = vpop.f32.mrb[0].mxu0
      %v405 = vadd.f32 0.0, %v404
      %v406 = vpop.f32.mrb[0].mxu0
      %407 = vmatprep.mubr.f32.mxu0 0.0
      %408 = vmatmul.mubr.f32.gmra.mrb[0].mxu0 %v261
      %v409 = vpop.f32.mrb[0].mxu0
      %v410 = vadd.f32 0.0, %v409
      %v411 = vpop.f32.mrb[0].mxu0
      %412 = vmatprep.mubr.f32.mxu0 0.0
      %413 = vmatmul.mubr.f32.gmra.mrb[0].mxu0 %v262
      %v414 = vpop.f32.mrb[0].mxu0
      %v415 = vadd.f32 0.0, %v414
      %v416 = vpop.f32.mrb[0].mxu0
      %417 = vmatprep.mubr.f32.mxu0 0.0
      %418 = vmatmul.mubr.f32.gmra.mrb[0].mxu0 %v263
      %v419 = vpop.f32.mrb[0].mxu0
      %v420 = vadd.f32 0.0, %v419
      %v421 = vpop.f32.mrb[0].mxu0
      %422 = vmatprep.mubr.f32.mxu0 0.0
      %423 = vmatmul.mubr.f32.gmra.mrb[0].mxu0 %v264
      %v424 = vpop.f32.mrb[0].mxu0
      %v425 = vadd.f32 0.0, %v424
      %v426 = vpop.f32.mrb[0].mxu0
      %427 = vmatprep.mubr.f32.mxu0 0.0
      %428 = vmatmul.mubr.f32.gmra.mrb[0].mxu0 %v265
      %v429 = vpop.f32.mrb[0].mxu0
      %v430 = vadd.f32 0.0, %v429
      %v431 = vpop.f32.mrb[0].mxu0
      %432 = vmatprep.mubr.f32.mxu0 0.0
      %433 = vmatmul.mubr.f32.gmra.mrb[0].mxu0 %v266
      %v434 = vpop.f32.mrb[0].mxu0
      %v435 = vadd.f32 0.0, %v434
      %v436 = vpop.f32.mrb[0].mxu0
      %437 = vmatprep.mubr.f32.mxu0 0.0
      %438 = vmatmul.mubr.f32.gmra.mrb[0].mxu0 %v267
      %v439 = vpop.f32.mrb[0].mxu0
      %v440 = vadd.f32 0.0, %v439
      %v441 = vpop.f32.mrb[0].mxu0
      %442 = vmatprep.mubr.f32.mxu0 0.0
      %443 = vmatmul.mubr.f32.gmra.mrb[0].mxu0 %v268
      %v444 = vpop.f32.mrb[0].mxu0
      %v445 = vadd.f32 0.0, %v444
      %v446 = vpop.f32.mrb[0].mxu0
      %447 = vmatprep.mubr.f32.mxu0 0.0
      %448 = vmatmul.mubr.f32.gmra.mrb[0].mxu0 %v269
      %v449 = vpop.f32.mrb[0].mxu0
      %v450 = vadd.f32 0.0, %v449
      %v451 = vpop.f32.mrb[0].mxu0
      %452 = vmatprep.mubr.f32.mxu0 0.0
      %453 = vmatmul.mubr.f32.gmra.mrb[0].mxu0 %v270
      %v454 = vpop.f32.mrb[0].mxu0
      %v455 = vadd.f32 0.0, %v454
      %v456 = vpop.f32.mrb[0].mxu0
      %457 = vmatprep.mubr.f32.mxu0 0.0
      %458 = vmatmul.mubr.f32.gmra.mrb[0].mxu0 %v271
      %v459 = vpop.f32.mrb[0].mxu0
      %v460 = vadd.f32 0.0, %v459
      %v461 = vpop.f32.mrb[0].mxu0
      %462 = vmatprep.mubr.f32.mxu0 0.0
      %463 = vmatmul.mubr.f32.gmra.mrb[0].mxu0 %v272
      %v464 = vpop.f32.mrb[0].mxu0
      %v465 = vadd.f32 0.0, %v464
      %v466 = vpop.f32.mrb[0].mxu0
      %467 = vmatprep.mubr.f32.mxu0 0.0
      %468 = vmatmul.mubr.f32.gmra.mrb[0].mxu0 %v273
      %v469 = vpop.f32.mrb[0].mxu0
      %v470 = vadd.f32 0.0, %v469
      %v471 = vpop.f32.mrb[0].mxu0
      %472 = vmatprep.mubr.f32.mxu0 0.0
      %473 = vmatmul.mubr.f32.gmra.mrb[0].mxu0 %v274
      %v474 = vpop.f32.mrb[0].mxu0
      %v475 = vadd.f32 0.0, %v474
      %v476 = vpop.f32.mrb[0].mxu0
      %477 = vmatprep.mubr.f32.mxu0 0.0
      %478 = vmatmul.mubr.f32.gmra.mrb[0].mxu0 %v275
      %v479 = vpop.f32.mrb[0].mxu0
      %v480 = vadd.f32 0.0, %v479
      %v481 = vpop.f32.mrb[0].mxu0
      %482 = vmatprep.mubr.f32.mxu0 0.0
      %483 = vmatmul.mubr.f32.gmra.mrb[0].mxu0 %v276
      %v484 = vpop.f32.mrb[0].mxu0
      %v485 = vadd.f32 0.0, %v484
      %v486 = vpop.f32.mrb[0].mxu0
      %487 = vmatprep.mubr.f32.mxu0 0.0
      %488 = vmatmul.mubr.f32.gmra.mrb[0].mxu0 %v277
      %v489 = vpop.f32.mrb[0].mxu0
      %v490 = vadd.f32 0.0, %v489
      %v491 = vpop.f32.mrb[0].mxu0
      %492 = vmatprep.mubr.f32.mxu0 0.0
      %493 = vmatmul.mubr.f32.gmra.mrb[0].mxu0 %v278
      %v494 = vpop.f32.mrb[0].mxu0
      %v495 = vadd.f32 0.0, %v494
      %v496 = vpop.f32.mrb[0].mxu0
      %497 = vmatprep.mubr.f32.mxu0 0.0
      %498 = vmatmul.mubr.f32.gmra.mrb[0].mxu0 %v279
      %v499 = vpop.f32.mrb[0].mxu0
      %v500 = vadd.f32 0.0, %v499
      %v501 = vpop.f32.mrb[0].mxu0
      %502 = vmatprep.mubr.f32.mxu0 0.0
      %503 = vmatmul.mubr.f32.gmra.mrb[0].mxu0 %v280
      %v504 = vpop.f32.mrb[0].mxu0
      %v505 = vadd.f32 0.0, %v504
      %v506 = vpop.f32.mrb[0].mxu0
      %507 = vmatprep.mubr.f32.mxu0 0.0
      %508 = vmatmul.mubr.f32.gmra.mrb[0].mxu0 %v281
      %v509 = vpop.f32.mrb[0].mxu0
      %v510 = vadd.f32 0.0, %v509
      %v511 = vpop.f32.mrb[0].mxu0
      %512 = vdwg.mxu0
      %513 = vst [vmem:[#allocation2] sm:$0xff] %v365
      %514 = vst [vmem:[#allocation2 + $0x8] sm:$0xff] %v370
      %515 = vst [vmem:[#allocation2 + $0x10] sm:$0xff] %v375
      %516 = vst [vmem:[#allocation2 + $0x18] sm:$0xff] %v380
      %517 = vst [vmem:[#allocation2 + $0x20] sm:$0xff] %v385
      %518 = vst [vmem:[#allocation2 + $0x28] sm:$0xff] %v390
      %519 = vst [vmem:[#allocation2 + $0x30] sm:$0xff] %v395
      %520 = vst [vmem:[#allocation2 + $0x38] sm:$0xff] %v400
      %521 = vst [vmem:[#allocation2 + $0x40] sm:$0xff] %v405
      %522 = vst [vmem:[#allocation2 + $0x48] sm:$0xff] %v410
      %523 = vst [vmem:[#allocation2 + $0x50] sm:$0xff] %v415
      %524 = vst [vmem:[#allocation2 + $0x58] sm:$0xff] %v420
      %525 = vst [vmem:[#allocation2 + $0x60] sm:$0xff] %v425
      %526 = vst [vmem:[#allocation2 + $0x68] sm:$0xff] %v430
      %527 = vst [vmem:[#allocation2 + $0x70] sm:$0xff] %v435
      %528 = vst [vmem:[#allocation2 + $0x78] sm:$0xff] %v440
      %529 = vst [vmem:[#allocation2 + $0x80] sm:$0xff] %v445
      %530 = vst [vmem:[#allocation2 + $0x88] sm:$0xff] %v450
      %531 = vst [vmem:[#allocation2 + $0x90] sm:$0xff] %v455
      %532 = vst [vmem:[#allocation2 + $0x98] sm:$0xff] %v460
      %533 = vst [vmem:[#allocation2 + $0xa0] sm:$0xff] %v465
      %534 = vst [vmem:[#allocation2 + $0xa8] sm:$0xff] %v470
      %535 = vst [vmem:[#allocation2 + $0xb0] sm:$0xff] %v475
      %536 = vst [vmem:[#allocation2 + $0xb8] sm:$0xff] %v480
      %537 = vst [vmem:[#allocation2 + $0xc0] sm:$0xff] %v485
      %538 = vst [vmem:[#allocation2 + $0xc8] sm:$0xff] %v490
      %539 = vst [vmem:[#allocation2 + $0xd0] sm:$0xff] %v495
      %540 = vst [vmem:[#allocation2 + $0xd8] sm:$0xff] %v500
      %541 = vst [vmem:[#allocation2 + $0xe0] sm:$0xff] %v505
      %542 = vst [vmem:[#allocation2 + $0xe8] sm:$0xff] %v510
      %v543 = vld [vmem:[#allocation2] sm:$0xff]
      %v544 = vld [vmem:[#allocation2 + $0x8] sm:$0xff]
      %v545 = vld [vmem:[#allocation2 + $0x18] sm:$0xff]
      %v546 = vld [vmem:[#allocation2 + $0x20] sm:$0xff]
      %v547 = vld [vmem:[#allocation2 + $0x30] sm:$0xff]
      %v548 = vld [vmem:[#allocation2 + $0x38] sm:$0xff]
      %v549 = vld [vmem:[#allocation2 + $0x48] sm:$0xff]
      %v550 = vld [vmem:[#allocation2 + $0x50] sm:$0xff]
      %v551 = vld [vmem:[#allocation2 + $0x60] sm:$0xff]
      %v552 = vld [vmem:[#allocation2 + $0x68] sm:$0xff]
      %v553 = vld [vmem:[#allocation2 + $0x78] sm:$0xff]
      %v554 = vld [vmem:[#allocation2 + $0x80] sm:$0xff]
      %v555 = vld [vmem:[#allocation2 + $0x90] sm:$0xff]
      %v556 = vld [vmem:[#allocation2 + $0x98] sm:$0xff]
      %v557 = vld [vmem:[#allocation2 + $0xa8] sm:$0xff]
      %v558 = vld [vmem:[#allocation2 + $0xb0] sm:$0xff]
      %v559 = vld [vmem:[%s2] sm:$0xff]
      %v560 = vld [vmem:[%s2 + $0x8] sm:$0xff]
      %v561 = vld [vmem:[%s2 + $0x10] sm:$0xff]
      %v562 = vld [vmem:[%s2 + $0x18] sm:$0xff]
      %v563 = vld [vmem:[%s2 + $0x20] sm:$0xff]
      %v564 = vld [vmem:[%s2 + $0x28] sm:$0xff]
      %v565 = vld [vmem:[%s2 + $0x30] sm:$0xff]
      %v566 = vld [vmem:[%s2 + $0x38] sm:$0xff]
      %v567 = vld [vmem:[%s2 + $0x40] sm:$0xff]
      %v568 = vld [vmem:[%s2 + $0x48] sm:$0xff]
      %v569 = vld [vmem:[%s2 + $0x50] sm:$0xff]
      %v570 = vld [vmem:[%s2 + $0x58] sm:$0xff]
      %v571 = vld [vmem:[%s2 + $0x60] sm:$0xff]
      %v572 = vld [vmem:[%s2 + $0x68] sm:$0xff]
      %v573 = vld [vmem:[%s2 + $0x70] sm:$0xff]
      %v574 = vld [vmem:[%s2 + $0x78] sm:$0xff]
      %575 = vmatprep.subr.mxu0 0.0
      %576 = vmatpush1.msra.mxu0 %v559
      %577 = vmatprep.subr.mxu0 0.0
      %578 = vmatpush1.msra.mxu0 %v560
      %579 = vmatprep.subr.mxu0 0.0
      %580 = vmatpush1.msra.mxu0 %v561
      %581 = vmatprep.subr.mxu0 0.0
      %582 = vmatpush1.msra.mxu0 %v562
      %583 = vmatprep.subr.mxu0 0.0
      %584 = vmatpush1.msra.mxu0 %v563
      %585 = vmatprep.subr.mxu0 0.0
      %586 = vmatpush1.msra.mxu0 %v564
      %587 = vmatprep.subr.mxu0 0.0
      %588 = vmatpush1.msra.mxu0 %v565
      %589 = vmatprep.subr.mxu0 0.0
      %590 = vmatpush1.msra.mxu0 %v566
      %591 = vmatprep.subr.mxu0 0.0
      %592 = vmatpush1.msra.mxu0 %v567
      %593 = vmatprep.subr.mxu0 0.0
      %594 = vmatpush1.msra.mxu0 %v568
      %595 = vmatprep.subr.mxu0 0.0
      %596 = vmatpush1.msra.mxu0 %v569
      %597 = vmatprep.subr.mxu0 0.0
      %598 = vmatpush1.msra.mxu0 %v570
      %599 = vmatprep.subr.mxu0 0.0
      %600 = vmatpush1.msra.mxu0 %v571
      %601 = vmatprep.subr.mxu0 0.0
      %602 = vmatpush1.msra.mxu0 %v572
      %603 = vmatprep.subr.mxu0 0.0
      %604 = vmatpush1.msra.mxu0 %v573
      %605 = vmatprep.subr.mxu0 0.0
      %606 = vmatpush1.msra.mxu0 %v574
      %607 = vmatprep.subr.mxu0 0.0
      %608 = vmatpush1.msra.mxu0 0.0
      %609 = vmatprep.subr.mxu0 0.0
      %610 = vmatpush1.msra.mxu0 0.0
      %611 = vmatprep.subr.mxu0 0.0
      %612 = vmatpush1.msra.mxu0 0.0
      %613 = vmatprep.subr.mxu0 0.0
      %614 = vmatpush1.msra.mxu0 0.0
      %615 = vmatprep.subr.mxu0 0.0
      %616 = vmatpush1.msra.mxu0 0.0
      %617 = vmatprep.subr.mxu0 0.0
      %618 = vmatpush1.msra.mxu0 0.0
      %619 = vmatprep.subr.mxu0 0.0
      %620 = vmatpush1.msra.mxu0 0.0
      %621 = vmatprep.subr.mxu0 0.0
      %622 = vmatpush1.msra.mxu0 0.0
      %623 = vmatprep.subr.mxu0 0.0
      %624 = vmatpush1.msra.mxu0 0.0
      %625 = vmatprep.subr.mxu0 0.0
      %626 = vmatpush1.msra.mxu0 0.0
      %627 = vmatprep.subr.mxu0 0.0
      %628 = vmatpush1.msra.mxu0 0.0
      %629 = vmatprep.subr.mxu0 0.0
      %630 = vmatpush1.msra.mxu0 0.0
      %631 = vmatprep.subr.mxu0 0.0
      %632 = vmatpush1.msra.mxu0 0.0
      %633 = vmatprep.subr.mxu0 0.0
      %634 = vmatpush1.msra.mxu0 0.0
      %635 = vmatprep.subr.mxu0 0.0
      %636 = vmatpush1.msra.mxu0 0.0
      %637 = vmatprep.subr.mxu0 0.0
      %638 = vmatpush1.msra.mxu0 0.0
      %639 = vmatprep.mubr.f32.mxu0 0.0
      %640 = vmatmul.mubr.f32.gmra.mrb[0].mxu0 %v543
      %v641 = vpop.f32.mrb[0].mxu0
      %v642 = vadd.f32 0.0, %v641
      %v643 = vpop.f32.mrb[0].mxu0
      %644 = vmatprep.mubr.f32.mxu0 0.0
      %645 = vmatmul.mubr.f32.gmra.mrb[0].mxu0 %v544
      %v646 = vpop.f32.mrb[0].mxu0
      %v647 = vadd.f32 0.0, %v646
      %v648 = vpop.f32.mrb[0].mxu0
      %649 = vmatprep.mubr.f32.mxu0 0.0
      %650 = vmatmul.mubr.f32.gmra.mrb[0].mxu0 %v545
      %v651 = vpop.f32.mrb[0].mxu0
      %v652 = vadd.f32 0.0, %v651
      %v653 = vpop.f32.mrb[0].mxu0
      %654 = vmatprep.mubr.f32.mxu0 0.0
      %655 = vmatmul.mubr.f32.gmra.mrb[0].mxu0 %v546
      %v656 = vpop.f32.mrb[0].mxu0
      %v657 = vadd.f32 0.0, %v656
      %v658 = vpop.f32.mrb[0].mxu0
      %659 = vmatprep.mubr.f32.mxu0 0.0
      %660 = vmatmul.mubr.f32.gmra.mrb[0].mxu0 %v547
      %v661 = vpop.f32.mrb[0].mxu0
      %v662 = vadd.f32 0.0, %v661
      %v663 = vpop.f32.mrb[0].mxu0
      %664 = vmatprep.mubr.f32.mxu0 0.0
      %665 = vmatmul.mubr.f32.gmra.mrb[0].mxu0 %v548
      %v666 = vpop.f32.mrb[0].mxu0
      %v667 = vadd.f32 0.0, %v666
      %v668 = vpop.f32.mrb[0].mxu0
      %669 = vmatprep.mubr.f32.mxu0 0.0
      %670 = vmatmul.mubr.f32.gmra.mrb[0].mxu0 %v549
      %v671 = vpop.f32.mrb[0].mxu0
      %v672 = vadd.f32 0.0, %v671
      %v673 = vpop.f32.mrb[0].mxu0
      %674 = vmatprep.mubr.f32.mxu0 0.0
      %675 = vmatmul.mubr.f32.gmra.mrb[0].mxu0 %v550
      %v676 = vpop.f32.mrb[0].mxu0
      %v677 = vadd.f32 0.0, %v676
      %v678 = vpop.f32.mrb[0].mxu0
      %679 = vmatprep.mubr.f32.mxu0 0.0
      %680 = vmatmul.mubr.f32.gmra.mrb[0].mxu0 %v551
      %v681 = vpop.f32.mrb[0].mxu0
      %v682 = vadd.f32 0.0, %v681
      %v683 = vpop.f32.mrb[0].mxu0
      %684 = vmatprep.mubr.f32.mxu0 0.0
      %685 = vmatmul.mubr.f32.gmra.mrb[0].mxu0 %v552
      %v686 = vpop.f32.mrb[0].mxu0
      %v687 = vadd.f32 0.0, %v686
      %v688 = vpop.f32.mrb[0].mxu0
      %689 = vmatprep.mubr.f32.mxu0 0.0
      %690 = vmatmul.mubr.f32.gmra.mrb[0].mxu0 %v553
      %v691 = vpop.f32.mrb[0].mxu0
      %v692 = vadd.f32 0.0, %v691
      %v693 = vpop.f32.mrb[0].mxu0
      %694 = vmatprep.mubr.f32.mxu0 0.0
      %695 = vmatmul.mubr.f32.gmra.mrb[0].mxu0 %v554
      %v696 = vpop.f32.mrb[0].mxu0
      %v697 = vadd.f32 0.0, %v696
      %v698 = vpop.f32.mrb[0].mxu0
      %699 = vmatprep.mubr.f32.mxu0 0.0
      %700 = vmatmul.mubr.f32.gmra.mrb[0].mxu0 %v555
      %v701 = vpop.f32.mrb[0].mxu0
      %v702 = vadd.f32 0.0, %v701
      %v703 = vpop.f32.mrb[0].mxu0
      %704 = vmatprep.mubr.f32.mxu0 0.0
      %705 = vmatmul.mubr.f32.gmra.mrb[0].mxu0 %v556
      %v706 = vpop.f32.mrb[0].mxu0
      %v707 = vadd.f32 0.0, %v706
      %v708 = vpop.f32.mrb[0].mxu0
      %709 = vmatprep.mubr.f32.mxu0 0.0
      %710 = vmatmul.mubr.f32.gmra.mrb[0].mxu0 %v557
      %v711 = vpop.f32.mrb[0].mxu0
      %v712 = vadd.f32 0.0, %v711
      %v713 = vpop.f32.mrb[0].mxu0
      %714 = vmatprep.mubr.f32.mxu0 0.0
      %715 = vmatmul.mubr.f32.gmra.mrb[0].mxu0 %v558
      %v716 = vpop.f32.mrb[0].mxu0
      %v717 = vadd.f32 0.0, %v716
      %v718 = vpop.f32.mrb[0].mxu0
      %719 = vdwg.mxu0
      %720 = vst [vmem:[#allocation3] sm:$0xff] %v642
      %721 = vst [vmem:[#allocation3 + $0x8] sm:$0xff] %v647
      %722 = vst [vmem:[#allocation3 + $0x10] sm:$0xff] %v652
      %723 = vst [vmem:[#allocation3 + $0x18] sm:$0xff] %v657
      %724 = vst [vmem:[#allocation3 + $0x20] sm:$0xff] %v662
      %725 = vst [vmem:[#allocation3 + $0x28] sm:$0xff] %v667
      %726 = vst [vmem:[#allocation3 + $0x30] sm:$0xff] %v672
      %727 = vst [vmem:[#allocation3 + $0x38] sm:$0xff] %v677
      %728 = vst [vmem:[#allocation3 + $0x40] sm:$0xff] %v682
      %729 = vst [vmem:[#allocation3 + $0x48] sm:$0xff] %v687
      %730 = vst [vmem:[#allocation3 + $0x50] sm:$0xff] %v692
      %731 = vst [vmem:[#allocation3 + $0x58] sm:$0xff] %v697
      %732 = vst [vmem:[#allocation3 + $0x60] sm:$0xff] %v702
      %733 = vst [vmem:[#allocation3 + $0x68] sm:$0xff] %v707
      %734 = vst [vmem:[#allocation3 + $0x70] sm:$0xff] %v712
      %735 = vst [vmem:[#allocation3 + $0x78] sm:$0xff] %v717
      %v736 = vld [vmem:[#allocation2 + $0x1] sm:$0xff]
      %v737 = vld [vmem:[#allocation2 + $0x9] sm:$0xff]
      %v738 = vld [vmem:[#allocation2 + $0x19] sm:$0xff]
      %v739 = vld [vmem:[#allocation2 + $0x21] sm:$0xff]
      %v740 = vld [vmem:[#allocation2 + $0x31] sm:$0xff]
      %v741 = vld [vmem:[#allocation2 + $0x39] sm:$0xff]
      %v742 = vld [vmem:[#allocation2 + $0x49] sm:$0xff]
      %v743 = vld [vmem:[#allocation2 + $0x51] sm:$0xff]
      %v744 = vld [vmem:[#allocation2 + $0x61] sm:$0xff]
      %v745 = vld [vmem:[#allocation2 + $0x69] sm:$0xff]
      %v746 = vld [vmem:[#allocation2 + $0x79] sm:$0xff]
      %v747 = vld [vmem:[#allocation2 + $0x81] sm:$0xff]
      %v748 = vld [vmem:[#allocation2 + $0x91] sm:$0xff]
      %v749 = vld [vmem:[#allocation2 + $0x99] sm:$0xff]
      %v750 = vld [vmem:[#allocation2 + $0xa9] sm:$0xff]
      %v751 = vld [vmem:[#allocation2 + $0xb1] sm:$0xff]
      %s752 = scalar_lea.vmem %s2, 128
      %v753 = vld [vmem:[%s752] sm:$0xff]
      %v754 = vld [vmem:[%s752 + $0x8] sm:$0xff]
      %v755 = vld [vmem:[%s752 + $0x10] sm:$0xff]
      %v756 = vld [vmem:[%s752 + $0x18] sm:$0xff]
      %v757 = vld [vmem:[%s752 + $0x20] sm:$0xff]
      %v758 = vld [vmem:[%s752 + $0x28] sm:$0xff]
      %v759 = vld [vmem:[%s752 + $0x30] sm:$0xff]
      %v760 = vld [vmem:[%s752 + $0x38] sm:$0xff]
      %v761 = vld [vmem:[%s752 + $0x40] sm:$0xff]
      %v762 = vld [vmem:[%s752 + $0x48] sm:$0xff]
      %v763 = vld [vmem:[%s752 + $0x50] sm:$0xff]
      %v764 = vld [vmem:[%s752 + $0x58] sm:$0xff]
      %v765 = vld [vmem:[%s752 + $0x60] sm:$0xff]
      %v766 = vld [vmem:[%s752 + $0x68] sm:$0xff]
      %v767 = vld [vmem:[%s752 + $0x70] sm:$0xff]
      %v768 = vld [vmem:[%s752 + $0x78] sm:$0xff]
      %769 = vmatprep.subr.mxu0 0.0
      %770 = vmatpush1.msra.mxu0 %v753
      %771 = vmatprep.subr.mxu0 0.0
      %772 = vmatpush1.msra.mxu0 %v754
      %773 = vmatprep.subr.mxu0 0.0
      %774 = vmatpush1.msra.mxu0 %v755
      %775 = vmatprep.subr.mxu0 0.0
      %776 = vmatpush1.msra.mxu0 %v756
      %777 = vmatprep.subr.mxu0 0.0
      %778 = vmatpush1.msra.mxu0 %v757
      %779 = vmatprep.subr.mxu0 0.0
      %780 = vmatpush1.msra.mxu0 %v758
      %781 = vmatprep.subr.mxu0 0.0
      %782 = vmatpush1.msra.mxu0 %v759
      %783 = vmatprep.subr.mxu0 0.0
      %784 = vmatpush1.msra.mxu0 %v760
      %785 = vmatprep.subr.mxu0 0.0
      %786 = vmatpush1.msra.mxu0 %v761
      %787 = vmatprep.subr.mxu0 0.0
      %788 = vmatpush1.msra.mxu0 %v762
      %789 = vmatprep.subr.mxu0 0.0
      %790 = vmatpush1.msra.mxu0 %v763
      %791 = vmatprep.subr.mxu0 0.0
      %792 = vmatpush1.msra.mxu0 %v764
      %793 = vmatprep.subr.mxu0 0.0
      %794 = vmatpush1.msra.mxu0 %v765
      %795 = vmatprep.subr.mxu0 0.0
      %796 = vmatpush1.msra.mxu0 %v766
      %797 = vmatprep.subr.mxu0 0.0
      %798 = vmatpush1.msra.mxu0 %v767
      %799 = vmatprep.subr.mxu0 0.0
      %800 = vmatpush1.msra.mxu0 %v768
      %801 = vmatprep.subr.mxu0 0.0
      %802 = vmatpush1.msra.mxu0 0.0
      %803 = vmatprep.subr.mxu0 0.0
      %804 = vmatpush1.msra.mxu0 0.0
      %805 = vmatprep.subr.mxu0 0.0
      %806 = vmatpush1.msra.mxu0 0.0
      %807 = vmatprep.subr.mxu0 0.0
      %808 = vmatpush1.msra.mxu0 0.0
      %809 = vmatprep.subr.mxu0 0.0
      %810 = vmatpush1.msra.mxu0 0.0
      %811 = vmatprep.subr.mxu0 0.0
      %812 = vmatpush1.msra.mxu0 0.0
      %813 = vmatprep.subr.mxu0 0.0
      %814 = vmatpush1.msra.mxu0 0.0
      %815 = vmatprep.subr.mxu0 0.0
      %816 = vmatpush1.msra.mxu0 0.0
      %817 = vmatprep.subr.mxu0 0.0
      %818 = vmatpush1.msra.mxu0 0.0
      %819 = vmatprep.subr.mxu0 0.0
      %820 = vmatpush1.msra.mxu0 0.0
      %821 = vmatprep.subr.mxu0 0.0
      %822 = vmatpush1.msra.mxu0 0.0
      %823 = vmatprep.subr.mxu0 0.0
      %824 = vmatpush1.msra.mxu0 0.0
      %825 = vmatprep.subr.mxu0 0.0
      %826 = vmatpush1.msra.mxu0 0.0
      %827 = vmatprep.subr.mxu0 0.0
      %828 = vmatpush1.msra.mxu0 0.0
      %829 = vmatprep.subr.mxu0 0.0
      %830 = vmatpush1.msra.mxu0 0.0
      %831 = vmatprep.subr.mxu0 0.0
      %832 = vmatpush1.msra.mxu0 0.0
      %833 = vmatprep.mubr.f32.mxu0 0.0
      %834 = vmatmul.mubr.f32.gmra.mrb[0].mxu0 %v736
      %v835 = vpop.f32.mrb[0].mxu0
      %v836 = vadd.f32 0.0, %v835
      %v837 = vpop.f32.mrb[0].mxu0
      %838 = vmatprep.mubr.f32.mxu0 0.0
      %839 = vmatmul.mubr.f32.gmra.mrb[0].mxu0 %v737
      %v840 = vpop.f32.mrb[0].mxu0
      %v841 = vadd.f32 0.0, %v840
      %v842 = vpop.f32.mrb[0].mxu0
      %843 = vmatprep.mubr.f32.mxu0 0.0
      %844 = vmatmul.mubr.f32.gmra.mrb[0].mxu0 %v738
      %v845 = vpop.f32.mrb[0].mxu0
      %v846 = vadd.f32 0.0, %v845
      %v847 = vpop.f32.mrb[0].mxu0
      %848 = vmatprep.mubr.f32.mxu0 0.0
      %849 = vmatmul.mubr.f32.gmra.mrb[0].mxu0 %v739
      %v850 = vpop.f32.mrb[0].mxu0
      %v851 = vadd.f32 0.0, %v850
      %v852 = vpop.f32.mrb[0].mxu0
      %853 = vmatprep.mubr.f32.mxu0 0.0
      %854 = vmatmul.mubr.f32.gmra.mrb[0].mxu0 %v740
      %v855 = vpop.f32.mrb[0].mxu0
      %v856 = vadd.f32 0.0, %v855
      %v857 = vpop.f32.mrb[0].mxu0
      %858 = vmatprep.mubr.f32.mxu0 0.0
      %859 = vmatmul.mubr.f32.gmra.mrb[0].mxu0 %v741
      %v860 = vpop.f32.mrb[0].mxu0
      %v861 = vadd.f32 0.0, %v860
      %v862 = vpop.f32.mrb[0].mxu0
      %863 = vmatprep.mubr.f32.mxu0 0.0
      %864 = vmatmul.mubr.f32.gmra.mrb[0].mxu0 %v742
      %v865 = vpop.f32.mrb[0].mxu0
      %v866 = vadd.f32 0.0, %v865
      %v867 = vpop.f32.mrb[0].mxu0
      %868 = vmatprep.mubr.f32.mxu0 0.0
      %869 = vmatmul.mubr.f32.gmra.mrb[0].mxu0 %v743
      %v870 = vpop.f32.mrb[0].mxu0
      %v871 = vadd.f32 0.0, %v870
      %v872 = vpop.f32.mrb[0].mxu0
      %873 = vmatprep.mubr.f32.mxu0 0.0
      %874 = vmatmul.mubr.f32.gmra.mrb[0].mxu0 %v744
      %v875 = vpop.f32.mrb[0].mxu0
      %v876 = vadd.f32 0.0, %v875
      %v877 = vpop.f32.mrb[0].mxu0
      %878 = vmatprep.mubr.f32.mxu0 0.0
      %879 = vmatmul.mubr.f32.gmra.mrb[0].mxu0 %v745
      %v880 = vpop.f32.mrb[0].mxu0
      %v881 = vadd.f32 0.0, %v880
      %v882 = vpop.f32.mrb[0].mxu0
      %883 = vmatprep.mubr.f32.mxu0 0.0
      %884 = vmatmul.mubr.f32.gmra.mrb[0].mxu0 %v746
      %v885 = vpop.f32.mrb[0].mxu0
      %v886 = vadd.f32 0.0, %v885
      %v887 = vpop.f32.mrb[0].mxu0
      %888 = vmatprep.mubr.f32.mxu0 0.0
      %889 = vmatmul.mubr.f32.gmra.mrb[0].mxu0 %v747
      %v890 = vpop.f32.mrb[0].mxu0
      %v891 = vadd.f32 0.0, %v890
      %v892 = vpop.f32.mrb[0].mxu0
      %893 = vmatprep.mubr.f32.mxu0 0.0
      %894 = vmatmul.mubr.f32.gmra.mrb[0].mxu0 %v748
      %v895 = vpop.f32.mrb[0].mxu0
      %v896 = vadd.f32 0.0, %v895
      %v897 = vpop.f32.mrb[0].mxu0
      %898 = vmatprep.mubr.f32.mxu0 0.0
      %899 = vmatmul.mubr.f32.gmra.mrb[0].mxu0 %v749
      %v900 = vpop.f32.mrb[0].mxu0
      %v901 = vadd.f32 0.0, %v900
      %v902 = vpop.f32.mrb[0].mxu0
      %903 = vmatprep.mubr.f32.mxu0 0.0
      %904 = vmatmul.mubr.f32.gmra.mrb[0].mxu0 %v750
      %v905 = vpop.f32.mrb[0].mxu0
      %v906 = vadd.f32 0.0, %v905
      %v907 = vpop.f32.mrb[0].mxu0
      %908 = vmatprep.mubr.f32.mxu0 0.0
      %909 = vmatmul.mubr.f32.gmra.mrb[0].mxu0 %v751
      %v910 = vpop.f32.mrb[0].mxu0
      %v911 = vadd.f32 0.0, %v910
      %v912 = vpop.f32.mrb[0].mxu0
      %913 = vdwg.mxu0
      %v914 = vld [vmem:[#allocation3] sm:$0xff]
      %v915 = vld [vmem:[#allocation3 + $0x8] sm:$0xff]
      %v916 = vld [vmem:[#allocation3 + $0x10] sm:$0xff]
      %v917 = vld [vmem:[#allocation3 + $0x18] sm:$0xff]
      %v918 = vld [vmem:[#allocation3 + $0x20] sm:$0xff]
      %v919 = vld [vmem:[#allocation3 + $0x28] sm:$0xff]
      %v920 = vld [vmem:[#allocation3 + $0x30] sm:$0xff]
      %v921 = vld [vmem:[#allocation3 + $0x38] sm:$0xff]
      %v922 = vld [vmem:[#allocation3 + $0x40] sm:$0xff]
      %v923 = vld [vmem:[#allocation3 + $0x48] sm:$0xff]
      %v924 = vld [vmem:[#allocation3 + $0x50] sm:$0xff]
      %v925 = vld [vmem:[#allocation3 + $0x58] sm:$0xff]
      %v926 = vld [vmem:[#allocation3 + $0x60] sm:$0xff]
      %v927 = vld [vmem:[#allocation3 + $0x68] sm:$0xff]
      %v928 = vld [vmem:[#allocation3 + $0x70] sm:$0xff]
      %v929 = vld [vmem:[#allocation3 + $0x78] sm:$0xff]
      %v930 = vadd.f32 %v914, %v836
      %v931 = vadd.f32 %v915, %v841
      %v932 = vadd.f32 %v916, %v846
      %v933 = vadd.f32 %v917, %v851
      %v934 = vadd.f32 %v918, %v856
      %v935 = vadd.f32 %v919, %v861
      %v936 = vadd.f32 %v920, %v866
      %v937 = vadd.f32 %v921, %v871
      %v938 = vadd.f32 %v922, %v876
      %v939 = vadd.f32 %v923, %v881
      %v940 = vadd.f32 %v924, %v886
      %v941 = vadd.f32 %v925, %v891
      %v942 = vadd.f32 %v926, %v896
      %v943 = vadd.f32 %v927, %v901
      %v944 = vadd.f32 %v928, %v906
      %v945 = vadd.f32 %v929, %v911
      %946 = vst [vmem:[#allocation3] sm:$0xff] %v930
      %947 = vst [vmem:[#allocation3 + $0x8] sm:$0xff] %v931
      %948 = vst [vmem:[#allocation3 + $0x10] sm:$0xff] %v932
      %949 = vst [vmem:[#allocation3 + $0x18] sm:$0xff] %v933
      %950 = vst [vmem:[#allocation3 + $0x20] sm:$0xff] %v934
      %951 = vst [vmem:[#allocation3 + $0x28] sm:$0xff] %v935
      %952 = vst [vmem:[#allocation3 + $0x30] sm:$0xff] %v936
      %953 = vst [vmem:[#allocation3 + $0x38] sm:$0xff] %v937
      %954 = vst [vmem:[#allocation3 + $0x40] sm:$0xff] %v938
      %955 = vst [vmem:[#allocation3 + $0x48] sm:$0xff] %v939
      %956 = vst [vmem:[#allocation3 + $0x50] sm:$0xff] %v940
      %957 = vst [vmem:[#allocation3 + $0x58] sm:$0xff] %v941
      %958 = vst [vmem:[#allocation3 + $0x60] sm:$0xff] %v942
      %959 = vst [vmem:[#allocation3 + $0x68] sm:$0xff] %v943
      %960 = vst [vmem:[#allocation3 + $0x70] sm:$0xff] %v944
      %961 = vst [vmem:[#allocation3 + $0x78] sm:$0xff] %v945
      %v962 = vld [vmem:[#allocation2 + $0x2] sm:$0xff]
      %v963 = vld [vmem:[#allocation2 + $0xa] sm:$0xff]
      %v964 = vld [vmem:[#allocation2 + $0x1a] sm:$0xff]
      %v965 = vld [vmem:[#allocation2 + $0x22] sm:$0xff]
      %v966 = vld [vmem:[#allocation2 + $0x32] sm:$0xff]
      %v967 = vld [vmem:[#allocation2 + $0x3a] sm:$0xff]
      %v968 = vld [vmem:[#allocation2 + $0x4a] sm:$0xff]
      %v969 = vld [vmem:[#allocation2 + $0x52] sm:$0xff]
      %v970 = vld [vmem:[#allocation2 + $0x62] sm:$0xff]
      %v971 = vld [vmem:[#allocation2 + $0x6a] sm:$0xff]
      %v972 = vld [vmem:[#allocation2 + $0x7a] sm:$0xff]
      %v973 = vld [vmem:[#allocation2 + $0x82] sm:$0xff]
      %v974 = vld [vmem:[#allocation2 + $0x92] sm:$0xff]
      %v975 = vld [vmem:[#allocation2 + $0x9a] sm:$0xff]
      %v976 = vld [vmem:[#allocation2 + $0xaa] sm:$0xff]
      %v977 = vld [vmem:[#allocation2 + $0xb2] sm:$0xff]
      %s978 = scalar_lea.vmem %s2, 256
      %v979 = vld [vmem:[%s978] sm:$0xff]
      %v980 = vld [vmem:[%s978 + $0x8] sm:$0xff]
      %v981 = vld [vmem:[%s978 + $0x10] sm:$0xff]
      %v982 = vld [vmem:[%s978 + $0x18] sm:$0xff]
      %v983 = vld [vmem:[%s978 + $0x20] sm:$0xff]
      %v984 = vld [vmem:[%s978 + $0x28] sm:$0xff]
      %v985 = vld [vmem:[%s978 + $0x30] sm:$0xff]
      %v986 = vld [vmem:[%s978 + $0x38] sm:$0xff]
      %v987 = vld [vmem:[%s978 + $0x40] sm:$0xff]
      %v988 = vld [vmem:[%s978 + $0x48] sm:$0xff]
      %v989 = vld [vmem:[%s978 + $0x50] sm:$0xff]
      %v990 = vld [vmem:[%s978 + $0x58] sm:$0xff]
      %v991 = vld [vmem:[%s978 + $0x60] sm:$0xff]
      %v992 = vld [vmem:[%s978 + $0x68] sm:$0xff]
      %v993 = vld [vmem:[%s978 + $0x70] sm:$0xff]
      %v994 = vld [vmem:[%s978 + $0x78] sm:$0xff]
      %995 = vmatprep.subr.mxu0 0.0
      %996 = vmatpush1.msra.mxu0 %v979
      %997 = vmatprep.subr.mxu0 0.0
      %998 = vmatpush1.msra.mxu0 %v980
      %999 = vmatprep.subr.mxu0 0.0
      %1000 = vmatpush1.msra.mxu0 %v981
      %1001 = vmatprep.subr.mxu0 0.0
      %1002 = vmatpush1.msra.mxu0 %v982
      %1003 = vmatprep.subr.mxu0 0.0
      %1004 = vmatpush1.msra.mxu0 %v983
      %1005 = vmatprep.subr.mxu0 0.0
      %1006 = vmatpush1.msra.mxu0 %v984
      %1007 = vmatprep.subr.mxu0 0.0
      %1008 = vmatpush1.msra.mxu0 %v985
      %1009 = vmatprep.subr.mxu0 0.0
      %1010 = vmatpush1.msra.mxu0 %v986
      %1011 = vmatprep.subr.mxu0 0.0
      %1012 = vmatpush1.msra.mxu0 %v987
      %1013 = vmatprep.subr.mxu0 0.0
      %1014 = vmatpush1.msra.mxu0 %v988
      %1015 = vmatprep.subr.mxu0 0.0
      %1016 = vmatpush1.msra.mxu0 %v989
      %1017 = vmatprep.subr.mxu0 0.0
      %1018 = vmatpush1.msra.mxu0 %v990
      %1019 = vmatprep.subr.mxu0 0.0
      %1020 = vmatpush1.msra.mxu0 %v991
      %1021 = vmatprep.subr.mxu0 0.0
      %1022 = vmatpush1.msra.mxu0 %v992
      %1023 = vmatprep.subr.mxu0 0.0
      %1024 = vmatpush1.msra.mxu0 %v993
      %1025 = vmatprep.subr.mxu0 0.0
      %1026 = vmatpush1.msra.mxu0 %v994
      %1027 = vmatprep.subr.mxu0 0.0
      %1028 = vmatpush1.msra.mxu0 0.0
      %1029 = vmatprep.subr.mxu0 0.0
      %1030 = vmatpush1.msra.mxu0 0.0
      %1031 = vmatprep.subr.mxu0 0.0
      %1032 = vmatpush1.msra.mxu0 0.0
      %1033 = vmatprep.subr.mxu0 0.0
      %1034 = vmatpush1.msra.mxu0 0.0
      %1035 = vmatprep.subr.mxu0 0.0
      %1036 = vmatpush1.msra.mxu0 0.0
      %1037 = vmatprep.subr.mxu0 0.0
      %1038 = vmatpush1.msra.mxu0 0.0
      %1039 = vmatprep.subr.mxu0 0.0
      %1040 = vmatpush1.msra.mxu0 0.0
      %1041 = vmatprep.subr.mxu0 0.0
      %1042 = vmatpush1.msra.mxu0 0.0
      %1043 = vmatprep.subr.mxu0 0.0
      %1044 = vmatpush1.msra.mxu0 0.0
      %1045 = vmatprep.subr.mxu0 0.0
      %1046 = vmatpush1.msra.mxu0 0.0
      %1047 = vmatprep.subr.mxu0 0.0
      %1048 = vmatpush1.msra.mxu0 0.0
      %1049 = vmatprep.subr.mxu0 0.0
      %1050 = vmatpush1.msra.mxu0 0.0
      %1051 = vmatprep.subr.mxu0 0.0
      %1052 = vmatpush1.msra.mxu0 0.0
      %1053 = vmatprep.subr.mxu0 0.0
      %1054 = vmatpush1.msra.mxu0 0.0
      %1055 = vmatprep.subr.mxu0 0.0
      %1056 = vmatpush1.msra.mxu0 0.0
      %1057 = vmatprep.subr.mxu0 0.0
      %1058 = vmatpush1.msra.mxu0 0.0
      %1059 = vmatprep.mubr.f32.mxu0 0.0
      %1060 = vmatmul.mubr.f32.gmra.mrb[0].mxu0 %v962
      %v1061 = vpop.f32.mrb[0].mxu0
      %v1062 = vadd.f32 0.0, %v1061
      %v1063 = vpop.f32.mrb[0].mxu0
      %1064 = vmatprep.mubr.f32.mxu0 0.0
      %1065 = vmatmul.mubr.f32.gmra.mrb[0].mxu0 %v963
      %v1066 = vpop.f32.mrb[0].mxu0
      %v1067 = vadd.f32 0.0, %v1066
      %v1068 = vpop.f32.mrb[0].mxu0
      %1069 = vmatprep.mubr.f32.mxu0 0.0
      %1070 = vmatmul.mubr.f32.gmra.mrb[0].mxu0 %v964
      %v1071 = vpop.f32.mrb[0].mxu0
      %v1072 = vadd.f32 0.0, %v1071
      %v1073 = vpop.f32.mrb[0].mxu0
      %1074 = vmatprep.mubr.f32.mxu0 0.0
      %1075 = vmatmul.mubr.f32.gmra.mrb[0].mxu0 %v965
      %v1076 = vpop.f32.mrb[0].mxu0
      %v1077 = vadd.f32 0.0, %v1076
      %v1078 = vpop.f32.mrb[0].mxu0
      %1079 = vmatprep.mubr.f32.mxu0 0.0
      %1080 = vmatmul.mubr.f32.gmra.mrb[0].mxu0 %v966
      %v1081 = vpop.f32.mrb[0].mxu0
      %v1082 = vadd.f32 0.0, %v1081
      %v1083 = vpop.f32.mrb[0].mxu0
      %1084 = vmatprep.mubr.f32.mxu0 0.0
      %1085 = vmatmul.mubr.f32.gmra.mrb[0].mxu0 %v967
      %v1086 = vpop.f32.mrb[0].mxu0
      %v1087 = vadd.f32 0.0, %v1086
      %v1088 = vpop.f32.mrb[0].mxu0
      %1089 = vmatprep.mubr.f32.mxu0 0.0
      %1090 = vmatmul.mubr.f32.gmra.mrb[0].mxu0 %v968
      %v1091 = vpop.f32.mrb[0].mxu0
      %v1092 = vadd.f32 0.0, %v1091
      %v1093 = vpop.f32.mrb[0].mxu0
      %1094 = vmatprep.mubr.f32.mxu0 0.0
      %1095 = vmatmul.mubr.f32.gmra.mrb[0].mxu0 %v969
      %v1096 = vpop.f32.mrb[0].mxu0
      %v1097 = vadd.f32 0.0, %v1096
      %v1098 = vpop.f32.mrb[0].mxu0
      %1099 = vmatprep.mubr.f32.mxu0 0.0
      %1100 = vmatmul.mubr.f32.gmra.mrb[0].mxu0 %v970
      %v1101 = vpop.f32.mrb[0].mxu0
      %v1102 = vadd.f32 0.0, %v1101
      %v1103 = vpop.f32.mrb[0].mxu0
      %1104 = vmatprep.mubr.f32.mxu0 0.0
      %1105 = vmatmul.mubr.f32.gmra.mrb[0].mxu0 %v971
      %v1106 = vpop.f32.mrb[0].mxu0
      %v1107 = vadd.f32 0.0, %v1106
      %v1108 = vpop.f32.mrb[0].mxu0
      %1109 = vmatprep.mubr.f32.mxu0 0.0
      %1110 = vmatmul.mubr.f32.gmra.mrb[0].mxu0 %v972
      %v1111 = vpop.f32.mrb[0].mxu0
      %v1112 = vadd.f32 0.0, %v1111
      %v1113 = vpop.f32.mrb[0].mxu0
      %1114 = vmatprep.mubr.f32.mxu0 0.0
      %1115 = vmatmul.mubr.f32.gmra.mrb[0].mxu0 %v973
      %v1116 = vpop.f32.mrb[0].mxu0
      %v1117 = vadd.f32 0.0, %v1116
      %v1118 = vpop.f32.mrb[0].mxu0
      %1119 = vmatprep.mubr.f32.mxu0 0.0
      %1120 = vmatmul.mubr.f32.gmra.mrb[0].mxu0 %v974
      %v1121 = vpop.f32.mrb[0].mxu0
      %v1122 = vadd.f32 0.0, %v1121
      %v1123 = vpop.f32.mrb[0].mxu0
      %1124 = vmatprep.mubr.f32.mxu0 0.0
      %1125 = vmatmul.mubr.f32.gmra.mrb[0].mxu0 %v975
      %v1126 = vpop.f32.mrb[0].mxu0
      %v1127 = vadd.f32 0.0, %v1126
      %v1128 = vpop.f32.mrb[0].mxu0
      %1129 = vmatprep.mubr.f32.mxu0 0.0
      %1130 = vmatmul.mubr.f32.gmra.mrb[0].mxu0 %v976
      %v1131 = vpop.f32.mrb[0].mxu0
      %v1132 = vadd.f32 0.0, %v1131
      %v1133 = vpop.f32.mrb[0].mxu0
      %1134 = vmatprep.mubr.f32.mxu0 0.0
      %1135 = vmatmul.mubr.f32.gmra.mrb[0].mxu0 %v977
      %v1136 = vpop.f32.mrb[0].mxu0
      %v1137 = vadd.f32 0.0, %v1136
      %v1138 = vpop.f32.mrb[0].mxu0
      %1139 = vdwg.mxu0
      %v1140 = vld [vmem:[#allocation3] sm:$0xff]
      %v1141 = vld [vmem:[#allocation3 + $0x8] sm:$0xff]
      %v1142 = vld [vmem:[#allocation3 + $0x10] sm:$0xff]
      %v1143 = vld [vmem:[#allocation3 + $0x18] sm:$0xff]
      %v1144 = vld [vmem:[#allocation3 + $0x20] sm:$0xff]
      %v1145 = vld [vmem:[#allocation3 + $0x28] sm:$0xff]
      %v1146 = vld [vmem:[#allocation3 + $0x30] sm:$0xff]
      %v1147 = vld [vmem:[#allocation3 + $0x38] sm:$0xff]
      %v1148 = vld [vmem:[#allocation3 + $0x40] sm:$0xff]
      %v1149 = vld [vmem:[#allocation3 + $0x48] sm:$0xff]
      %v1150 = vld [vmem:[#allocation3 + $0x50] sm:$0xff]
      %v1151 = vld [vmem:[#allocation3 + $0x58] sm:$0xff]
      %v1152 = vld [vmem:[#allocation3 + $0x60] sm:$0xff]
      %v1153 = vld [vmem:[#allocation3 + $0x68] sm:$0xff]
      %v1154 = vld [vmem:[#allocation3 + $0x70] sm:$0xff]
      %v1155 = vld [vmem:[#allocation3 + $0x78] sm:$0xff]
      %v1156 = vadd.f32 %v1140, %v1062
      %v1157 = vadd.f32 %v1141, %v1067
      %v1158 = vadd.f32 %v1142, %v1072
      %v1159 = vadd.f32 %v1143, %v1077
      %v1160 = vadd.f32 %v1144, %v1082
      %v1161 = vadd.f32 %v1145, %v1087
      %v1162 = vadd.f32 %v1146, %v1092
      %v1163 = vadd.f32 %v1147, %v1097
      %v1164 = vadd.f32 %v1148, %v1102
      %v1165 = vadd.f32 %v1149, %v1107
      %v1166 = vadd.f32 %v1150, %v1112
      %v1167 = vadd.f32 %v1151, %v1117
      %v1168 = vadd.f32 %v1152, %v1122
      %v1169 = vadd.f32 %v1153, %v1127
      %v1170 = vadd.f32 %v1154, %v1132
      %v1171 = vadd.f32 %v1155, %v1137
      %1172 = vst [vmem:[#allocation3] sm:$0xff] %v1156
      %1173 = vst [vmem:[#allocation3 + $0x8] sm:$0xff] %v1157
      %1174 = vst [vmem:[#allocation3 + $0x10] sm:$0xff] %v1158
      %1175 = vst [vmem:[#allocation3 + $0x18] sm:$0xff] %v1159
      %1176 = vst [vmem:[#allocation3 + $0x20] sm:$0xff] %v1160
      %1177 = vst [vmem:[#allocation3 + $0x28] sm:$0xff] %v1161
      %1178 = vst [vmem:[#allocation3 + $0x30] sm:$0xff] %v1162
      %1179 = vst [vmem:[#allocation3 + $0x38] sm:$0xff] %v1163
      %1180 = vst [vmem:[#allocation3 + $0x40] sm:$0xff] %v1164
      %1181 = vst [vmem:[#allocation3 + $0x48] sm:$0xff] %v1165
      %1182 = vst [vmem:[#allocation3 + $0x50] sm:$0xff] %v1166
      %1183 = vst [vmem:[#allocation3 + $0x58] sm:$0xff] %v1167
      %1184 = vst [vmem:[#allocation3 + $0x60] sm:$0xff] %v1168
      %1185 = vst [vmem:[#allocation3 + $0x68] sm:$0xff] %v1169
      %1186 = vst [vmem:[#allocation3 + $0x70] sm:$0xff] %v1170
      %1187 = vst [vmem:[#allocation3 + $0x78] sm:$0xff] %v1171
      %s1188 = scalar_lea.vmem [#allocation2], 24
      %v1189 = vld [vmem:[%s1188] sm:$0xff]
      %v1190 = vld [vmem:[%s1188 + $0x8] sm:$0xff]
      %v1191 = vld [vmem:[%s1188 + $0x18] sm:$0xff]
      %v1192 = vld [vmem:[%s1188 + $0x20] sm:$0xff]
      %v1193 = vld [vmem:[%s1188 + $0x30] sm:$0xff]
      %v1194 = vld [vmem:[%s1188 + $0x38] sm:$0xff]
      %v1195 = vld [vmem:[%s1188 + $0x48] sm:$0xff]
      %v1196 = vld [vmem:[%s1188 + $0x50] sm:$0xff]
      %v1197 = vld [vmem:[%s1188 + $0x60] sm:$0xff]
      %v1198 = vld [vmem:[%s1188 + $0x68] sm:$0xff]
      %v1199 = vld [vmem:[%s1188 + $0x78] sm:$0xff]
      %v1200 = vld [vmem:[%s1188 + $0x80] sm:$0xff]
      %v1201 = vld [vmem:[%s1188 + $0x90] sm:$0xff]
      %v1202 = vld [vmem:[%s1188 + $0x98] sm:$0xff]
      %v1203 = vld [vmem:[%s1188 + $0xa8] sm:$0xff]
      %v1204 = vld [vmem:[%s1188 + $0xb0] sm:$0xff]
      %s1205 = scalar_lea.vmem %s2, 384
      %v1206 = vld [vmem:[%s1205] sm:$0xff]
      %v1207 = vld [vmem:[%s1205 + $0x8] sm:$0xff]
      %v1208 = vld [vmem:[%s1205 + $0x10] sm:$0xff]
      %v1209 = vld [vmem:[%s1205 + $0x18] sm:$0xff]
      %v1210 = vld [vmem:[%s1205 + $0x20] sm:$0xff]
      %v1211 = vld [vmem:[%s1205 + $0x28] sm:$0xff]
      %v1212 = vld [vmem:[%s1205 + $0x30] sm:$0xff]
      %v1213 = vld [vmem:[%s1205 + $0x38] sm:$0xff]
      %v1214 = vld [vmem:[%s1205 + $0x40] sm:$0xff]
      %v1215 = vld [vmem:[%s1205 + $0x48] sm:$0xff]
      %v1216 = vld [vmem:[%s1205 + $0x50] sm:$0xff]
      %v1217 = vld [vmem:[%s1205 + $0x58] sm:$0xff]
      %v1218 = vld [vmem:[%s1205 + $0x60] sm:$0xff]
      %v1219 = vld [vmem:[%s1205 + $0x68] sm:$0xff]
      %v1220 = vld [vmem:[%s1205 + $0x70] sm:$0xff]
      %v1221 = vld [vmem:[%s1205 + $0x78] sm:$0xff]
      %1222 = vmatprep.subr.mxu0 0.0
      %1223 = vmatpush1.msra.mxu0 %v1206
      %1224 = vmatprep.subr.mxu0 0.0
      %1225 = vmatpush1.msra.mxu0 %v1207
      %1226 = vmatprep.subr.mxu0 0.0
      %1227 = vmatpush1.msra.mxu0 %v1208
      %1228 = vmatprep.subr.mxu0 0.0
      %1229 = vmatpush1.msra.mxu0 %v1209
      %1230 = vmatprep.subr.mxu0 0.0
      %1231 = vmatpush1.msra.mxu0 %v1210
      %1232 = vmatprep.subr.mxu0 0.0
      %1233 = vmatpush1.msra.mxu0 %v1211
      %1234 = vmatprep.subr.mxu0 0.0
      %1235 = vmatpush1.msra.mxu0 %v1212
      %1236 = vmatprep.subr.mxu0 0.0
      %1237 = vmatpush1.msra.mxu0 %v1213
      %1238 = vmatprep.subr.mxu0 0.0
      %1239 = vmatpush1.msra.mxu0 %v1214
      %1240 = vmatprep.subr.mxu0 0.0
      %1241 = vmatpush1.msra.mxu0 %v1215
      %1242 = vmatprep.subr.mxu0 0.0
      %1243 = vmatpush1.msra.mxu0 %v1216
      %1244 = vmatprep.subr.mxu0 0.0
      %1245 = vmatpush1.msra.mxu0 %v1217
      %1246 = vmatprep.subr.mxu0 0.0
      %1247 = vmatpush1.msra.mxu0 %v1218
      %1248 = vmatprep.subr.mxu0 0.0
      %1249 = vmatpush1.msra.mxu0 %v1219
      %1250 = vmatprep.subr.mxu0 0.0
      %1251 = vmatpush1.msra.mxu0 %v1220
      %1252 = vmatprep.subr.mxu0 0.0
      %1253 = vmatpush1.msra.mxu0 %v1221
      %1254 = vmatprep.subr.mxu0 0.0
      %1255 = vmatpush1.msra.mxu0 0.0
      %1256 = vmatprep.subr.mxu0 0.0
      %1257 = vmatpush1.msra.mxu0 0.0
      %1258 = vmatprep.subr.mxu0 0.0
      %1259 = vmatpush1.msra.mxu0 0.0
      %1260 = vmatprep.subr.mxu0 0.0
      %1261 = vmatpush1.msra.mxu0 0.0
      %1262 = vmatprep.subr.mxu0 0.0
      %1263 = vmatpush1.msra.mxu0 0.0
      %1264 = vmatprep.subr.mxu0 0.0
      %1265 = vmatpush1.msra.mxu0 0.0
      %1266 = vmatprep.subr.mxu0 0.0
      %1267 = vmatpush1.msra.mxu0 0.0
      %1268 = vmatprep.subr.mxu0 0.0
      %1269 = vmatpush1.msra.mxu0 0.0
      %1270 = vmatprep.subr.mxu0 0.0
      %1271 = vmatpush1.msra.mxu0 0.0
      %1272 = vmatprep.subr.mxu0 0.0
      %1273 = vmatpush1.msra.mxu0 0.0
      %1274 = vmatprep.subr.mxu0 0.0
      %1275 = vmatpush1.msra.mxu0 0.0
      %1276 = vmatprep.subr.mxu0 0.0
      %1277 = vmatpush1.msra.mxu0 0.0
      %1278 = vmatprep.subr.mxu0 0.0
      %1279 = vmatpush1.msra.mxu0 0.0
      %1280 = vmatprep.subr.mxu0 0.0
      %1281 = vmatpush1.msra.mxu0 0.0
      %1282 = vmatprep.subr.mxu0 0.0
      %1283 = vmatpush1.msra.mxu0 0.0
      %1284 = vmatprep.subr.mxu0 0.0
      %1285 = vmatpush1.msra.mxu0 0.0
      %1286 = vmatprep.mubr.f32.mxu0 0.0
      %1287 = vmatmul.mubr.f32.gmra.mrb[0].mxu0 %v1189
      %v1288 = vpop.f32.mrb[0].mxu0
      %v1289 = vadd.f32 0.0, %v1288
      %v1290 = vpop.f32.mrb[0].mxu0
      %1291 = vmatprep.mubr.f32.mxu0 0.0
      %1292 = vmatmul.mubr.f32.gmra.mrb[0].mxu0 %v1190
      %v1293 = vpop.f32.mrb[0].mxu0
      %v1294 = vadd.f32 0.0, %v1293
      %v1295 = vpop.f32.mrb[0].mxu0
      %1296 = vmatprep.mubr.f32.mxu0 0.0
      %1297 = vmatmul.mubr.f32.gmra.mrb[0].mxu0 %v1191
      %v1298 = vpop.f32.mrb[0].mxu0
      %v1299 = vadd.f32 0.0, %v1298
      %v1300 = vpop.f32.mrb[0].mxu0
      %1301 = vmatprep.mubr.f32.mxu0 0.0
      %1302 = vmatmul.mubr.f32.gmra.mrb[0].mxu0 %v1192
      %v1303 = vpop.f32.mrb[0].mxu0
      %v1304 = vadd.f32 0.0, %v1303
      %v1305 = vpop.f32.mrb[0].mxu0
      %1306 = vmatprep.mubr.f32.mxu0 0.0
      %1307 = vmatmul.mubr.f32.gmra.mrb[0].mxu0 %v1193
      %v1308 = vpop.f32.mrb[0].mxu0
      %v1309 = vadd.f32 0.0, %v1308
      %v1310 = vpop.f32.mrb[0].mxu0
      %1311 = vmatprep.mubr.f32.mxu0 0.0
      %1312 = vmatmul.mubr.f32.gmra.mrb[0].mxu0 %v1194
      %v1313 = vpop.f32.mrb[0].mxu0
      %v1314 = vadd.f32 0.0, %v1313
      %v1315 = vpop.f32.mrb[0].mxu0
      %1316 = vmatprep.mubr.f32.mxu0 0.0
      %1317 = vmatmul.mubr.f32.gmra.mrb[0].mxu0 %v1195
      %v1318 = vpop.f32.mrb[0].mxu0
      %v1319 = vadd.f32 0.0, %v1318
      %v1320 = vpop.f32.mrb[0].mxu0
      %1321 = vmatprep.mubr.f32.mxu0 0.0
      %1322 = vmatmul.mubr.f32.gmra.mrb[0].mxu0 %v1196
      %v1323 = vpop.f32.mrb[0].mxu0
      %v1324 = vadd.f32 0.0, %v1323
      %v1325 = vpop.f32.mrb[0].mxu0
      %1326 = vmatprep.mubr.f32.mxu0 0.0
      %1327 = vmatmul.mubr.f32.gmra.mrb[0].mxu0 %v1197
      %v1328 = vpop.f32.mrb[0].mxu0
      %v1329 = vadd.f32 0.0, %v1328
      %v1330 = vpop.f32.mrb[0].mxu0
      %1331 = vmatprep.mubr.f32.mxu0 0.0
      %1332 = vmatmul.mubr.f32.gmra.mrb[0].mxu0 %v1198
      %v1333 = vpop.f32.mrb[0].mxu0
      %v1334 = vadd.f32 0.0, %v1333
      %v1335 = vpop.f32.mrb[0].mxu0
      %1336 = vmatprep.mubr.f32.mxu0 0.0
      %1337 = vmatmul.mubr.f32.gmra.mrb[0].mxu0 %v1199
      %v1338 = vpop.f32.mrb[0].mxu0
      %v1339 = vadd.f32 0.0, %v1338
      %v1340 = vpop.f32.mrb[0].mxu0
      %1341 = vmatprep.mubr.f32.mxu0 0.0
      %1342 = vmatmul.mubr.f32.gmra.mrb[0].mxu0 %v1200
      %v1343 = vpop.f32.mrb[0].mxu0
      %v1344 = vadd.f32 0.0, %v1343
      %v1345 = vpop.f32.mrb[0].mxu0
      %1346 = vmatprep.mubr.f32.mxu0 0.0
      %1347 = vmatmul.mubr.f32.gmra.mrb[0].mxu0 %v1201
      %v1348 = vpop.f32.mrb[0].mxu0
      %v1349 = vadd.f32 0.0, %v1348
      %v1350 = vpop.f32.mrb[0].mxu0
      %1351 = vmatprep.mubr.f32.mxu0 0.0
      %1352 = vmatmul.mubr.f32.gmra.mrb[0].mxu0 %v1202
      %v1353 = vpop.f32.mrb[0].mxu0
      %v1354 = vadd.f32 0.0, %v1353
      %v1355 = vpop.f32.mrb[0].mxu0
      %1356 = vmatprep.mubr.f32.mxu0 0.0
      %1357 = vmatmul.mubr.f32.gmra.mrb[0].mxu0 %v1203
      %v1358 = vpop.f32.mrb[0].mxu0
      %v1359 = vadd.f32 0.0, %v1358
      %v1360 = vpop.f32.mrb[0].mxu0
      %1361 = vmatprep.mubr.f32.mxu0 0.0
      %1362 = vmatmul.mubr.f32.gmra.mrb[0].mxu0 %v1204
      %v1363 = vpop.f32.mrb[0].mxu0
      %v1364 = vadd.f32 0.0, %v1363
      %v1365 = vpop.f32.mrb[0].mxu0
      %1366 = vdwg.mxu0
      %v1367 = vld [vmem:[#allocation3] sm:$0xff]
      %v1368 = vld [vmem:[#allocation3 + $0x8] sm:$0xff]
      %v1369 = vld [vmem:[#allocation3 + $0x10] sm:$0xff]
      %v1370 = vld [vmem:[#allocation3 + $0x18] sm:$0xff]
      %v1371 = vld [vmem:[#allocation3 + $0x20] sm:$0xff]
      %v1372 = vld [vmem:[#allocation3 + $0x28] sm:$0xff]
      %v1373 = vld [vmem:[#allocation3 + $0x30] sm:$0xff]
      %v1374 = vld [vmem:[#allocation3 + $0x38] sm:$0xff]
      %v1375 = vld [vmem:[#allocation3 + $0x40] sm:$0xff]
      %v1376 = vld [vmem:[#allocation3 + $0x48] sm:$0xff]
      %v1377 = vld [vmem:[#allocation3 + $0x50] sm:$0xff]
      %v1378 = vld [vmem:[#allocation3 + $0x58] sm:$0xff]
      %v1379 = vld [vmem:[#allocation3 + $0x60] sm:$0xff]
      %v1380 = vld [vmem:[#allocation3 + $0x68] sm:$0xff]
      %v1381 = vld [vmem:[#allocation3 + $0x70] sm:$0xff]
      %v1382 = vld [vmem:[#allocation3 + $0x78] sm:$0xff]
      %v1383 = vadd.f32 %v1367, %v1289
      %v1384 = vadd.f32 %v1368, %v1294
      %v1385 = vadd.f32 %v1369, %v1299
      %v1386 = vadd.f32 %v1370, %v1304
      %v1387 = vadd.f32 %v1371, %v1309
      %v1388 = vadd.f32 %v1372, %v1314
      %v1389 = vadd.f32 %v1373, %v1319
      %v1390 = vadd.f32 %v1374, %v1324
      %v1391 = vadd.f32 %v1375, %v1329
      %v1392 = vadd.f32 %v1376, %v1334
      %v1393 = vadd.f32 %v1377, %v1339
      %v1394 = vadd.f32 %v1378, %v1344
      %v1395 = vadd.f32 %v1379, %v1349
      %v1396 = vadd.f32 %v1380, %v1354
      %v1397 = vadd.f32 %v1381, %v1359
      %v1398 = vadd.f32 %v1382, %v1364
      %1399 = vst [vmem:[#allocation3] sm:$0xff] %v1383
      %1400 = vst [vmem:[#allocation3 + $0x8] sm:$0xff] %v1384
      %1401 = vst [vmem:[#allocation3 + $0x10] sm:$0xff] %v1385
      %1402 = vst [vmem:[#allocation3 + $0x18] sm:$0xff] %v1386
      %1403 = vst [vmem:[#allocation3 + $0x20] sm:$0xff] %v1387
      %1404 = vst [vmem:[#allocation3 + $0x28] sm:$0xff] %v1388
      %1405 = vst [vmem:[#allocation3 + $0x30] sm:$0xff] %v1389
      %1406 = vst [vmem:[#allocation3 + $0x38] sm:$0xff] %v1390
      %1407 = vst [vmem:[#allocation3 + $0x40] sm:$0xff] %v1391
      %1408 = vst [vmem:[#allocation3 + $0x48] sm:$0xff] %v1392
      %1409 = vst [vmem:[#allocation3 + $0x50] sm:$0xff] %v1393
      %1410 = vst [vmem:[#allocation3 + $0x58] sm:$0xff] %v1394
      %1411 = vst [vmem:[#allocation3 + $0x60] sm:$0xff] %v1395
      %1412 = vst [vmem:[#allocation3 + $0x68] sm:$0xff] %v1396
      %1413 = vst [vmem:[#allocation3 + $0x70] sm:$0xff] %v1397
      %1414 = vst [vmem:[#allocation3 + $0x78] sm:$0xff] %v1398
      %v1415 = vld [vmem:[%s1188 + $0x1] sm:$0xff]
      %v1416 = vld [vmem:[%s1188 + $0x9] sm:$0xff]
      %v1417 = vld [vmem:[%s1188 + $0x19] sm:$0xff]
      %v1418 = vld [vmem:[%s1188 + $0x21] sm:$0xff]
      %v1419 = vld [vmem:[%s1188 + $0x31] sm:$0xff]
      %v1420 = vld [vmem:[%s1188 + $0x39] sm:$0xff]
      %v1421 = vld [vmem:[%s1188 + $0x49] sm:$0xff]
      %v1422 = vld [vmem:[%s1188 + $0x51] sm:$0xff]
      %v1423 = vld [vmem:[%s1188 + $0x61] sm:$0xff]
      %v1424 = vld [vmem:[%s1188 + $0x69] sm:$0xff]
      %v1425 = vld [vmem:[%s1188 + $0x79] sm:$0xff]
      %v1426 = vld [vmem:[%s1188 + $0x81] sm:$0xff]
      %v1427 = vld [vmem:[%s1188 + $0x91] sm:$0xff]
      %v1428 = vld [vmem:[%s1188 + $0x99] sm:$0xff]
      %v1429 = vld [vmem:[%s1188 + $0xa9] sm:$0xff]
      %v1430 = vld [vmem:[%s1188 + $0xb1] sm:$0xff]
      %s1431 = scalar_lea.vmem %s2, 512
      %v1432 = vld [vmem:[%s1431] sm:$0xff]
      %v1433 = vld [vmem:[%s1431 + $0x8] sm:$0xff]
      %v1434 = vld [vmem:[%s1431 + $0x10] sm:$0xff]
      %v1435 = vld [vmem:[%s1431 + $0x18] sm:$0xff]
      %v1436 = vld [vmem:[%s1431 + $0x20] sm:$0xff]
      %v1437 = vld [vmem:[%s1431 + $0x28] sm:$0xff]
      %v1438 = vld [vmem:[%s1431 + $0x30] sm:$0xff]
      %v1439 = vld [vmem:[%s1431 + $0x38] sm:$0xff]
      %v1440 = vld [vmem:[%s1431 + $0x40] sm:$0xff]
      %v1441 = vld [vmem:[%s1431 + $0x48] sm:$0xff]
      %v1442 = vld [vmem:[%s1431 + $0x50] sm:$0xff]
      %v1443 = vld [vmem:[%s1431 + $0x58] sm:$0xff]
      %v1444 = vld [vmem:[%s1431 + $0x60] sm:$0xff]
      %v1445 = vld [vmem:[%s1431 + $0x68] sm:$0xff]
      %v1446 = vld [vmem:[%s1431 + $0x70] sm:$0xff]
      %v1447 = vld [vmem:[%s1431 + $0x78] sm:$0xff]
      %1448 = vmatprep.subr.mxu0 0.0
      %1449 = vmatpush1.msra.mxu0 %v1432
      %1450 = vmatprep.subr.mxu0 0.0
      %1451 = vmatpush1.msra.mxu0 %v1433
      %1452 = vmatprep.subr.mxu0 0.0
      %1453 = vmatpush1.msra.mxu0 %v1434
      %1454 = vmatprep.subr.mxu0 0.0
      %1455 = vmatpush1.msra.mxu0 %v1435
      %1456 = vmatprep.subr.mxu0 0.0
      %1457 = vmatpush1.msra.mxu0 %v1436
      %1458 = vmatprep.subr.mxu0 0.0
      %1459 = vmatpush1.msra.mxu0 %v1437
      %1460 = vmatprep.subr.mxu0 0.0
      %1461 = vmatpush1.msra.mxu0 %v1438
      %1462 = vmatprep.subr.mxu0 0.0
      %1463 = vmatpush1.msra.mxu0 %v1439
      %1464 = vmatprep.subr.mxu0 0.0
      %1465 = vmatpush1.msra.mxu0 %v1440
      %1466 = vmatprep.subr.mxu0 0.0
      %1467 = vmatpush1.msra.mxu0 %v1441
      %1468 = vmatprep.subr.mxu0 0.0
      %1469 = vmatpush1.msra.mxu0 %v1442
      %1470 = vmatprep.subr.mxu0 0.0
      %1471 = vmatpush1.msra.mxu0 %v1443
      %1472 = vmatprep.subr.mxu0 0.0
      %1473 = vmatpush1.msra.mxu0 %v1444
      %1474 = vmatprep.subr.mxu0 0.0
      %1475 = vmatpush1.msra.mxu0 %v1445
      %1476 = vmatprep.subr.mxu0 0.0
      %1477 = vmatpush1.msra.mxu0 %v1446
      %1478 = vmatprep.subr.mxu0 0.0
      %1479 = vmatpush1.msra.mxu0 %v1447
      %1480 = vmatprep.subr.mxu0 0.0
      %1481 = vmatpush1.msra.mxu0 0.0
      %1482 = vmatprep.subr.mxu0 0.0
      %1483 = vmatpush1.msra.mxu0 0.0
      %1484 = vmatprep.subr.mxu0 0.0
      %1485 = vmatpush1.msra.mxu0 0.0
      %1486 = vmatprep.subr.mxu0 0.0
      %1487 = vmatpush1.msra.mxu0 0.0
      %1488 = vmatprep.subr.mxu0 0.0
      %1489 = vmatpush1.msra.mxu0 0.0
      %1490 = vmatprep.subr.mxu0 0.0
      %1491 = vmatpush1.msra.mxu0 0.0
      %1492 = vmatprep.subr.mxu0 0.0
      %1493 = vmatpush1.msra.mxu0 0.0
      %1494 = vmatprep.subr.mxu0 0.0
      %1495 = vmatpush1.msra.mxu0 0.0
      %1496 = vmatprep.subr.mxu0 0.0
      %1497 = vmatpush1.msra.mxu0 0.0
      %1498 = vmatprep.subr.mxu0 0.0
      %1499 = vmatpush1.msra.mxu0 0.0
      %1500 = vmatprep.subr.mxu0 0.0
      %1501 = vmatpush1.msra.mxu0 0.0
      %1502 = vmatprep.subr.mxu0 0.0
      %1503 = vmatpush1.msra.mxu0 0.0
      %1504 = vmatprep.subr.mxu0 0.0
      %1505 = vmatpush1.msra.mxu0 0.0
      %1506 = vmatprep.subr.mxu0 0.0
      %1507 = vmatpush1.msra.mxu0 0.0
      %1508 = vmatprep.subr.mxu0 0.0
      %1509 = vmatpush1.msra.mxu0 0.0
      %1510 = vmatprep.subr.mxu0 0.0
      %1511 = vmatpush1.msra.mxu0 0.0
      %1512 = vmatprep.mubr.f32.mxu0 0.0
      %1513 = vmatmul.mubr.f32.gmra.mrb[0].mxu0 %v1415
      %v1514 = vpop.f32.mrb[0].mxu0
      %v1515 = vadd.f32 0.0, %v1514
      %v1516 = vpop.f32.mrb[0].mxu0
      %1517 = vmatprep.mubr.f32.mxu0 0.0
      %1518 = vmatmul.mubr.f32.gmra.mrb[0].mxu0 %v1416
      %v1519 = vpop.f32.mrb[0].mxu0
      %v1520 = vadd.f32 0.0, %v1519
      %v1521 = vpop.f32.mrb[0].mxu0
      %1522 = vmatprep.mubr.f32.mxu0 0.0
      %1523 = vmatmul.mubr.f32.gmra.mrb[0].mxu0 %v1417
      %v1524 = vpop.f32.mrb[0].mxu0
      %v1525 = vadd.f32 0.0, %v1524
      %v1526 = vpop.f32.mrb[0].mxu0
      %1527 = vmatprep.mubr.f32.mxu0 0.0
      %1528 = vmatmul.mubr.f32.gmra.mrb[0].mxu0 %v1418
      %v1529 = vpop.f32.mrb[0].mxu0
      %v1530 = vadd.f32 0.0, %v1529
      %v1531 = vpop.f32.mrb[0].mxu0
      %1532 = vmatprep.mubr.f32.mxu0 0.0
      %1533 = vmatmul.mubr.f32.gmra.mrb[0].mxu0 %v1419
      %v1534 = vpop.f32.mrb[0].mxu0
      %v1535 = vadd.f32 0.0, %v1534
      %v1536 = vpop.f32.mrb[0].mxu0
      %1537 = vmatprep.mubr.f32.mxu0 0.0
      %1538 = vmatmul.mubr.f32.gmra.mrb[0].mxu0 %v1420
      %v1539 = vpop.f32.mrb[0].mxu0
      %v1540 = vadd.f32 0.0, %v1539
      %v1541 = vpop.f32.mrb[0].mxu0
      %1542 = vmatprep.mubr.f32.mxu0 0.0
      %1543 = vmatmul.mubr.f32.gmra.mrb[0].mxu0 %v1421
      %v1544 = vpop.f32.mrb[0].mxu0
      %v1545 = vadd.f32 0.0, %v1544
      %v1546 = vpop.f32.mrb[0].mxu0
      %1547 = vmatprep.mubr.f32.mxu0 0.0
      %1548 = vmatmul.mubr.f32.gmra.mrb[0].mxu0 %v1422
      %v1549 = vpop.f32.mrb[0].mxu0
      %v1550 = vadd.f32 0.0, %v1549
      %v1551 = vpop.f32.mrb[0].mxu0
      %1552 = vmatprep.mubr.f32.mxu0 0.0
      %1553 = vmatmul.mubr.f32.gmra.mrb[0].mxu0 %v1423
      %v1554 = vpop.f32.mrb[0].mxu0
      %v1555 = vadd.f32 0.0, %v1554
      %v1556 = vpop.f32.mrb[0].mxu0
      %1557 = vmatprep.mubr.f32.mxu0 0.0
      %1558 = vmatmul.mubr.f32.gmra.mrb[0].mxu0 %v1424
      %v1559 = vpop.f32.mrb[0].mxu0
      %v1560 = vadd.f32 0.0, %v1559
      %v1561 = vpop.f32.mrb[0].mxu0
      %1562 = vmatprep.mubr.f32.mxu0 0.0
      %1563 = vmatmul.mubr.f32.gmra.mrb[0].mxu0 %v1425
      %v1564 = vpop.f32.mrb[0].mxu0
      %v1565 = vadd.f32 0.0, %v1564
      %v1566 = vpop.f32.mrb[0].mxu0
      %1567 = vmatprep.mubr.f32.mxu0 0.0
      %1568 = vmatmul.mubr.f32.gmra.mrb[0].mxu0 %v1426
      %v1569 = vpop.f32.mrb[0].mxu0
      %v1570 = vadd.f32 0.0, %v1569
      %v1571 = vpop.f32.mrb[0].mxu0
      %1572 = vmatprep.mubr.f32.mxu0 0.0
      %1573 = vmatmul.mubr.f32.gmra.mrb[0].mxu0 %v1427
      %v1574 = vpop.f32.mrb[0].mxu0
      %v1575 = vadd.f32 0.0, %v1574
      %v1576 = vpop.f32.mrb[0].mxu0
      %1577 = vmatprep.mubr.f32.mxu0 0.0
      %1578 = vmatmul.mubr.f32.gmra.mrb[0].mxu0 %v1428
      %v1579 = vpop.f32.mrb[0].mxu0
      %v1580 = vadd.f32 0.0, %v1579
      %v1581 = vpop.f32.mrb[0].mxu0
      %1582 = vmatprep.mubr.f32.mxu0 0.0
      %1583 = vmatmul.mubr.f32.gmra.mrb[0].mxu0 %v1429
      %v1584 = vpop.f32.mrb[0].mxu0
      %v1585 = vadd.f32 0.0, %v1584
      %v1586 = vpop.f32.mrb[0].mxu0
      %1587 = vmatprep.mubr.f32.mxu0 0.0
      %1588 = vmatmul.mubr.f32.gmra.mrb[0].mxu0 %v1430
      %v1589 = vpop.f32.mrb[0].mxu0
      %v1590 = vadd.f32 0.0, %v1589
      %v1591 = vpop.f32.mrb[0].mxu0
      %1592 = vdwg.mxu0
      %v1593 = vld [vmem:[#allocation3] sm:$0xff]
      %v1594 = vld [vmem:[#allocation3 + $0x8] sm:$0xff]
      %v1595 = vld [vmem:[#allocation3 + $0x10] sm:$0xff]
      %v1596 = vld [vmem:[#allocation3 + $0x18] sm:$0xff]
      %v1597 = vld [vmem:[#allocation3 + $0x20] sm:$0xff]
      %v1598 = vld [vmem:[#allocation3 + $0x28] sm:$0xff]
      %v1599 = vld [vmem:[#allocation3 + $0x30] sm:$0xff]
      %v1600 = vld [vmem:[#allocation3 + $0x38] sm:$0xff]
      %v1601 = vld [vmem:[#allocation3 + $0x40] sm:$0xff]
      %v1602 = vld [vmem:[#allocation3 + $0x48] sm:$0xff]
      %v1603 = vld [vmem:[#allocation3 + $0x50] sm:$0xff]
      %v1604 = vld [vmem:[#allocation3 + $0x58] sm:$0xff]
      %v1605 = vld [vmem:[#allocation3 + $0x60] sm:$0xff]
      %v1606 = vld [vmem:[#allocation3 + $0x68] sm:$0xff]
      %v1607 = vld [vmem:[#allocation3 + $0x70] sm:$0xff]
      %v1608 = vld [vmem:[#allocation3 + $0x78] sm:$0xff]
      %v1609 = vadd.f32 %v1593, %v1515
      %v1610 = vadd.f32 %v1594, %v1520
      %v1611 = vadd.f32 %v1595, %v1525
      %v1612 = vadd.f32 %v1596, %v1530
      %v1613 = vadd.f32 %v1597, %v1535
      %v1614 = vadd.f32 %v1598, %v1540
      %v1615 = vadd.f32 %v1599, %v1545
      %v1616 = vadd.f32 %v1600, %v1550
      %v1617 = vadd.f32 %v1601, %v1555
      %v1618 = vadd.f32 %v1602, %v1560
      %v1619 = vadd.f32 %v1603, %v1565
      %v1620 = vadd.f32 %v1604, %v1570
      %v1621 = vadd.f32 %v1605, %v1575
      %v1622 = vadd.f32 %v1606, %v1580
      %v1623 = vadd.f32 %v1607, %v1585
      %v1624 = vadd.f32 %v1608, %v1590
      %1625 = vst [vmem:[#allocation3] sm:$0xff] %v1609
      %1626 = vst [vmem:[#allocation3 + $0x8] sm:$0xff] %v1610
      %1627 = vst [vmem:[#allocation3 + $0x10] sm:$0xff] %v1611
      %1628 = vst [vmem:[#allocation3 + $0x18] sm:$0xff] %v1612
      %1629 = vst [vmem:[#allocation3 + $0x20] sm:$0xff] %v1613
      %1630 = vst [vmem:[#allocation3 + $0x28] sm:$0xff] %v1614
      %1631 = vst [vmem:[#allocation3 + $0x30] sm:$0xff] %v1615
      %1632 = vst [vmem:[#allocation3 + $0x38] sm:$0xff] %v1616
      %1633 = vst [vmem:[#allocation3 + $0x40] sm:$0xff] %v1617
      %1634 = vst [vmem:[#allocation3 + $0x48] sm:$0xff] %v1618
      %1635 = vst [vmem:[#allocation3 + $0x50] sm:$0xff] %v1619
      %1636 = vst [vmem:[#allocation3 + $0x58] sm:$0xff] %v1620
      %1637 = vst [vmem:[#allocation3 + $0x60] sm:$0xff] %v1621
      %1638 = vst [vmem:[#allocation3 + $0x68] sm:$0xff] %v1622
      %1639 = vst [vmem:[#allocation3 + $0x70] sm:$0xff] %v1623
      %1640 = vst [vmem:[#allocation3 + $0x78] sm:$0xff] %v1624
      %v1641 = vld [vmem:[%s1188 + $0x2] sm:$0xff]
      %v1642 = vld [vmem:[%s1188 + $0xa] sm:$0xff]
      %v1643 = vld [vmem:[%s1188 + $0x1a] sm:$0xff]
      %v1644 = vld [vmem:[%s1188 + $0x22] sm:$0xff]
      %v1645 = vld [vmem:[%s1188 + $0x32] sm:$0xff]
      %v1646 = vld [vmem:[%s1188 + $0x3a] sm:$0xff]
      %v1647 = vld [vmem:[%s1188 + $0x4a] sm:$0xff]
      %v1648 = vld [vmem:[%s1188 + $0x52] sm:$0xff]
      %v1649 = vld [vmem:[%s1188 + $0x62] sm:$0xff]
      %v1650 = vld [vmem:[%s1188 + $0x6a] sm:$0xff]
      %v1651 = vld [vmem:[%s1188 + $0x7a] sm:$0xff]
      %v1652 = vld [vmem:[%s1188 + $0x82] sm:$0xff]
      %v1653 = vld [vmem:[%s1188 + $0x92] sm:$0xff]
      %v1654 = vld [vmem:[%s1188 + $0x9a] sm:$0xff]
      %v1655 = vld [vmem:[%s1188 + $0xaa] sm:$0xff]
      %v1656 = vld [vmem:[%s1188 + $0xb2] sm:$0xff]
      %s1657 = scalar_lea.vmem %s2, 640
      %v1658 = vld [vmem:[%s1657] sm:$0xff]
      %v1659 = vld [vmem:[%s1657 + $0x8] sm:$0xff]
      %v1660 = vld [vmem:[%s1657 + $0x10] sm:$0xff]
      %v1661 = vld [vmem:[%s1657 + $0x18] sm:$0xff]
      %v1662 = vld [vmem:[%s1657 + $0x20] sm:$0xff]
      %v1663 = vld [vmem:[%s1657 + $0x28] sm:$0xff]
      %v1664 = vld [vmem:[%s1657 + $0x30] sm:$0xff]
      %v1665 = vld [vmem:[%s1657 + $0x38] sm:$0xff]
      %v1666 = vld [vmem:[%s1657 + $0x40] sm:$0xff]
      %v1667 = vld [vmem:[%s1657 + $0x48] sm:$0xff]
      %v1668 = vld [vmem:[%s1657 + $0x50] sm:$0xff]
      %v1669 = vld [vmem:[%s1657 + $0x58] sm:$0xff]
      %v1670 = vld [vmem:[%s1657 + $0x60] sm:$0xff]
      %v1671 = vld [vmem:[%s1657 + $0x68] sm:$0xff]
      %v1672 = vld [vmem:[%s1657 + $0x70] sm:$0xff]
      %v1673 = vld [vmem:[%s1657 + $0x78] sm:$0xff]
      %1674 = vmatprep.subr.mxu0 0.0
      %1675 = vmatpush1.msra.mxu0 %v1658
      %1676 = vmatprep.subr.mxu0 0.0
      %1677 = vmatpush1.msra.mxu0 %v1659
      %1678 = vmatprep.subr.mxu0 0.0
      %1679 = vmatpush1.msra.mxu0 %v1660
      %1680 = vmatprep.subr.mxu0 0.0
      %1681 = vmatpush1.msra.mxu0 %v1661
      %1682 = vmatprep.subr.mxu0 0.0
      %1683 = vmatpush1.msra.mxu0 %v1662
      %1684 = vmatprep.subr.mxu0 0.0
      %1685 = vmatpush1.msra.mxu0 %v1663
      %1686 = vmatprep.subr.mxu0 0.0
      %1687 = vmatpush1.msra.mxu0 %v1664
      %1688 = vmatprep.subr.mxu0 0.0
      %1689 = vmatpush1.msra.mxu0 %v1665
      %1690 = vmatprep.subr.mxu0 0.0
      %1691 = vmatpush1.msra.mxu0 %v1666
      %1692 = vmatprep.subr.mxu0 0.0
      %1693 = vmatpush1.msra.mxu0 %v1667
      %1694 = vmatprep.subr.mxu0 0.0
      %1695 = vmatpush1.msra.mxu0 %v1668
      %1696 = vmatprep.subr.mxu0 0.0
      %1697 = vmatpush1.msra.mxu0 %v1669
      %1698 = vmatprep.subr.mxu0 0.0
      %1699 = vmatpush1.msra.mxu0 %v1670
      %1700 = vmatprep.subr.mxu0 0.0
      %1701 = vmatpush1.msra.mxu0 %v1671
      %1702 = vmatprep.subr.mxu0 0.0
      %1703 = vmatpush1.msra.mxu0 %v1672
      %1704 = vmatprep.subr.mxu0 0.0
      %1705 = vmatpush1.msra.mxu0 %v1673
      %1706 = vmatprep.subr.mxu0 0.0
      %1707 = vmatpush1.msra.mxu0 0.0
      %1708 = vmatprep.subr.mxu0 0.0
      %1709 = vmatpush1.msra.mxu0 0.0
      %1710 = vmatprep.subr.mxu0 0.0
      %1711 = vmatpush1.msra.mxu0 0.0
      %1712 = vmatprep.subr.mxu0 0.0
      %1713 = vmatpush1.msra.mxu0 0.0
      %1714 = vmatprep.subr.mxu0 0.0
      %1715 = vmatpush1.msra.mxu0 0.0
      %1716 = vmatprep.subr.mxu0 0.0
      %1717 = vmatpush1.msra.mxu0 0.0
      %1718 = vmatprep.subr.mxu0 0.0
      %1719 = vmatpush1.msra.mxu0 0.0
      %1720 = vmatprep.subr.mxu0 0.0
      %1721 = vmatpush1.msra.mxu0 0.0
      %1722 = vmatprep.subr.mxu0 0.0
      %1723 = vmatpush1.msra.mxu0 0.0
      %1724 = vmatprep.subr.mxu0 0.0
      %1725 = vmatpush1.msra.mxu0 0.0
      %1726 = vmatprep.subr.mxu0 0.0
      %1727 = vmatpush1.msra.mxu0 0.0
      %1728 = vmatprep.subr.mxu0 0.0
      %1729 = vmatpush1.msra.mxu0 0.0
      %1730 = vmatprep.subr.mxu0 0.0
      %1731 = vmatpush1.msra.mxu0 0.0
      %1732 = vmatprep.subr.mxu0 0.0
      %1733 = vmatpush1.msra.mxu0 0.0
      %1734 = vmatprep.subr.mxu0 0.0
      %1735 = vmatpush1.msra.mxu0 0.0
      %1736 = vmatprep.subr.mxu0 0.0
      %1737 = vmatpush1.msra.mxu0 0.0
      %1738 = vmatprep.mubr.f32.mxu0 0.0
      %1739 = vmatmul.mubr.f32.gmra.mrb[0].mxu0 %v1641
      %v1740 = vpop.f32.mrb[0].mxu0
      %v1741 = vadd.f32 0.0, %v1740
      %v1742 = vpop.f32.mrb[0].mxu0
      %1743 = vmatprep.mubr.f32.mxu0 0.0
      %1744 = vmatmul.mubr.f32.gmra.mrb[0].mxu0 %v1642
      %v1745 = vpop.f32.mrb[0].mxu0
      %v1746 = vadd.f32 0.0, %v1745
      %v1747 = vpop.f32.mrb[0].mxu0
      %1748 = vmatprep.mubr.f32.mxu0 0.0
      %1749 = vmatmul.mubr.f32.gmra.mrb[0].mxu0 %v1643
      %v1750 = vpop.f32.mrb[0].mxu0
      %v1751 = vadd.f32 0.0, %v1750
      %v1752 = vpop.f32.mrb[0].mxu0
      %1753 = vmatprep.mubr.f32.mxu0 0.0
      %1754 = vmatmul.mubr.f32.gmra.mrb[0].mxu0 %v1644
      %v1755 = vpop.f32.mrb[0].mxu0
      %v1756 = vadd.f32 0.0, %v1755
      %v1757 = vpop.f32.mrb[0].mxu0
      %1758 = vmatprep.mubr.f32.mxu0 0.0
      %1759 = vmatmul.mubr.f32.gmra.mrb[0].mxu0 %v1645
      %v1760 = vpop.f32.mrb[0].mxu0
      %v1761 = vadd.f32 0.0, %v1760
      %v1762 = vpop.f32.mrb[0].mxu0
      %1763 = vmatprep.mubr.f32.mxu0 0.0
      %1764 = vmatmul.mubr.f32.gmra.mrb[0].mxu0 %v1646
      %v1765 = vpop.f32.mrb[0].mxu0
      %v1766 = vadd.f32 0.0, %v1765
      %v1767 = vpop.f32.mrb[0].mxu0
      %1768 = vmatprep.mubr.f32.mxu0 0.0
      %1769 = vmatmul.mubr.f32.gmra.mrb[0].mxu0 %v1647
      %v1770 = vpop.f32.mrb[0].mxu0
      %v1771 = vadd.f32 0.0, %v1770
      %v1772 = vpop.f32.mrb[0].mxu0
      %1773 = vmatprep.mubr.f32.mxu0 0.0
      %1774 = vmatmul.mubr.f32.gmra.mrb[0].mxu0 %v1648
      %v1775 = vpop.f32.mrb[0].mxu0
      %v1776 = vadd.f32 0.0, %v1775
      %v1777 = vpop.f32.mrb[0].mxu0
      %1778 = vmatprep.mubr.f32.mxu0 0.0
      %1779 = vmatmul.mubr.f32.gmra.mrb[0].mxu0 %v1649
      %v1780 = vpop.f32.mrb[0].mxu0
      %v1781 = vadd.f32 0.0, %v1780
      %v1782 = vpop.f32.mrb[0].mxu0
      %1783 = vmatprep.mubr.f32.mxu0 0.0
      %1784 = vmatmul.mubr.f32.gmra.mrb[0].mxu0 %v1650
      %v1785 = vpop.f32.mrb[0].mxu0
      %v1786 = vadd.f32 0.0, %v1785
      %v1787 = vpop.f32.mrb[0].mxu0
      %1788 = vmatprep.mubr.f32.mxu0 0.0
      %1789 = vmatmul.mubr.f32.gmra.mrb[0].mxu0 %v1651
      %v1790 = vpop.f32.mrb[0].mxu0
      %v1791 = vadd.f32 0.0, %v1790
      %v1792 = vpop.f32.mrb[0].mxu0
      %1793 = vmatprep.mubr.f32.mxu0 0.0
      %1794 = vmatmul.mubr.f32.gmra.mrb[0].mxu0 %v1652
      %v1795 = vpop.f32.mrb[0].mxu0
      %v1796 = vadd.f32 0.0, %v1795
      %v1797 = vpop.f32.mrb[0].mxu0
      %1798 = vmatprep.mubr.f32.mxu0 0.0
      %1799 = vmatmul.mubr.f32.gmra.mrb[0].mxu0 %v1653
      %v1800 = vpop.f32.mrb[0].mxu0
      %v1801 = vadd.f32 0.0, %v1800
      %v1802 = vpop.f32.mrb[0].mxu0
      %1803 = vmatprep.mubr.f32.mxu0 0.0
      %1804 = vmatmul.mubr.f32.gmra.mrb[0].mxu0 %v1654
      %v1805 = vpop.f32.mrb[0].mxu0
      %v1806 = vadd.f32 0.0, %v1805
      %v1807 = vpop.f32.mrb[0].mxu0
      %1808 = vmatprep.mubr.f32.mxu0 0.0
      %1809 = vmatmul.mubr.f32.gmra.mrb[0].mxu0 %v1655
      %v1810 = vpop.f32.mrb[0].mxu0
      %v1811 = vadd.f32 0.0, %v1810
      %v1812 = vpop.f32.mrb[0].mxu0
      %1813 = vmatprep.mubr.f32.mxu0 0.0
      %1814 = vmatmul.mubr.f32.gmra.mrb[0].mxu0 %v1656
      %v1815 = vpop.f32.mrb[0].mxu0
      %v1816 = vadd.f32 0.0, %v1815
      %v1817 = vpop.f32.mrb[0].mxu0
      %1818 = vdwg.mxu0
      %v1819 = vld [vmem:[#allocation3] sm:$0xff]
      %v1820 = vld [vmem:[#allocation3 + $0x8] sm:$0xff]
      %v1821 = vld [vmem:[#allocation3 + $0x10] sm:$0xff]
      %v1822 = vld [vmem:[#allocation3 + $0x18] sm:$0xff]
      %v1823 = vld [vmem:[#allocation3 + $0x20] sm:$0xff]
      %v1824 = vld [vmem:[#allocation3 + $0x28] sm:$0xff]
      %v1825 = vld [vmem:[#allocation3 + $0x30] sm:$0xff]
      %v1826 = vld [vmem:[#allocation3 + $0x38] sm:$0xff]
      %v1827 = vld [vmem:[#allocation3 + $0x40] sm:$0xff]
      %v1828 = vld [vmem:[#allocation3 + $0x48] sm:$0xff]
      %v1829 = vld [vmem:[#allocation3 + $0x50] sm:$0xff]
      %v1830 = vld [vmem:[#allocation3 + $0x58] sm:$0xff]
      %v1831 = vld [vmem:[#allocation3 + $0x60] sm:$0xff]
      %v1832 = vld [vmem:[#allocation3 + $0x68] sm:$0xff]
      %v1833 = vld [vmem:[#allocation3 + $0x70] sm:$0xff]
      %v1834 = vld [vmem:[#allocation3 + $0x78] sm:$0xff]
      %v1835 = vadd.f32 %v1819, %v1741
      %v1836 = vadd.f32 %v1820, %v1746
      %v1837 = vadd.f32 %v1821, %v1751
      %v1838 = vadd.f32 %v1822, %v1756
      %v1839 = vadd.f32 %v1823, %v1761
      %v1840 = vadd.f32 %v1824, %v1766
      %v1841 = vadd.f32 %v1825, %v1771
      %v1842 = vadd.f32 %v1826, %v1776
      %v1843 = vadd.f32 %v1827, %v1781
      %v1844 = vadd.f32 %v1828, %v1786
      %v1845 = vadd.f32 %v1829, %v1791
      %v1846 = vadd.f32 %v1830, %v1796
      %v1847 = vadd.f32 %v1831, %v1801
      %v1848 = vadd.f32 %v1832, %v1806
      %v1849 = vadd.f32 %v1833, %v1811
      %v1850 = vadd.f32 %v1834, %v1816
      %1851 = vst [vmem:[#allocation3] sm:$0xff] %v1835
      %1852 = vst [vmem:[#allocation3 + $0x8] sm:$0xff] %v1836
      %1853 = vst [vmem:[#allocation3 + $0x10] sm:$0xff] %v1837
      %1854 = vst [vmem:[#allocation3 + $0x18] sm:$0xff] %v1838
      %1855 = vst [vmem:[#allocation3 + $0x20] sm:$0xff] %v1839
      %1856 = vst [vmem:[#allocation3 + $0x28] sm:$0xff] %v1840
      %1857 = vst [vmem:[#allocation3 + $0x30] sm:$0xff] %v1841
      %1858 = vst [vmem:[#allocation3 + $0x38] sm:$0xff] %v1842
      %1859 = vst [vmem:[#allocation3 + $0x40] sm:$0xff] %v1843
      %1860 = vst [vmem:[#allocation3 + $0x48] sm:$0xff] %v1844
      %1861 = vst [vmem:[#allocation3 + $0x50] sm:$0xff] %v1845
      %1862 = vst [vmem:[#allocation3 + $0x58] sm:$0xff] %v1846
      %1863 = vst [vmem:[#allocation3 + $0x60] sm:$0xff] %v1847
      %1864 = vst [vmem:[#allocation3 + $0x68] sm:$0xff] %v1848
      %1865 = vst [vmem:[#allocation3 + $0x70] sm:$0xff] %v1849
      %1866 = vst [vmem:[#allocation3 + $0x78] sm:$0xff] %v1850
      %s1867 = scalar_lea.vmem [#allocation2], 48
      %v1868 = vld [vmem:[%s1867] sm:$0xff]
      %v1869 = vld [vmem:[%s1867 + $0x8] sm:$0xff]
      %v1870 = vld [vmem:[%s1867 + $0x18] sm:$0xff]
      %v1871 = vld [vmem:[%s1867 + $0x20] sm:$0xff]
      %v1872 = vld [vmem:[%s1867 + $0x30] sm:$0xff]
      %v1873 = vld [vmem:[%s1867 + $0x38] sm:$0xff]
      %v1874 = vld [vmem:[%s1867 + $0x48] sm:$0xff]
      %v1875 = vld [vmem:[%s1867 + $0x50] sm:$0xff]
      %v1876 = vld [vmem:[%s1867 + $0x60] sm:$0xff]
      %v1877 = vld [vmem:[%s1867 + $0x68] sm:$0xff]
      %v1878 = vld [vmem:[%s1867 + $0x78] sm:$0xff]
      %v1879 = vld [vmem:[%s1867 + $0x80] sm:$0xff]
      %v1880 = vld [vmem:[%s1867 + $0x90] sm:$0xff]
      %v1881 = vld [vmem:[%s1867 + $0x98] sm:$0xff]
      %v1882 = vld [vmem:[%s1867 + $0xa8] sm:$0xff]
      %v1883 = vld [vmem:[%s1867 + $0xb0] sm:$0xff]
      %s1884 = scalar_lea.vmem %s2, 768
      %v1885 = vld [vmem:[%s1884] sm:$0xff]
      %v1886 = vld [vmem:[%s1884 + $0x8] sm:$0xff]
      %v1887 = vld [vmem:[%s1884 + $0x10] sm:$0xff]
      %v1888 = vld [vmem:[%s1884 + $0x18] sm:$0xff]
      %v1889 = vld [vmem:[%s1884 + $0x20] sm:$0xff]
      %v1890 = vld [vmem:[%s1884 + $0x28] sm:$0xff]
      %v1891 = vld [vmem:[%s1884 + $0x30] sm:$0xff]
      %v1892 = vld [vmem:[%s1884 + $0x38] sm:$0xff]
      %v1893 = vld [vmem:[%s1884 + $0x40] sm:$0xff]
      %v1894 = vld [vmem:[%s1884 + $0x48] sm:$0xff]
      %v1895 = vld [vmem:[%s1884 + $0x50] sm:$0xff]
      %v1896 = vld [vmem:[%s1884 + $0x58] sm:$0xff]
      %v1897 = vld [vmem:[%s1884 + $0x60] sm:$0xff]
      %v1898 = vld [vmem:[%s1884 + $0x68] sm:$0xff]
      %v1899 = vld [vmem:[%s1884 + $0x70] sm:$0xff]
      %v1900 = vld [vmem:[%s1884 + $0x78] sm:$0xff]
      %1901 = vmatprep.subr.mxu0 0.0
      %1902 = vmatpush1.msra.mxu0 %v1885
      %1903 = vmatprep.subr.mxu0 0.0
      %1904 = vmatpush1.msra.mxu0 %v1886
      %1905 = vmatprep.subr.mxu0 0.0
      %1906 = vmatpush1.msra.mxu0 %v1887
      %1907 = vmatprep.subr.mxu0 0.0
      %1908 = vmatpush1.msra.mxu0 %v1888
      %1909 = vmatprep.subr.mxu0 0.0
      %1910 = vmatpush1.msra.mxu0 %v1889
      %1911 = vmatprep.subr.mxu0 0.0
      %1912 = vmatpush1.msra.mxu0 %v1890
      %1913 = vmatprep.subr.mxu0 0.0
      %1914 = vmatpush1.msra.mxu0 %v1891
      %1915 = vmatprep.subr.mxu0 0.0
      %1916 = vmatpush1.msra.mxu0 %v1892
      %1917 = vmatprep.subr.mxu0 0.0
      %1918 = vmatpush1.msra.mxu0 %v1893
      %1919 = vmatprep.subr.mxu0 0.0
      %1920 = vmatpush1.msra.mxu0 %v1894
      %1921 = vmatprep.subr.mxu0 0.0
      %1922 = vmatpush1.msra.mxu0 %v1895
      %1923 = vmatprep.subr.mxu0 0.0
      %1924 = vmatpush1.msra.mxu0 %v1896
      %1925 = vmatprep.subr.mxu0 0.0
      %1926 = vmatpush1.msra.mxu0 %v1897
      %1927 = vmatprep.subr.mxu0 0.0
      %1928 = vmatpush1.msra.mxu0 %v1898
      %1929 = vmatprep.subr.mxu0 0.0
      %1930 = vmatpush1.msra.mxu0 %v1899
      %1931 = vmatprep.subr.mxu0 0.0
      %1932 = vmatpush1.msra.mxu0 %v1900
      %1933 = vmatprep.subr.mxu0 0.0
      %1934 = vmatpush1.msra.mxu0 0.0
      %1935 = vmatprep.subr.mxu0 0.0
      %1936 = vmatpush1.msra.mxu0 0.0
      %1937 = vmatprep.subr.mxu0 0.0
      %1938 = vmatpush1.msra.mxu0 0.0
      %1939 = vmatprep.subr.mxu0 0.0
      %1940 = vmatpush1.msra.mxu0 0.0
      %1941 = vmatprep.subr.mxu0 0.0
      %1942 = vmatpush1.msra.mxu0 0.0
      %1943 = vmatprep.subr.mxu0 0.0
      %1944 = vmatpush1.msra.mxu0 0.0
      %1945 = vmatprep.subr.mxu0 0.0
      %1946 = vmatpush1.msra.mxu0 0.0
      %1947 = vmatprep.subr.mxu0 0.0
      %1948 = vmatpush1.msra.mxu0 0.0
      %1949 = vmatprep.subr.mxu0 0.0
      %1950 = vmatpush1.msra.mxu0 0.0
      %1951 = vmatprep.subr.mxu0 0.0
      %1952 = vmatpush1.msra.mxu0 0.0
      %1953 = vmatprep.subr.mxu0 0.0
      %1954 = vmatpush1.msra.mxu0 0.0
      %1955 = vmatprep.subr.mxu0 0.0
      %1956 = vmatpush1.msra.mxu0 0.0
      %1957 = vmatprep.subr.mxu0 0.0
      %1958 = vmatpush1.msra.mxu0 0.0
      %1959 = vmatprep.subr.mxu0 0.0
      %1960 = vmatpush1.msra.mxu0 0.0
      %1961 = vmatprep.subr.mxu0 0.0
      %1962 = vmatpush1.msra.mxu0 0.0
      %1963 = vmatprep.subr.mxu0 0.0
      %1964 = vmatpush1.msra.mxu0 0.0
      %1965 = vmatprep.mubr.f32.mxu0 0.0
      %1966 = vmatmul.mubr.f32.gmra.mrb[0].mxu0 %v1868
      %v1967 = vpop.f32.mrb[0].mxu0
      %v1968 = vadd.f32 0.0, %v1967
      %v1969 = vpop.f32.mrb[0].mxu0
      %1970 = vmatprep.mubr.f32.mxu0 0.0
      %1971 = vmatmul.mubr.f32.gmra.mrb[0].mxu0 %v1869
      %v1972 = vpop.f32.mrb[0].mxu0
      %v1973 = vadd.f32 0.0, %v1972
      %v1974 = vpop.f32.mrb[0].mxu0
      %1975 = vmatprep.mubr.f32.mxu0 0.0
      %1976 = vmatmul.mubr.f32.gmra.mrb[0].mxu0 %v1870
      %v1977 = vpop.f32.mrb[0].mxu0
      %v1978 = vadd.f32 0.0, %v1977
      %v1979 = vpop.f32.mrb[0].mxu0
      %1980 = vmatprep.mubr.f32.mxu0 0.0
      %1981 = vmatmul.mubr.f32.gmra.mrb[0].mxu0 %v1871
      %v1982 = vpop.f32.mrb[0].mxu0
      %v1983 = vadd.f32 0.0, %v1982
      %v1984 = vpop.f32.mrb[0].mxu0
      %1985 = vmatprep.mubr.f32.mxu0 0.0
      %1986 = vmatmul.mubr.f32.gmra.mrb[0].mxu0 %v1872
      %v1987 = vpop.f32.mrb[0].mxu0
      %v1988 = vadd.f32 0.0, %v1987
      %v1989 = vpop.f32.mrb[0].mxu0
      %1990 = vmatprep.mubr.f32.mxu0 0.0
      %1991 = vmatmul.mubr.f32.gmra.mrb[0].mxu0 %v1873
      %v1992 = vpop.f32.mrb[0].mxu0
      %v1993 = vadd.f32 0.0, %v1992
      %v1994 = vpop.f32.mrb[0].mxu0
      %1995 = vmatprep.mubr.f32.mxu0 0.0
      %1996 = vmatmul.mubr.f32.gmra.mrb[0].mxu0 %v1874
      %v1997 = vpop.f32.mrb[0].mxu0
      %v1998 = vadd.f32 0.0, %v1997
      %v1999 = vpop.f32.mrb[0].mxu0
      %2000 = vmatprep.mubr.f32.mxu0 0.0
      %2001 = vmatmul.mubr.f32.gmra.mrb[0].mxu0 %v1875
      %v2002 = vpop.f32.mrb[0].mxu0
      %v2003 = vadd.f32 0.0, %v2002
      %v2004 = vpop.f32.mrb[0].mxu0
      %2005 = vmatprep.mubr.f32.mxu0 0.0
      %2006 = vmatmul.mubr.f32.gmra.mrb[0].mxu0 %v1876
      %v2007 = vpop.f32.mrb[0].mxu0
      %v2008 = vadd.f32 0.0, %v2007
      %v2009 = vpop.f32.mrb[0].mxu0
      %2010 = vmatprep.mubr.f32.mxu0 0.0
      %2011 = vmatmul.mubr.f32.gmra.mrb[0].mxu0 %v1877
      %v2012 = vpop.f32.mrb[0].mxu0
      %v2013 = vadd.f32 0.0, %v2012
      %v2014 = vpop.f32.mrb[0].mxu0
      %2015 = vmatprep.mubr.f32.mxu0 0.0
      %2016 = vmatmul.mubr.f32.gmra.mrb[0].mxu0 %v1878
      %v2017 = vpop.f32.mrb[0].mxu0
      %v2018 = vadd.f32 0.0, %v2017
      %v2019 = vpop.f32.mrb[0].mxu0
      %2020 = vmatprep.mubr.f32.mxu0 0.0
      %2021 = vmatmul.mubr.f32.gmra.mrb[0].mxu0 %v1879
      %v2022 = vpop.f32.mrb[0].mxu0
      %v2023 = vadd.f32 0.0, %v2022
      %v2024 = vpop.f32.mrb[0].mxu0
      %2025 = vmatprep.mubr.f32.mxu0 0.0
      %2026 = vmatmul.mubr.f32.gmra.mrb[0].mxu0 %v1880
      %v2027 = vpop.f32.mrb[0].mxu0
      %v2028 = vadd.f32 0.0, %v2027
      %v2029 = vpop.f32.mrb[0].mxu0
      %2030 = vmatprep.mubr.f32.mxu0 0.0
      %2031 = vmatmul.mubr.f32.gmra.mrb[0].mxu0 %v1881
      %v2032 = vpop.f32.mrb[0].mxu0
      %v2033 = vadd.f32 0.0, %v2032
      %v2034 = vpop.f32.mrb[0].mxu0
      %2035 = vmatprep.mubr.f32.mxu0 0.0
      %2036 = vmatmul.mubr.f32.gmra.mrb[0].mxu0 %v1882
      %v2037 = vpop.f32.mrb[0].mxu0
      %v2038 = vadd.f32 0.0, %v2037
      %v2039 = vpop.f32.mrb[0].mxu0
      %2040 = vmatprep.mubr.f32.mxu0 0.0
      %2041 = vmatmul.mubr.f32.gmra.mrb[0].mxu0 %v1883
      %v2042 = vpop.f32.mrb[0].mxu0
      %v2043 = vadd.f32 0.0, %v2042
      %v2044 = vpop.f32.mrb[0].mxu0
      %2045 = vdwg.mxu0
      %v2046 = vld [vmem:[#allocation3] sm:$0xff]
      %v2047 = vld [vmem:[#allocation3 + $0x8] sm:$0xff]
      %v2048 = vld [vmem:[#allocation3 + $0x10] sm:$0xff]
      %v2049 = vld [vmem:[#allocation3 + $0x18] sm:$0xff]
      %v2050 = vld [vmem:[#allocation3 + $0x20] sm:$0xff]
      %v2051 = vld [vmem:[#allocation3 + $0x28] sm:$0xff]
      %v2052 = vld [vmem:[#allocation3 + $0x30] sm:$0xff]
      %v2053 = vld [vmem:[#allocation3 + $0x38] sm:$0xff]
      %v2054 = vld [vmem:[#allocation3 + $0x40] sm:$0xff]
      %v2055 = vld [vmem:[#allocation3 + $0x48] sm:$0xff]
      %v2056 = vld [vmem:[#allocation3 + $0x50] sm:$0xff]
      %v2057 = vld [vmem:[#allocation3 + $0x58] sm:$0xff]
      %v2058 = vld [vmem:[#allocation3 + $0x60] sm:$0xff]
      %v2059 = vld [vmem:[#allocation3 + $0x68] sm:$0xff]
      %v2060 = vld [vmem:[#allocation3 + $0x70] sm:$0xff]
      %v2061 = vld [vmem:[#allocation3 + $0x78] sm:$0xff]
      %v2062 = vadd.f32 %v2046, %v1968
      %v2063 = vadd.f32 %v2047, %v1973
      %v2064 = vadd.f32 %v2048, %v1978
      %v2065 = vadd.f32 %v2049, %v1983
      %v2066 = vadd.f32 %v2050, %v1988
      %v2067 = vadd.f32 %v2051, %v1993
      %v2068 = vadd.f32 %v2052, %v1998
      %v2069 = vadd.f32 %v2053, %v2003
      %v2070 = vadd.f32 %v2054, %v2008
      %v2071 = vadd.f32 %v2055, %v2013
      %v2072 = vadd.f32 %v2056, %v2018
      %v2073 = vadd.f32 %v2057, %v2023
      %v2074 = vadd.f32 %v2058, %v2028
      %v2075 = vadd.f32 %v2059, %v2033
      %v2076 = vadd.f32 %v2060, %v2038
      %v2077 = vadd.f32 %v2061, %v2043
      %2078 = vst [vmem:[#allocation3] sm:$0xff] %v2062
      %2079 = vst [vmem:[#allocation3 + $0x8] sm:$0xff] %v2063
      %2080 = vst [vmem:[#allocation3 + $0x10] sm:$0xff] %v2064
      %2081 = vst [vmem:[#allocation3 + $0x18] sm:$0xff] %v2065
      %2082 = vst [vmem:[#allocation3 + $0x20] sm:$0xff] %v2066
      %2083 = vst [vmem:[#allocation3 + $0x28] sm:$0xff] %v2067
      %2084 = vst [vmem:[#allocation3 + $0x30] sm:$0xff] %v2068
      %2085 = vst [vmem:[#allocation3 + $0x38] sm:$0xff] %v2069
      %2086 = vst [vmem:[#allocation3 + $0x40] sm:$0xff] %v2070
      %2087 = vst [vmem:[#allocation3 + $0x48] sm:$0xff] %v2071
      %2088 = vst [vmem:[#allocation3 + $0x50] sm:$0xff] %v2072
      %2089 = vst [vmem:[#allocation3 + $0x58] sm:$0xff] %v2073
      %2090 = vst [vmem:[#allocation3 + $0x60] sm:$0xff] %v2074
      %2091 = vst [vmem:[#allocation3 + $0x68] sm:$0xff] %v2075
      %2092 = vst [vmem:[#allocation3 + $0x70] sm:$0xff] %v2076
      %2093 = vst [vmem:[#allocation3 + $0x78] sm:$0xff] %v2077
      %v2094 = vld [vmem:[%s1867 + $0x1] sm:$0xff]
      %v2095 = vld [vmem:[%s1867 + $0x9] sm:$0xff]
      %v2096 = vld [vmem:[%s1867 + $0x19] sm:$0xff]
      %v2097 = vld [vmem:[%s1867 + $0x21] sm:$0xff]
      %v2098 = vld [vmem:[%s1867 + $0x31] sm:$0xff]
      %v2099 = vld [vmem:[%s1867 + $0x39] sm:$0xff]
      %v2100 = vld [vmem:[%s1867 + $0x49] sm:$0xff]
      %v2101 = vld [vmem:[%s1867 + $0x51] sm:$0xff]
      %v2102 = vld [vmem:[%s1867 + $0x61] sm:$0xff]
      %v2103 = vld [vmem:[%s1867 + $0x69] sm:$0xff]
      %v2104 = vld [vmem:[%s1867 + $0x79] sm:$0xff]
      %v2105 = vld [vmem:[%s1867 + $0x81] sm:$0xff]
      %v2106 = vld [vmem:[%s1867 + $0x91] sm:$0xff]
      %v2107 = vld [vmem:[%s1867 + $0x99] sm:$0xff]
      %v2108 = vld [vmem:[%s1867 + $0xa9] sm:$0xff]
      %v2109 = vld [vmem:[%s1867 + $0xb1] sm:$0xff]
      %s2110 = scalar_lea.vmem %s2, 896
      %v2111 = vld [vmem:[%s2110] sm:$0xff]
      %v2112 = vld [vmem:[%s2110 + $0x8] sm:$0xff]
      %v2113 = vld [vmem:[%s2110 + $0x10] sm:$0xff]
      %v2114 = vld [vmem:[%s2110 + $0x18] sm:$0xff]
      %v2115 = vld [vmem:[%s2110 + $0x20] sm:$0xff]
      %v2116 = vld [vmem:[%s2110 + $0x28] sm:$0xff]
      %v2117 = vld [vmem:[%s2110 + $0x30] sm:$0xff]
      %v2118 = vld [vmem:[%s2110 + $0x38] sm:$0xff]
      %v2119 = vld [vmem:[%s2110 + $0x40] sm:$0xff]
      %v2120 = vld [vmem:[%s2110 + $0x48] sm:$0xff]
      %v2121 = vld [vmem:[%s2110 + $0x50] sm:$0xff]
      %v2122 = vld [vmem:[%s2110 + $0x58] sm:$0xff]
      %v2123 = vld [vmem:[%s2110 + $0x60] sm:$0xff]
      %v2124 = vld [vmem:[%s2110 + $0x68] sm:$0xff]
      %v2125 = vld [vmem:[%s2110 + $0x70] sm:$0xff]
      %v2126 = vld [vmem:[%s2110 + $0x78] sm:$0xff]
      %2127 = vmatprep.subr.mxu0 0.0
      %2128 = vmatpush1.msra.mxu0 %v2111
      %2129 = vmatprep.subr.mxu0 0.0
      %2130 = vmatpush1.msra.mxu0 %v2112
      %2131 = vmatprep.subr.mxu0 0.0
      %2132 = vmatpush1.msra.mxu0 %v2113
      %2133 = vmatprep.subr.mxu0 0.0
      %2134 = vmatpush1.msra.mxu0 %v2114
      %2135 = vmatprep.subr.mxu0 0.0
      %2136 = vmatpush1.msra.mxu0 %v2115
      %2137 = vmatprep.subr.mxu0 0.0
      %2138 = vmatpush1.msra.mxu0 %v2116
      %2139 = vmatprep.subr.mxu0 0.0
      %2140 = vmatpush1.msra.mxu0 %v2117
      %2141 = vmatprep.subr.mxu0 0.0
      %2142 = vmatpush1.msra.mxu0 %v2118
      %2143 = vmatprep.subr.mxu0 0.0
      %2144 = vmatpush1.msra.mxu0 %v2119
      %2145 = vmatprep.subr.mxu0 0.0
      %2146 = vmatpush1.msra.mxu0 %v2120
      %2147 = vmatprep.subr.mxu0 0.0
      %2148 = vmatpush1.msra.mxu0 %v2121
      %2149 = vmatprep.subr.mxu0 0.0
      %2150 = vmatpush1.msra.mxu0 %v2122
      %2151 = vmatprep.subr.mxu0 0.0
      %2152 = vmatpush1.msra.mxu0 %v2123
      %2153 = vmatprep.subr.mxu0 0.0
      %2154 = vmatpush1.msra.mxu0 %v2124
      %2155 = vmatprep.subr.mxu0 0.0
      %2156 = vmatpush1.msra.mxu0 %v2125
      %2157 = vmatprep.subr.mxu0 0.0
      %2158 = vmatpush1.msra.mxu0 %v2126
      %2159 = vmatprep.subr.mxu0 0.0
      %2160 = vmatpush1.msra.mxu0 0.0
      %2161 = vmatprep.subr.mxu0 0.0
      %2162 = vmatpush1.msra.mxu0 0.0
      %2163 = vmatprep.subr.mxu0 0.0
      %2164 = vmatpush1.msra.mxu0 0.0
      %2165 = vmatprep.subr.mxu0 0.0
      %2166 = vmatpush1.msra.mxu0 0.0
      %2167 = vmatprep.subr.mxu0 0.0
      %2168 = vmatpush1.msra.mxu0 0.0
      %2169 = vmatprep.subr.mxu0 0.0
      %2170 = vmatpush1.msra.mxu0 0.0
      %2171 = vmatprep.subr.mxu0 0.0
      %2172 = vmatpush1.msra.mxu0 0.0
      %2173 = vmatprep.subr.mxu0 0.0
      %2174 = vmatpush1.msra.mxu0 0.0
      %2175 = vmatprep.subr.mxu0 0.0
      %2176 = vmatpush1.msra.mxu0 0.0
      %2177 = vmatprep.subr.mxu0 0.0
      %2178 = vmatpush1.msra.mxu0 0.0
      %2179 = vmatprep.subr.mxu0 0.0
      %2180 = vmatpush1.msra.mxu0 0.0
      %2181 = vmatprep.subr.mxu0 0.0
      %2182 = vmatpush1.msra.mxu0 0.0
      %2183 = vmatprep.subr.mxu0 0.0
      %2184 = vmatpush1.msra.mxu0 0.0
      %2185 = vmatprep.subr.mxu0 0.0
      %2186 = vmatpush1.msra.mxu0 0.0
      %2187 = vmatprep.subr.mxu0 0.0
      %2188 = vmatpush1.msra.mxu0 0.0
      %2189 = vmatprep.subr.mxu0 0.0
      %2190 = vmatpush1.msra.mxu0 0.0
      %2191 = vmatprep.mubr.f32.mxu0 0.0
      %2192 = vmatmul.mubr.f32.gmra.mrb[0].mxu0 %v2094
      %v2193 = vpop.f32.mrb[0].mxu0
      %v2194 = vadd.f32 0.0, %v2193
      %v2195 = vpop.f32.mrb[0].mxu0
      %2196 = vmatprep.mubr.f32.mxu0 0.0
      %2197 = vmatmul.mubr.f32.gmra.mrb[0].mxu0 %v2095
      %v2198 = vpop.f32.mrb[0].mxu0
      %v2199 = vadd.f32 0.0, %v2198
      %v2200 = vpop.f32.mrb[0].mxu0
      %2201 = vmatprep.mubr.f32.mxu0 0.0
      %2202 = vmatmul.mubr.f32.gmra.mrb[0].mxu0 %v2096
      %v2203 = vpop.f32.mrb[0].mxu0
      %v2204 = vadd.f32 0.0, %v2203
      %v2205 = vpop.f32.mrb[0].mxu0
      %2206 = vmatprep.mubr.f32.mxu0 0.0
      %2207 = vmatmul.mubr.f32.gmra.mrb[0].mxu0 %v2097
      %v2208 = vpop.f32.mrb[0].mxu0
      %v2209 = vadd.f32 0.0, %v2208
      %v2210 = vpop.f32.mrb[0].mxu0
      %2211 = vmatprep.mubr.f32.mxu0 0.0
      %2212 = vmatmul.mubr.f32.gmra.mrb[0].mxu0 %v2098
      %v2213 = vpop.f32.mrb[0].mxu0
      %v2214 = vadd.f32 0.0, %v2213
      %v2215 = vpop.f32.mrb[0].mxu0
      %2216 = vmatprep.mubr.f32.mxu0 0.0
      %2217 = vmatmul.mubr.f32.gmra.mrb[0].mxu0 %v2099
      %v2218 = vpop.f32.mrb[0].mxu0
      %v2219 = vadd.f32 0.0, %v2218
      %v2220 = vpop.f32.mrb[0].mxu0
      %2221 = vmatprep.mubr.f32.mxu0 0.0
      %2222 = vmatmul.mubr.f32.gmra.mrb[0].mxu0 %v2100
      %v2223 = vpop.f32.mrb[0].mxu0
      %v2224 = vadd.f32 0.0, %v2223
      %v2225 = vpop.f32.mrb[0].mxu0
      %2226 = vmatprep.mubr.f32.mxu0 0.0
      %2227 = vmatmul.mubr.f32.gmra.mrb[0].mxu0 %v2101
      %v2228 = vpop.f32.mrb[0].mxu0
      %v2229 = vadd.f32 0.0, %v2228
      %v2230 = vpop.f32.mrb[0].mxu0
      %2231 = vmatprep.mubr.f32.mxu0 0.0
      %2232 = vmatmul.mubr.f32.gmra.mrb[0].mxu0 %v2102
      %v2233 = vpop.f32.mrb[0].mxu0
      %v2234 = vadd.f32 0.0, %v2233
      %v2235 = vpop.f32.mrb[0].mxu0
      %2236 = vmatprep.mubr.f32.mxu0 0.0
      %2237 = vmatmul.mubr.f32.gmra.mrb[0].mxu0 %v2103
      %v2238 = vpop.f32.mrb[0].mxu0
      %v2239 = vadd.f32 0.0, %v2238
      %v2240 = vpop.f32.mrb[0].mxu0
      %2241 = vmatprep.mubr.f32.mxu0 0.0
      %2242 = vmatmul.mubr.f32.gmra.mrb[0].mxu0 %v2104
      %v2243 = vpop.f32.mrb[0].mxu0
      %v2244 = vadd.f32 0.0, %v2243
      %v2245 = vpop.f32.mrb[0].mxu0
      %2246 = vmatprep.mubr.f32.mxu0 0.0
      %2247 = vmatmul.mubr.f32.gmra.mrb[0].mxu0 %v2105
      %v2248 = vpop.f32.mrb[0].mxu0
      %v2249 = vadd.f32 0.0, %v2248
      %v2250 = vpop.f32.mrb[0].mxu0
      %2251 = vmatprep.mubr.f32.mxu0 0.0
      %2252 = vmatmul.mubr.f32.gmra.mrb[0].mxu0 %v2106
      %v2253 = vpop.f32.mrb[0].mxu0
      %v2254 = vadd.f32 0.0, %v2253
      %v2255 = vpop.f32.mrb[0].mxu0
      %2256 = vmatprep.mubr.f32.mxu0 0.0
      %2257 = vmatmul.mubr.f32.gmra.mrb[0].mxu0 %v2107
      %v2258 = vpop.f32.mrb[0].mxu0
      %v2259 = vadd.f32 0.0, %v2258
      %v2260 = vpop.f32.mrb[0].mxu0
      %2261 = vmatprep.mubr.f32.mxu0 0.0
      %2262 = vmatmul.mubr.f32.gmra.mrb[0].mxu0 %v2108
      %v2263 = vpop.f32.mrb[0].mxu0
      %v2264 = vadd.f32 0.0, %v2263
      %v2265 = vpop.f32.mrb[0].mxu0
      %2266 = vmatprep.mubr.f32.mxu0 0.0
      %2267 = vmatmul.mubr.f32.gmra.mrb[0].mxu0 %v2109
      %v2268 = vpop.f32.mrb[0].mxu0
      %v2269 = vadd.f32 0.0, %v2268
      %v2270 = vpop.f32.mrb[0].mxu0
      %2271 = vdwg.mxu0
      %v2272 = vld [vmem:[#allocation3] sm:$0xff]
      %v2273 = vld [vmem:[#allocation3 + $0x8] sm:$0xff]
      %v2274 = vld [vmem:[#allocation3 + $0x10] sm:$0xff]
      %v2275 = vld [vmem:[#allocation3 + $0x18] sm:$0xff]
      %v2276 = vld [vmem:[#allocation3 + $0x20] sm:$0xff]
      %v2277 = vld [vmem:[#allocation3 + $0x28] sm:$0xff]
      %v2278 = vld [vmem:[#allocation3 + $0x30] sm:$0xff]
      %v2279 = vld [vmem:[#allocation3 + $0x38] sm:$0xff]
      %v2280 = vld [vmem:[#allocation3 + $0x40] sm:$0xff]
      %v2281 = vld [vmem:[#allocation3 + $0x48] sm:$0xff]
      %v2282 = vld [vmem:[#allocation3 + $0x50] sm:$0xff]
      %v2283 = vld [vmem:[#allocation3 + $0x58] sm:$0xff]
      %v2284 = vld [vmem:[#allocation3 + $0x60] sm:$0xff]
      %v2285 = vld [vmem:[#allocation3 + $0x68] sm:$0xff]
      %v2286 = vld [vmem:[#allocation3 + $0x70] sm:$0xff]
      %v2287 = vld [vmem:[#allocation3 + $0x78] sm:$0xff]
      %v2288 = vadd.f32 %v2272, %v2194
      %v2289 = vadd.f32 %v2273, %v2199
      %v2290 = vadd.f32 %v2274, %v2204
      %v2291 = vadd.f32 %v2275, %v2209
      %v2292 = vadd.f32 %v2276, %v2214
      %v2293 = vadd.f32 %v2277, %v2219
      %v2294 = vadd.f32 %v2278, %v2224
      %v2295 = vadd.f32 %v2279, %v2229
      %v2296 = vadd.f32 %v2280, %v2234
      %v2297 = vadd.f32 %v2281, %v2239
      %v2298 = vadd.f32 %v2282, %v2244
      %v2299 = vadd.f32 %v2283, %v2249
      %v2300 = vadd.f32 %v2284, %v2254
      %v2301 = vadd.f32 %v2285, %v2259
      %v2302 = vadd.f32 %v2286, %v2264
      %v2303 = vadd.f32 %v2287, %v2269
      %2304 = vst [vmem:[#allocation3] sm:$0xff] %v2288
      %2305 = vst [vmem:[#allocation3 + $0x8] sm:$0xff] %v2289
      %2306 = vst [vmem:[#allocation3 + $0x10] sm:$0xff] %v2290
      %2307 = vst [vmem:[#allocation3 + $0x18] sm:$0xff] %v2291
      %2308 = vst [vmem:[#allocation3 + $0x20] sm:$0xff] %v2292
      %2309 = vst [vmem:[#allocation3 + $0x28] sm:$0xff] %v2293
      %2310 = vst [vmem:[#allocation3 + $0x30] sm:$0xff] %v2294
      %2311 = vst [vmem:[#allocation3 + $0x38] sm:$0xff] %v2295
      %2312 = vst [vmem:[#allocation3 + $0x40] sm:$0xff] %v2296
      %2313 = vst [vmem:[#allocation3 + $0x48] sm:$0xff] %v2297
      %2314 = vst [vmem:[#allocation3 + $0x50] sm:$0xff] %v2298
      %2315 = vst [vmem:[#allocation3 + $0x58] sm:$0xff] %v2299
      %2316 = vst [vmem:[#allocation3 + $0x60] sm:$0xff] %v2300
      %2317 = vst [vmem:[#allocation3 + $0x68] sm:$0xff] %v2301
      %2318 = vst [vmem:[#allocation3 + $0x70] sm:$0xff] %v2302
      %2319 = vst [vmem:[#allocation3 + $0x78] sm:$0xff] %v2303
      %v2320 = vld [vmem:[%s1867 + $0x2] sm:$0xff]
      %v2321 = vld [vmem:[%s1867 + $0xa] sm:$0xff]
      %v2322 = vld [vmem:[%s1867 + $0x1a] sm:$0xff]
      %v2323 = vld [vmem:[%s1867 + $0x22] sm:$0xff]
      %v2324 = vld [vmem:[%s1867 + $0x32] sm:$0xff]
      %v2325 = vld [vmem:[%s1867 + $0x3a] sm:$0xff]
      %v2326 = vld [vmem:[%s1867 + $0x4a] sm:$0xff]
      %v2327 = vld [vmem:[%s1867 + $0x52] sm:$0xff]
      %v2328 = vld [vmem:[%s1867 + $0x62] sm:$0xff]
      %v2329 = vld [vmem:[%s1867 + $0x6a] sm:$0xff]
      %v2330 = vld [vmem:[%s1867 + $0x7a] sm:$0xff]
      %v2331 = vld [vmem:[%s1867 + $0x82] sm:$0xff]
      %v2332 = vld [vmem:[%s1867 + $0x92] sm:$0xff]
      %v2333 = vld [vmem:[%s1867 + $0x9a] sm:$0xff]
      %v2334 = vld [vmem:[%s1867 + $0xaa] sm:$0xff]
      %v2335 = vld [vmem:[%s1867 + $0xb2] sm:$0xff]
      %s2336 = scalar_lea.vmem %s2, 1024
      %v2337 = vld [vmem:[%s2336] sm:$0xff]
      %v2338 = vld [vmem:[%s2336 + $0x8] sm:$0xff]
      %v2339 = vld [vmem:[%s2336 + $0x10] sm:$0xff]
      %v2340 = vld [vmem:[%s2336 + $0x18] sm:$0xff]
      %v2341 = vld [vmem:[%s2336 + $0x20] sm:$0xff]
      %v2342 = vld [vmem:[%s2336 + $0x28] sm:$0xff]
      %v2343 = vld [vmem:[%s2336 + $0x30] sm:$0xff]
      %v2344 = vld [vmem:[%s2336 + $0x38] sm:$0xff]
      %v2345 = vld [vmem:[%s2336 + $0x40] sm:$0xff]
      %v2346 = vld [vmem:[%s2336 + $0x48] sm:$0xff]
      %v2347 = vld [vmem:[%s2336 + $0x50] sm:$0xff]
      %v2348 = vld [vmem:[%s2336 + $0x58] sm:$0xff]
      %v2349 = vld [vmem:[%s2336 + $0x60] sm:$0xff]
      %v2350 = vld [vmem:[%s2336 + $0x68] sm:$0xff]
      %v2351 = vld [vmem:[%s2336 + $0x70] sm:$0xff]
      %v2352 = vld [vmem:[%s2336 + $0x78] sm:$0xff]
      %2353 = vmatprep.subr.mxu0 0.0
      %2354 = vmatpush1.msra.mxu0 %v2337
      %2355 = vmatprep.subr.mxu0 0.0
      %2356 = vmatpush1.msra.mxu0 %v2338
      %2357 = vmatprep.subr.mxu0 0.0
      %2358 = vmatpush1.msra.mxu0 %v2339
      %2359 = vmatprep.subr.mxu0 0.0
      %2360 = vmatpush1.msra.mxu0 %v2340
      %2361 = vmatprep.subr.mxu0 0.0
      %2362 = vmatpush1.msra.mxu0 %v2341
      %2363 = vmatprep.subr.mxu0 0.0
      %2364 = vmatpush1.msra.mxu0 %v2342
      %2365 = vmatprep.subr.mxu0 0.0
      %2366 = vmatpush1.msra.mxu0 %v2343
      %2367 = vmatprep.subr.mxu0 0.0
      %2368 = vmatpush1.msra.mxu0 %v2344
      %2369 = vmatprep.subr.mxu0 0.0
      %2370 = vmatpush1.msra.mxu0 %v2345
      %2371 = vmatprep.subr.mxu0 0.0
      %2372 = vmatpush1.msra.mxu0 %v2346
      %2373 = vmatprep.subr.mxu0 0.0
      %2374 = vmatpush1.msra.mxu0 %v2347
      %2375 = vmatprep.subr.mxu0 0.0
      %2376 = vmatpush1.msra.mxu0 %v2348
      %2377 = vmatprep.subr.mxu0 0.0
      %2378 = vmatpush1.msra.mxu0 %v2349
      %2379 = vmatprep.subr.mxu0 0.0
      %2380 = vmatpush1.msra.mxu0 %v2350
      %2381 = vmatprep.subr.mxu0 0.0
      %2382 = vmatpush1.msra.mxu0 %v2351
      %2383 = vmatprep.subr.mxu0 0.0
      %2384 = vmatpush1.msra.mxu0 %v2352
      %2385 = vmatprep.subr.mxu0 0.0
      %2386 = vmatpush1.msra.mxu0 0.0
      %2387 = vmatprep.subr.mxu0 0.0
      %2388 = vmatpush1.msra.mxu0 0.0
      %2389 = vmatprep.subr.mxu0 0.0
      %2390 = vmatpush1.msra.mxu0 0.0
      %2391 = vmatprep.subr.mxu0 0.0
      %2392 = vmatpush1.msra.mxu0 0.0
      %2393 = vmatprep.subr.mxu0 0.0
      %2394 = vmatpush1.msra.mxu0 0.0
      %2395 = vmatprep.subr.mxu0 0.0
      %2396 = vmatpush1.msra.mxu0 0.0
      %2397 = vmatprep.subr.mxu0 0.0
      %2398 = vmatpush1.msra.mxu0 0.0
      %2399 = vmatprep.subr.mxu0 0.0
      %2400 = vmatpush1.msra.mxu0 0.0
      %2401 = vmatprep.subr.mxu0 0.0
      %2402 = vmatpush1.msra.mxu0 0.0
      %2403 = vmatprep.subr.mxu0 0.0
      %2404 = vmatpush1.msra.mxu0 0.0
      %2405 = vmatprep.subr.mxu0 0.0
      %2406 = vmatpush1.msra.mxu0 0.0
      %2407 = vmatprep.subr.mxu0 0.0
      %2408 = vmatpush1.msra.mxu0 0.0
      %2409 = vmatprep.subr.mxu0 0.0
      %2410 = vmatpush1.msra.mxu0 0.0
      %2411 = vmatprep.subr.mxu0 0.0
      %2412 = vmatpush1.msra.mxu0 0.0
      %2413 = vmatprep.subr.mxu0 0.0
      %2414 = vmatpush1.msra.mxu0 0.0
      %2415 = vmatprep.subr.mxu0 0.0
      %2416 = vmatpush1.msra.mxu0 0.0
      %2417 = vmatprep.mubr.f32.mxu0 0.0
      %2418 = vmatmul.mubr.f32.gmra.mrb[0].mxu0 %v2320
      %v2419 = vpop.f32.mrb[0].mxu0
      %v2420 = vadd.f32 0.0, %v2419
      %v2421 = vpop.f32.mrb[0].mxu0
      %2422 = vmatprep.mubr.f32.mxu0 0.0
      %2423 = vmatmul.mubr.f32.gmra.mrb[0].mxu0 %v2321
      %v2424 = vpop.f32.mrb[0].mxu0
      %v2425 = vadd.f32 0.0, %v2424
      %v2426 = vpop.f32.mrb[0].mxu0
      %2427 = vmatprep.mubr.f32.mxu0 0.0
      %2428 = vmatmul.mubr.f32.gmra.mrb[0].mxu0 %v2322
      %v2429 = vpop.f32.mrb[0].mxu0
      %v2430 = vadd.f32 0.0, %v2429
      %v2431 = vpop.f32.mrb[0].mxu0
      %2432 = vmatprep.mubr.f32.mxu0 0.0
      %2433 = vmatmul.mubr.f32.gmra.mrb[0].mxu0 %v2323
      %v2434 = vpop.f32.mrb[0].mxu0
      %v2435 = vadd.f32 0.0, %v2434
      %v2436 = vpop.f32.mrb[0].mxu0
      %2437 = vmatprep.mubr.f32.mxu0 0.0
      %2438 = vmatmul.mubr.f32.gmra.mrb[0].mxu0 %v2324
      %v2439 = vpop.f32.mrb[0].mxu0
      %v2440 = vadd.f32 0.0, %v2439
      %v2441 = vpop.f32.mrb[0].mxu0
      %2442 = vmatprep.mubr.f32.mxu0 0.0
      %2443 = vmatmul.mubr.f32.gmra.mrb[0].mxu0 %v2325
      %v2444 = vpop.f32.mrb[0].mxu0
      %v2445 = vadd.f32 0.0, %v2444
      %v2446 = vpop.f32.mrb[0].mxu0
      %2447 = vmatprep.mubr.f32.mxu0 0.0
      %2448 = vmatmul.mubr.f32.gmra.mrb[0].mxu0 %v2326
      %v2449 = vpop.f32.mrb[0].mxu0
      %v2450 = vadd.f32 0.0, %v2449
      %v2451 = vpop.f32.mrb[0].mxu0
      %2452 = vmatprep.mubr.f32.mxu0 0.0
      %2453 = vmatmul.mubr.f32.gmra.mrb[0].mxu0 %v2327
      %v2454 = vpop.f32.mrb[0].mxu0
      %v2455 = vadd.f32 0.0, %v2454
      %v2456 = vpop.f32.mrb[0].mxu0
      %2457 = vmatprep.mubr.f32.mxu0 0.0
      %2458 = vmatmul.mubr.f32.gmra.mrb[0].mxu0 %v2328
      %v2459 = vpop.f32.mrb[0].mxu0
      %v2460 = vadd.f32 0.0, %v2459
      %v2461 = vpop.f32.mrb[0].mxu0
      %2462 = vmatprep.mubr.f32.mxu0 0.0
      %2463 = vmatmul.mubr.f32.gmra.mrb[0].mxu0 %v2329
      %v2464 = vpop.f32.mrb[0].mxu0
      %v2465 = vadd.f32 0.0, %v2464
      %v2466 = vpop.f32.mrb[0].mxu0
      %2467 = vmatprep.mubr.f32.mxu0 0.0
      %2468 = vmatmul.mubr.f32.gmra.mrb[0].mxu0 %v2330
      %v2469 = vpop.f32.mrb[0].mxu0
      %v2470 = vadd.f32 0.0, %v2469
      %v2471 = vpop.f32.mrb[0].mxu0
      %2472 = vmatprep.mubr.f32.mxu0 0.0
      %2473 = vmatmul.mubr.f32.gmra.mrb[0].mxu0 %v2331
      %v2474 = vpop.f32.mrb[0].mxu0
      %v2475 = vadd.f32 0.0, %v2474
      %v2476 = vpop.f32.mrb[0].mxu0
      %2477 = vmatprep.mubr.f32.mxu0 0.0
      %2478 = vmatmul.mubr.f32.gmra.mrb[0].mxu0 %v2332
      %v2479 = vpop.f32.mrb[0].mxu0
      %v2480 = vadd.f32 0.0, %v2479
      %v2481 = vpop.f32.mrb[0].mxu0
      %2482 = vmatprep.mubr.f32.mxu0 0.0
      %2483 = vmatmul.mubr.f32.gmra.mrb[0].mxu0 %v2333
      %v2484 = vpop.f32.mrb[0].mxu0
      %v2485 = vadd.f32 0.0, %v2484
      %v2486 = vpop.f32.mrb[0].mxu0
      %2487 = vmatprep.mubr.f32.mxu0 0.0
      %2488 = vmatmul.mubr.f32.gmra.mrb[0].mxu0 %v2334
      %v2489 = vpop.f32.mrb[0].mxu0
      %v2490 = vadd.f32 0.0, %v2489
      %v2491 = vpop.f32.mrb[0].mxu0
      %2492 = vmatprep.mubr.f32.mxu0 0.0
      %2493 = vmatmul.mubr.f32.gmra.mrb[0].mxu0 %v2335
      %v2494 = vpop.f32.mrb[0].mxu0
      %v2495 = vadd.f32 0.0, %v2494
      %v2496 = vpop.f32.mrb[0].mxu0
      %2497 = vdwg.mxu0
      %v2498 = vld [vmem:[#allocation3] sm:$0xff]
      %v2499 = vld [vmem:[#allocation3 + $0x8] sm:$0xff]
      %v2500 = vld [vmem:[#allocation3 + $0x10] sm:$0xff]
      %v2501 = vld [vmem:[#allocation3 + $0x18] sm:$0xff]
      %v2502 = vld [vmem:[#allocation3 + $0x20] sm:$0xff]
      %v2503 = vld [vmem:[#allocation3 + $0x28] sm:$0xff]
      %v2504 = vld [vmem:[#allocation3 + $0x30] sm:$0xff]
      %v2505 = vld [vmem:[#allocation3 + $0x38] sm:$0xff]
      %v2506 = vld [vmem:[#allocation3 + $0x40] sm:$0xff]
      %v2507 = vld [vmem:[#allocation3 + $0x48] sm:$0xff]
      %v2508 = vld [vmem:[#allocation3 + $0x50] sm:$0xff]
      %v2509 = vld [vmem:[#allocation3 + $0x58] sm:$0xff]
      %v2510 = vld [vmem:[#allocation3 + $0x60] sm:$0xff]
      %v2511 = vld [vmem:[#allocation3 + $0x68] sm:$0xff]
      %v2512 = vld [vmem:[#allocation3 + $0x70] sm:$0xff]
      %v2513 = vld [vmem:[#allocation3 + $0x78] sm:$0xff]
      %v2514 = vadd.f32 %v2498, %v2420
      %v2515 = vadd.f32 %v2499, %v2425
      %v2516 = vadd.f32 %v2500, %v2430
      %v2517 = vadd.f32 %v2501, %v2435
      %v2518 = vadd.f32 %v2502, %v2440
      %v2519 = vadd.f32 %v2503, %v2445
      %v2520 = vadd.f32 %v2504, %v2450
      %v2521 = vadd.f32 %v2505, %v2455
      %v2522 = vadd.f32 %v2506, %v2460
      %v2523 = vadd.f32 %v2507, %v2465
      %v2524 = vadd.f32 %v2508, %v2470
      %v2525 = vadd.f32 %v2509, %v2475
      %v2526 = vadd.f32 %v2510, %v2480
      %v2527 = vadd.f32 %v2511, %v2485
      %v2528 = vadd.f32 %v2512, %v2490
      %v2529 = vadd.f32 %v2513, %v2495
      %2530 = vst [vmem:[#allocation3] sm:$0xff] %v2514
      %2531 = vst [vmem:[#allocation3 + $0x8] sm:$0xff] %v2515
      %2532 = vst [vmem:[#allocation3 + $0x10] sm:$0xff] %v2516
      %2533 = vst [vmem:[#allocation3 + $0x18] sm:$0xff] %v2517
      %2534 = vst [vmem:[#allocation3 + $0x20] sm:$0xff] %v2518
      %2535 = vst [vmem:[#allocation3 + $0x28] sm:$0xff] %v2519
      %2536 = vst [vmem:[#allocation3 + $0x30] sm:$0xff] %v2520
      %2537 = vst [vmem:[#allocation3 + $0x38] sm:$0xff] %v2521
      %2538 = vst [vmem:[#allocation3 + $0x40] sm:$0xff] %v2522
      %2539 = vst [vmem:[#allocation3 + $0x48] sm:$0xff] %v2523
      %2540 = vst [vmem:[#allocation3 + $0x50] sm:$0xff] %v2524
      %2541 = vst [vmem:[#allocation3 + $0x58] sm:$0xff] %v2525
      %2542 = vst [vmem:[#allocation3 + $0x60] sm:$0xff] %v2526
      %2543 = vst [vmem:[#allocation3 + $0x68] sm:$0xff] %v2527
      %2544 = vst [vmem:[#allocation3 + $0x70] sm:$0xff] %v2528
      %2545 = vst [vmem:[#allocation3 + $0x78] sm:$0xff] %v2529
      %v2546 = vld [vmem:[#allocation3] sm:$0xff]
      %v2547 = vld [vmem:[#allocation3 + $0x8] sm:$0xff]
      %v2548 = vld [vmem:[#allocation3 + $0x10] sm:$0xff]
      %v2549 = vld [vmem:[#allocation3 + $0x18] sm:$0xff]
      %v2550 = vld [vmem:[#allocation3 + $0x20] sm:$0xff]
      %v2551 = vld [vmem:[#allocation3 + $0x28] sm:$0xff]
      %v2552 = vld [vmem:[#allocation3 + $0x30] sm:$0xff]
      %v2553 = vld [vmem:[#allocation3 + $0x38] sm:$0xff]
      %v2554 = vld [vmem:[#allocation3 + $0x40] sm:$0xff]
      %v2555 = vld [vmem:[#allocation3 + $0x48] sm:$0xff]
      %v2556 = vld [vmem:[#allocation3 + $0x50] sm:$0xff]
      %v2557 = vld [vmem:[#allocation3 + $0x58] sm:$0xff]
      %v2558 = vld [vmem:[#allocation3 + $0x60] sm:$0xff]
      %v2559 = vld [vmem:[#allocation3 + $0x68] sm:$0xff]
      %v2560 = vld [vmem:[#allocation3 + $0x70] sm:$0xff]
      %v2561 = vld [vmem:[#allocation3 + $0x78] sm:$0xff]
      %v2562 = vld [vmem:[%s3] sm:$0x1]
      %v2564 = vlaneseq
      %v2565 = vshrl.u32 %v2564, 7
      %v2566 = vsub.s32 0, %v2565
      %v2567 = vrot.slane %v2562, %v2566
      %v2569 = vadd.f32 %v2546, %v2567
      %v2570 = vadd.f32 %v2547, %v2567
      %v2571 = vadd.f32 %v2548, %v2567
      %v2572 = vadd.f32 %v2549, %v2567
      %v2573 = vadd.f32 %v2550, %v2567
      %v2574 = vadd.f32 %v2551, %v2567
      %v2575 = vadd.f32 %v2552, %v2567
      %v2576 = vadd.f32 %v2553, %v2567
      %v2577 = vadd.f32 %v2554, %v2567
      %v2578 = vadd.f32 %v2555, %v2567
      %v2579 = vadd.f32 %v2556, %v2567
      %v2580 = vadd.f32 %v2557, %v2567
      %v2581 = vadd.f32 %v2558, %v2567
      %v2582 = vadd.f32 %v2559, %v2567
      %v2583 = vadd.f32 %v2560, %v2567
      %v2584 = vadd.f32 %v2561, %v2567
      %v2585 = vmax.f32 %v2569, 0.0
      %v2586 = vmax.f32 %v2570, 0.0
      %v2587 = vmax.f32 %v2571, 0.0
      %v2588 = vmax.f32 %v2572, 0.0
      %v2589 = vmax.f32 %v2573, 0.0
      %v2590 = vmax.f32 %v2574, 0.0
      %v2591 = vmax.f32 %v2575, 0.0
      %v2592 = vmax.f32 %v2576, 0.0
      %v2593 = vmax.f32 %v2577, 0.0
      %v2594 = vmax.f32 %v2578, 0.0
      %v2595 = vmax.f32 %v2579, 0.0
      %v2596 = vmax.f32 %v2580, 0.0
      %v2597 = vmax.f32 %v2581, 0.0
      %v2598 = vmax.f32 %v2582, 0.0
      %v2599 = vmax.f32 %v2583, 0.0
      %v2600 = vmax.f32 %v2584, 0.0
      %v2601 = vld [vmem:[%s4] sm:$0xff]
      %v2602 = vld [vmem:[%s4 + $0x8] sm:$0xff]
      %v2603 = vld [vmem:[%s4 + $0x10] sm:$0xff]
      %v2604 = vld [vmem:[%s4 + $0x18] sm:$0xff]
      %v2605 = vld [vmem:[%s4 + $0x20] sm:$0xff]
      %v2606 = vld [vmem:[%s4 + $0x28] sm:$0xff]
      %v2607 = vld [vmem:[%s4 + $0x30] sm:$0xff]
      %v2608 = vld [vmem:[%s4 + $0x38] sm:$0xff]
      %v2609 = vld [vmem:[%s4 + $0x40] sm:$0xff]
      %v2610 = vld [vmem:[%s4 + $0x48] sm:$0xff]
      %v2611 = vld [vmem:[%s4 + $0x50] sm:$0xff]
      %v2612 = vld [vmem:[%s4 + $0x58] sm:$0xff]
      %v2613 = vld [vmem:[%s4 + $0x60] sm:$0xff]
      %v2614 = vld [vmem:[%s4 + $0x68] sm:$0xff]
      %v2615 = vld [vmem:[%s4 + $0x70] sm:$0xff]
      %v2616 = vld [vmem:[%s4 + $0x78] sm:$0xff]
      %v2617 = vld [vmem:[%s5] sm:$0x1]
      %v2619 = vlaneseq
      %v2620 = vshrl.u32 %v2619, 7
      %v2621 = vsub.s32 0, %v2620
      %v2622 = vrot.slane %v2617, %v2621
      %2624 = vmatprep.subr.mxu0 0.0
      %2625 = vmatpush1.msra.mxu0 %v2601
      %2626 = vmatprep.subr.mxu0 0.0
      %2627 = vmatpush1.msra.mxu0 %v2602
      %2628 = vmatprep.subr.mxu0 0.0
      %2629 = vmatpush1.msra.mxu0 %v2603
      %2630 = vmatprep.subr.mxu0 0.0
      %2631 = vmatpush1.msra.mxu0 %v2604
      %2632 = vmatprep.subr.mxu0 0.0
      %2633 = vmatpush1.msra.mxu0 %v2605
      %2634 = vmatprep.subr.mxu0 0.0
      %2635 = vmatpush1.msra.mxu0 %v2606
      %2636 = vmatprep.subr.mxu0 0.0
      %2637 = vmatpush1.msra.mxu0 %v2607
      %2638 = vmatprep.subr.mxu0 0.0
      %2639 = vmatpush1.msra.mxu0 %v2608
      %2640 = vmatprep.subr.mxu0 0.0
      %2641 = vmatpush1.msra.mxu0 %v2609
      %2642 = vmatprep.subr.mxu0 0.0
      %2643 = vmatpush1.msra.mxu0 %v2610
      %2644 = vmatprep.subr.mxu0 0.0
      %2645 = vmatpush1.msra.mxu0 %v2611
      %2646 = vmatprep.subr.mxu0 0.0
      %2647 = vmatpush1.msra.mxu0 %v2612
      %2648 = vmatprep.subr.mxu0 0.0
      %2649 = vmatpush1.msra.mxu0 %v2613
      %2650 = vmatprep.subr.mxu0 0.0
      %2651 = vmatpush1.msra.mxu0 %v2614
      %2652 = vmatprep.subr.mxu0 0.0
      %2653 = vmatpush1.msra.mxu0 %v2615
      %2654 = vmatprep.subr.mxu0 0.0
      %2655 = vmatpush1.msra.mxu0 %v2616
      %2656 = vmatprep.subr.mxu0 0.0
      %2657 = vmatpush1.msra.mxu0 0.0
      %2658 = vmatprep.subr.mxu0 0.0
      %2659 = vmatpush1.msra.mxu0 0.0
      %2660 = vmatprep.subr.mxu0 0.0
      %2661 = vmatpush1.msra.mxu0 0.0
      %2662 = vmatprep.subr.mxu0 0.0
      %2663 = vmatpush1.msra.mxu0 0.0
      %2664 = vmatprep.subr.mxu0 0.0
      %2665 = vmatpush1.msra.mxu0 0.0
      %2666 = vmatprep.subr.mxu0 0.0
      %2667 = vmatpush1.msra.mxu0 0.0
      %2668 = vmatprep.subr.mxu0 0.0
      %2669 = vmatpush1.msra.mxu0 0.0
      %2670 = vmatprep.subr.mxu0 0.0
      %2671 = vmatpush1.msra.mxu0 0.0
      %2672 = vmatprep.subr.mxu0 0.0
      %2673 = vmatpush1.msra.mxu0 0.0
      %2674 = vmatprep.subr.mxu0 0.0
      %2675 = vmatpush1.msra.mxu0 0.0
      %2676 = vmatprep.subr.mxu0 0.0
      %2677 = vmatpush1.msra.mxu0 0.0
      %2678 = vmatprep.subr.mxu0 0.0
      %2679 = vmatpush1.msra.mxu0 0.0
      %2680 = vmatprep.subr.mxu0 0.0
      %2681 = vmatpush1.msra.mxu0 0.0
      %2682 = vmatprep.subr.mxu0 0.0
      %2683 = vmatpush1.msra.mxu0 0.0
      %2684 = vmatprep.subr.mxu0 0.0
      %2685 = vmatpush1.msra.mxu0 0.0
      %2686 = vmatprep.subr.mxu0 0.0
      %2687 = vmatpush1.msra.mxu0 0.0
      %2688 = vmatprep.mubr.f32.mxu0 0.0
      %2689 = vmatmul.mubr.f32.gmra.mrb[0].mxu0 %v2585
      %v2690 = vpop.f32.mrb[0].mxu0
      %v2691 = vadd.f32 %v2622, %v2690
      %v2692 = vpop.f32.mrb[0].mxu0
      %2693 = vmatprep.mubr.f32.mxu0 0.0
      %2694 = vmatmul.mubr.f32.gmra.mrb[0].mxu0 %v2586
      %v2695 = vpop.f32.mrb[0].mxu0
      %v2696 = vadd.f32 %v2622, %v2695
      %v2697 = vpop.f32.mrb[0].mxu0
      %2698 = vmatprep.mubr.f32.mxu0 0.0
      %2699 = vmatmul.mubr.f32.gmra.mrb[0].mxu0 %v2587
      %v2700 = vpop.f32.mrb[0].mxu0
      %v2701 = vadd.f32 %v2622, %v2700
      %v2702 = vpop.f32.mrb[0].mxu0
      %2703 = vmatprep.mubr.f32.mxu0 0.0
      %2704 = vmatmul.mubr.f32.gmra.mrb[0].mxu0 %v2588
      %v2705 = vpop.f32.mrb[0].mxu0
      %v2706 = vadd.f32 %v2622, %v2705
      %v2707 = vpop.f32.mrb[0].mxu0
      %2708 = vmatprep.mubr.f32.mxu0 0.0
      %2709 = vmatmul.mubr.f32.gmra.mrb[0].mxu0 %v2589
      %v2710 = vpop.f32.mrb[0].mxu0
      %v2711 = vadd.f32 %v2622, %v2710
      %v2712 = vpop.f32.mrb[0].mxu0
      %2713 = vmatprep.mubr.f32.mxu0 0.0
      %2714 = vmatmul.mubr.f32.gmra.mrb[0].mxu0 %v2590
      %v2715 = vpop.f32.mrb[0].mxu0
      %v2716 = vadd.f32 %v2622, %v2715
      %v2717 = vpop.f32.mrb[0].mxu0
      %2718 = vmatprep.mubr.f32.mxu0 0.0
      %2719 = vmatmul.mubr.f32.gmra.mrb[0].mxu0 %v2591
      %v2720 = vpop.f32.mrb[0].mxu0
      %v2721 = vadd.f32 %v2622, %v2720
      %v2722 = vpop.f32.mrb[0].mxu0
      %2723 = vmatprep.mubr.f32.mxu0 0.0
      %2724 = vmatmul.mubr.f32.gmra.mrb[0].mxu0 %v2592
      %v2725 = vpop.f32.mrb[0].mxu0
      %v2726 = vadd.f32 %v2622, %v2725
      %v2727 = vpop.f32.mrb[0].mxu0
      %2728 = vmatprep.mubr.f32.mxu0 0.0
      %2729 = vmatmul.mubr.f32.gmra.mrb[0].mxu0 %v2593
      %v2730 = vpop.f32.mrb[0].mxu0
      %v2731 = vadd.f32 %v2622, %v2730
      %v2732 = vpop.f32.mrb[0].mxu0
      %2733 = vmatprep.mubr.f32.mxu0 0.0
      %2734 = vmatmul.mubr.f32.gmra.mrb[0].mxu0 %v2594
      %v2735 = vpop.f32.mrb[0].mxu0
      %v2736 = vadd.f32 %v2622, %v2735
      %v2737 = vpop.f32.mrb[0].mxu0
      %2738 = vmatprep.mubr.f32.mxu0 0.0
      %2739 = vmatmul.mubr.f32.gmra.mrb[0].mxu0 %v2595
      %v2740 = vpop.f32.mrb[0].mxu0
      %v2741 = vadd.f32 %v2622, %v2740
      %v2742 = vpop.f32.mrb[0].mxu0
      %2743 = vmatprep.mubr.f32.mxu0 0.0
      %2744 = vmatmul.mubr.f32.gmra.mrb[0].mxu0 %v2596
      %v2745 = vpop.f32.mrb[0].mxu0
      %v2746 = vadd.f32 %v2622, %v2745
      %v2747 = vpop.f32.mrb[0].mxu0
      %2748 = vmatprep.mubr.f32.mxu0 0.0
      %2749 = vmatmul.mubr.f32.gmra.mrb[0].mxu0 %v2597
      %v2750 = vpop.f32.mrb[0].mxu0
      %v2751 = vadd.f32 %v2622, %v2750
      %v2752 = vpop.f32.mrb[0].mxu0
      %2753 = vmatprep.mubr.f32.mxu0 0.0
      %2754 = vmatmul.mubr.f32.gmra.mrb[0].mxu0 %v2598
      %v2755 = vpop.f32.mrb[0].mxu0
      %v2756 = vadd.f32 %v2622, %v2755
      %v2757 = vpop.f32.mrb[0].mxu0
      %2758 = vmatprep.mubr.f32.mxu0 0.0
      %2759 = vmatmul.mubr.f32.gmra.mrb[0].mxu0 %v2599
      %v2760 = vpop.f32.mrb[0].mxu0
      %v2761 = vadd.f32 %v2622, %v2760
      %v2762 = vpop.f32.mrb[0].mxu0
      %2763 = vmatprep.mubr.f32.mxu0 0.0
      %2764 = vmatmul.mubr.f32.gmra.mrb[0].mxu0 %v2600
      %v2765 = vpop.f32.mrb[0].mxu0
      %v2766 = vadd.f32 %v2622, %v2765
      %v2767 = vpop.f32.mrb[0].mxu0
      %2768 = vdwg.mxu0
      %v2769 = vmax.f32 %v2691, 0.0
      %v2770 = vmax.f32 %v2696, 0.0
      %v2771 = vmax.f32 %v2701, 0.0
      %v2772 = vmax.f32 %v2706, 0.0
      %v2773 = vmax.f32 %v2711, 0.0
      %v2774 = vmax.f32 %v2716, 0.0
      %v2775 = vmax.f32 %v2721, 0.0
      %v2776 = vmax.f32 %v2726, 0.0
      %v2777 = vmax.f32 %v2731, 0.0
      %v2778 = vmax.f32 %v2736, 0.0
      %v2779 = vmax.f32 %v2741, 0.0
      %v2780 = vmax.f32 %v2746, 0.0
      %v2781 = vmax.f32 %v2751, 0.0
      %v2782 = vmax.f32 %v2756, 0.0
      %v2783 = vmax.f32 %v2761, 0.0
      %v2784 = vmax.f32 %v2766, 0.0
      %s2785 = scalar_lea.vmem %s246, 24
      %v2786 = vld [vmem:[%s2785 + $0x1] sm:$0xff]
      %v2787 = vld [vmem:[%s2785 + $0x9] sm:$0xff]
      %v2788 = vld [vmem:[%s2785 + $0x19] sm:$0xff]
      %v2789 = vld [vmem:[%s2785 + $0x21] sm:$0xff]
      %v2790 = vld [vmem:[%s2785 + $0x31] sm:$0xff]
      %v2791 = vld [vmem:[%s2785 + $0x39] sm:$0xff]
      %v2792 = vld [vmem:[%s2785 + $0x49] sm:$0xff]
      %v2793 = vld [vmem:[%s2785 + $0x51] sm:$0xff]
      %v2794 = vld [vmem:[%s2785 + $0x61] sm:$0xff]
      %v2795 = vld [vmem:[%s2785 + $0x69] sm:$0xff]
      %v2796 = vld [vmem:[%s2785 + $0x79] sm:$0xff]
      %v2797 = vld [vmem:[%s2785 + $0x81] sm:$0xff]
      %v2798 = vld [vmem:[%s2785 + $0x91] sm:$0xff]
      %v2799 = vld [vmem:[%s2785 + $0x99] sm:$0xff]
      %v2800 = vld [vmem:[%s2785 + $0xa9] sm:$0xff]
      %v2801 = vld [vmem:[%s2785 + $0xb1] sm:$0xff]
      %v2802 = vadd.f32 %v2769, %v2786
      %v2803 = vadd.f32 %v2770, %v2787
      %v2804 = vadd.f32 %v2771, %v2788
      %v2805 = vadd.f32 %v2772, %v2789
      %v2806 = vadd.f32 %v2773, %v2790
      %v2807 = vadd.f32 %v2774, %v2791
      %v2808 = vadd.f32 %v2775, %v2792
      %v2809 = vadd.f32 %v2776, %v2793
      %v2810 = vadd.f32 %v2777, %v2794
      %v2811 = vadd.f32 %v2778, %v2795
      %v2812 = vadd.f32 %v2779, %v2796
      %v2813 = vadd.f32 %v2780, %v2797
      %v2814 = vadd.f32 %v2781, %v2798
      %v2815 = vadd.f32 %v2782, %v2799
      %v2816 = vadd.f32 %v2783, %v2800
      %v2817 = vadd.f32 %v2784, %v2801
      %2818 = vst [vmem:[%s251] sm:$0xff] %v2802
      %2819 = vst [vmem:[%s251 + $0x8] sm:$0xff] %v2803
      %2820 = vst [vmem:[%s251 + $0x10] sm:$0xff] %v2804
      %2821 = vst [vmem:[%s251 + $0x18] sm:$0xff] %v2805
      %2822 = vst [vmem:[%s251 + $0x20] sm:$0xff] %v2806
      %2823 = vst [vmem:[%s251 + $0x28] sm:$0xff] %v2807
      %2824 = vst [vmem:[%s251 + $0x30] sm:$0xff] %v2808
      %2825 = vst [vmem:[%s251 + $0x38] sm:$0xff] %v2809
      %2826 = vst [vmem:[%s251 + $0x40] sm:$0xff] %v2810
      %2827 = vst [vmem:[%s251 + $0x48] sm:$0xff] %v2811
      %2828 = vst [vmem:[%s251 + $0x50] sm:$0xff] %v2812
      %2829 = vst [vmem:[%s251 + $0x58] sm:$0xff] %v2813
      %2830 = vst [vmem:[%s251 + $0x60] sm:$0xff] %v2814
      %2831 = vst [vmem:[%s251 + $0x68] sm:$0xff] %v2815
      %2832 = vst [vmem:[%s251 + $0x70] sm:$0xff] %v2816
      %2833 = vst [vmem:[%s251 + $0x78] sm:$0xff] %v2817
      %p2834 = scmp.lt.s32.totalorder %s17, 3
      %s2835 = scalar_select %p2834, %s17, 3
      %s2836 = smul.addr %s2835, 16
      %s2837 = smul.addr %s2836, 8
      %s2838 = scalar_lea.vmem %s6, %s2837
      // Predicated region
      $region45: #{inverted_bottleneck_forward.1} parent=43 // pred_check
        %p2839 = pneg %p166
      $region46: #{inverted_bottleneck_forward.1} parent=43 // pred_check_branch
        %2841 = sbr.rel (%p2839) target = $region48
      $region47: #{inverted_bottleneck_forward.1} parent=43 // pred_region
        _
      $region48: #{inverted_bottleneck_forward.1} parent=43 // pred_fallthru
        _
    $region44: #{inverted_bottleneck_forward.1} parent=5 // pred_fallthru
      _
    %p2842 = scmp.le.s32.totalorder 2, %s12
    // Predicated region
    $region49: #{inverted_bottleneck_forward.1} parent=5 // pred_check
      %p2843 = pneg %p2842
    $region50: #{inverted_bottleneck_forward.1} parent=5 // pred_check_branch
      %2845 = sbr.rel (%p2843) target = $region52
    $region51: #{inverted_bottleneck_forward.1} parent=5 // pred_region
      %s2846 = ssub.s32 %s12, 2
      // Predicated region
      $region53: #{inverted_bottleneck_forward.1} parent=51 // pred_check
        %p2847 = pneg %p172
      $region54: #{inverted_bottleneck_forward.1} parent=51 // pred_check_branch
        %2849 = sbr.rel (%p2847) target = $region56
      $region55: #{inverted_bottleneck_forward.1} parent=51 // pred_region
        %p2850 = scmp.lt.s32.totalorder %s18, 3
        %s2851 = scalar_select %p2850, %s18, 3
        %s2852 = smul.addr %s2851, 16
        %s2853 = smul.addr %s2852, 8
        %s2854 = scalar_lea.vmem %s6, %s2853
      $region56: #{inverted_bottleneck_forward.1} parent=51 // pred_fallthru
        _
    $region52: #{inverted_bottleneck_forward.1} parent=5 // pred_fallthru
      _
  $region6: #{inverted_bottleneck_forward.1} parent=0 // loop_footer
    %s16 = sadd.s32 1, %s12
  $region7: #{inverted_bottleneck_forward.1} parent=0 // loop_footer_branch
    %11 = sbr.rel target = $region3
  $region8: #{inverted_bottleneck_forward.1} parent=0 // loop_exit
    _

</llo_original>
